<compile_context>
chip_gen: v6e
topology: v6e:2x2x1
jax: 0.10.0
libtpu: 0.0.40
codegen_flags: <defaults>
</compile_context>

<pallas_src>
import jax
import jax.numpy as jnp
import numpy as np
from jax.experimental import pallas as pl
from jax.experimental.pallas import tpu as pltpu


# ---------------------------------------------------------------------------
# Fused kernel: masked bidirectional LSTM  +  sequential query attention (SQAN)
# ---------------------------------------------------------------------------
def lgi_encoder_kernel(q_ref, vmf_ref, vmb_ref, amask_ref,
                       wih_ref, bi_ref, whh_ref,
                       wga_ref, bga_ref, wgup_ref, wk_ref, wc_ref, wa_ref,
                       wf_ref, sent_ref, sef_ref, sew_ref):
    q = q_ref[...]                       # [Bb, L, Dw]  f32
    Bb, L, Dw = q.shape
    Whh = whh_ref[...]                   # [H, 4H] bf16, block-diag, gate-interleaved
    H = Whh.shape[0]                     # query_hidden_dim == 2 * Hh
    Hh = H // 2
    G = 4 * H                            # fused gate width (4 gates x both dirs)

    # ---- hoisted per-timestep validity mask (built ONCE, indexed in loop) ---
    # layout per step s: [fwd valid @ t=s broadcast Hh | bwd valid @ t=L-1-s]
    vm_all = jnp.concatenate(
        [jnp.broadcast_to(vmf_ref[...][:, :, None], (Bb, L, Hh)),
         jnp.broadcast_to(vmb_ref[...][:, :, None], (Bb, L, Hh))],
        axis=-1) > 0.0                                    # [Bb, L, H] bool

    # ---- fused input projection: ONE bf16 MXU launch for both directions ---
    q2 = q.reshape(Bb * L, Dw).astype(jnp.bfloat16)
    xp = jnp.dot(q2, wih_ref[...],
                 preferred_element_type=jnp.float32).reshape(Bb, L, 2 * G)
    xp_f = xp[:, :, :G] + bi_ref[...].reshape(1, 1, G)    # bias folded in once
    xp_b = xp[:, :, G:]

    # ---- fused bidirectional recurrence: ONE MXU op per timestep -----------
    # state layout: h/c = [fwd Hh | bwd Hh]; gates = 4 blocks of [fwd Hh | bwd Hh]
    h = jnp.zeros((Bb, H), jnp.float32)
    c = jnp.zeros((Bb, H), jnp.float32)
    outs_f = [None] * L
    outs_b = [None] * L
    for s in range(L):                   # static unroll (L small here)
        r = L - 1 - s                    # backward direction processes time r
        xg = xp_f[:, s, :] + xp_b[:, r, :]                # off the h-chain
        vm = vm_all[:, s, :]

        gates = jnp.dot(h.astype(jnp.bfloat16), Whh,
                        preferred_element_type=jnp.float32) + xg
        # NOTE: at toy H=32 these are 32-lane sub-vreg slices; at production
        # H >= 128 they are tile-aligned automatically.
        i_g = jax.nn.sigmoid(gates[:, 0 * H:1 * H])       # PyTorch order i,f,g,o
        f_g = jax.nn.sigmoid(gates[:, 1 * H:2 * H])
        g_g = jnp.tanh(gates[:, 2 * H:3 * H])
        o_g = jax.nn.sigmoid(gates[:, 3 * H:4 * H])
        c_new = f_g * c + i_g * g_g
        h_new = o_g * jnp.tanh(c_new)

        h = jnp.where(vm, h_new, h)      # freeze state past sequence length
        c = jnp.where(vm, c_new, c)
        out = jnp.where(vm, h_new, 0.0)  # padded outputs are zero (pack/pad sem.)
        outs_f[s] = out[:, :Hh]          # fwd output at time s
        outs_b[r] = out[:, Hh:]          # bwd output at time r

    sent = h                             # [fwd hidden @ len-1 | bwd hidden @ 0]
    sent_ref[...] = sent

    # ---- assemble word features, ONE lane-dense store ----------------------
    rows = [jnp.concatenate([outs_f[t], outs_b[t]], axis=-1) for t in range(L)]
    wf3 = jnp.stack(rows, axis=1)                         # [Bb, L, H] (for SQAN)
    wf_ref[...] = jnp.concatenate(rows, axis=-1)          # [Bb, L*H] bulk store

    # ---- SQAN ---------------------------------------------------------------
    Wk = wk_ref[...]                     # [H, Ha]  bf16
    Wc = wc_ref[...]                     # [H, Ha]  bf16
    Wgp = wgup_ref[...]                  # [H, H]   bf16 (prev_se part of guide)
    wa = wa_ref[...]                     # [1, Ha]  f32
    Ha = Wk.shape[1]
    nse = wga_ref.shape[1] // H

    # hoisted (independent of prev_se):
    att_c = jnp.dot(wf3.reshape(Bb * L, H).astype(jnp.bfloat16), Wc,
                    preferred_element_type=jnp.float32).reshape(Bb, L, Ha)
    qa_all = (jnp.dot(sent.astype(jnp.bfloat16), wga_ref[...],
                      preferred_element_type=jnp.float32)
              + bga_ref[...])            # [Bb, nse*H] == q_n @ Wgu_q + bias, all n
    neg_bias = (1.0 - amask_ref[...]) * jnp.float32(-1e9)

    prev = jnp.zeros((Bb, H), jnp.float32)
    sefs, sews = [], []
    for n in range(nse):                 # static unroll (nse small)
        pre = qa_all[:, n * H:(n + 1) * H] + jnp.dot(
            prev.astype(jnp.bfloat16), Wgp, preferred_element_type=jnp.float32)
        g_n = jnp.maximum(pre, 0.0)                                   # guide emb
        att_k = jnp.dot(g_n.astype(jnp.bfloat16), Wk,
                        preferred_element_type=jnp.float32)           # [Bb, Ha]
        d3 = jnp.tanh(att_c + att_k[:, None, :])                      # [Bb, L, Ha]
        logits = jnp.sum(d3 * wa.reshape(1, 1, Ha), axis=-1) + neg_bias

        m = jnp.max(logits, axis=1, keepdims=True)
        e = jnp.exp(logits - m)
        w = e * pl.reciprocal(jnp.sum(e, axis=1, keepdims=True), approx=True)
        att_f = jnp.sum(w[:, :, None] * wf3, axis=1)                  # [Bb, H]

        prev = att_f
        sefs.append(att_f)
        sews.append(w)

    sef_ref[...] = jnp.concatenate(sefs, axis=-1)         # [Bb, nse*H] one store
    sew_ref[...] = jnp.concatenate(sews, axis=-1)         # [Bb, nse*L] one store


# ---------------------------------------------------------------------------
# Wrapper: weight repacking (trace time) + pallas_call with a batch grid
# ---------------------------------------------------------------------------
def lgi_query_encoder(queries, wordlens, word_masks, params, batch_block=None):
    queries = queries.astype(jnp.float32)
    B, L, Dw = queries.shape
    H = params["H"]
    nse = params["nse"]
    Hh = H // 2
    G = 4 * H
    hi = jax.lax.Precision.HIGHEST

    # length masks computed in plain XLA (cheap), fully hoisted out of kernel
    lens = wordlens.astype(jnp.int32)[:, None]
    valid = (jnp.arange(L, dtype=jnp.int32)[None, :] < lens).astype(jnp.float32)
    valid_rev = valid[:, ::-1]
    amask = word_masks.astype(jnp.float32)

    # ---- LSTM weight repacking: gate-interleaved layout [i_f i_b f_f f_b ...]
    def gate_interleave(a_f, a_b):
        parts = []
        for g in range(4):
            parts.append(a_f[..., g * Hh:(g + 1) * Hh])
            parts.append(a_b[..., g * Hh:(g + 1) * Hh])
        return jnp.concatenate(parts, axis=-1)

    zi = jnp.zeros_like(params["wih_f"])
    wih_sf = gate_interleave(params["wih_f"], zi)                  # [Dw, G]
    wih_sb = gate_interleave(zi, params["wih_b"])                  # [Dw, G]
    wih_cat = jnp.concatenate([wih_sf, wih_sb], axis=-1)           # [Dw, 2G]
    b_ilv = gate_interleave(params["b_f"], params["b_b"])          # [1, G]
    zh = jnp.zeros((Hh, 4 * Hh), jnp.float32)
    whh_blk = gate_interleave(
        jnp.concatenate([params["whh_f"], zh], axis=0),
        jnp.concatenate([zh, params["whh_b"]], axis=0))            # [H, G]

    # ---- SQAN folding: q_n @ Wgu_q  ==  sent @ (Wg[n] @ Wgu_q) + bg[n] @ Wgu_q
    wgu_q = params["wgu"][:H, :]
    wgu_p = params["wgu"][H:, :]
    wga = jnp.concatenate(
        [jnp.dot(params["wg"][n], wgu_q, precision=hi) for n in range(nse)],
        axis=-1)                                                   # [H, nse*H]
    bga = jnp.concatenate(
        [jnp.dot(params["bg"][n][None, :], wgu_q, precision=hi) + params["bgu"]
         for n in range(nse)], axis=-1)                            # [1, nse*H]

    # bf16 MXU operands (f32 accumulation inside the kernel)
    bf = jnp.bfloat16
    wih_cat_b = wih_cat.astype(bf)
    whh_b = whh_blk.astype(bf)
    wga_b = wga.astype(bf)
    wgup_b = wgu_p.astype(bf)
    wk_b = params["wk"].astype(bf)
    wc_b = params["wc"].astype(bf)
    wa_f = params["wa"].astype(jnp.float32)

    # ---- batch grid ("parallel" => shards across TensorCores on v7x) -------
    if batch_block is not None:
        Bb = max(1, min(batch_block, B))
    elif B >= 16 and B % 8 == 0:
        Bb = min(B, max(8, ((pl.cdiv(B, 2) + 7) // 8) * 8))   # >= 2 blocks
    else:
        Bb = B
    if Bb < B:
        Bb = ((Bb + 7) // 8) * 8     # (8,128) sublane rule for 2-D batch blocks
        if Bb >= B:
            Bb = B
    n_blocks = pl.cdiv(B, Bb)
    grid = (n_blocks,)

    def full_spec(arr):
        nd = arr.ndim
        return pl.BlockSpec(arr.shape, lambda b, _nd=nd: (0,) * _nd)

    in_specs = [
        pl.BlockSpec((Bb, L, Dw), lambda b: (b, 0, 0)),     # queries
        pl.BlockSpec((Bb, L), lambda b: (b, 0)),            # fwd validity mask
        pl.BlockSpec((Bb, L), lambda b: (b, 0)),            # reversed validity mask
        pl.BlockSpec((Bb, L), lambda b: (b, 0)),            # attention word mask
        full_spec(wih_cat_b), full_spec(b_ilv), full_spec(whh_b),
        full_spec(wga_b), full_spec(bga), full_spec(wgup_b),
        full_spec(wk_b), full_spec(wc_b), full_spec(wa_f),
    ]
    # lane-dense (flattened) outputs; reshaped back after the call
    out_specs = (
        pl.BlockSpec((Bb, L * H), lambda b: (b, 0)),
        pl.BlockSpec((Bb, H), lambda b: (b, 0)),
        pl.BlockSpec((Bb, nse * H), lambda b: (b, 0)),
        pl.BlockSpec((Bb, nse * L), lambda b: (b, 0)),
    )
    out_shape = (
        jax.ShapeDtypeStruct((B, L * H), jnp.float32),
        jax.ShapeDtypeStruct((B, H), jnp.float32),
        jax.ShapeDtypeStruct((B, nse * H), jnp.float32),
        jax.ShapeDtypeStruct((B, nse * L), jnp.float32),
    )

    # ---- VMEM budget + cost hint -------------------------------------------
    Ha = params["wk"].shape[1]
    blk_io = 4 * (Bb * L * Dw + 3 * Bb * L
                  + Bb * L * H + Bb * H + Bb * nse * H + Bb * nse * L)
    w_bytes = sum(int(np.prod(a.shape)) * a.dtype.itemsize for a in
                  (wih_cat_b, b_ilv, whh_b, wga_b, bga, wgup_b, wk_b, wc_b, wa_f))
    vmem_limit = int(min(max(2 * blk_io + w_bytes + (8 << 20), 16 << 20), 48 << 20))

    flops = (2 * B * L * Dw * 2 * G            # fused input projection
             + L * 2 * B * H * G               # recurrence
             + 2 * B * L * H * Ha              # att_c
             + 2 * B * H * nse * H             # qa_all
             + nse * (2 * B * H * H + 2 * B * H * Ha + 2 * B * L * Ha + 2 * B * L * H))
    transc = L * B * 5 * H + nse * B * L * (Ha + 1)
    bytes_acc = (4 * (B * L * Dw + 3 * B * L
                      + B * L * H + B * H + B * nse * H + B * nse * L) + w_bytes)
    cost = pl.CostEstimate(flops=int(flops), transcendentals=int(transc),
                           bytes_accessed=int(bytes_acc))

    wf_flat, sent, sef_flat, sew_flat = pl.pallas_call(
        lgi_encoder_kernel,
        out_shape=out_shape,
        grid=grid,
        in_specs=in_specs,
        out_specs=out_specs,
        compiler_params=pltpu.CompilerParams(
            dimension_semantics=("parallel",),
            vmem_limit_bytes=vmem_limit),
        cost_estimate=cost,
    )(queries, valid, valid_rev, amask,
      wih_cat_b, b_ilv, whh_b,
      wga_b, bga, wgup_b, wk_b, wc_b, wa_f)

    return {
        "word_features": wf_flat.reshape(B, L, H),
        "sentence_features": sent,
        "semantic_features": sef_flat.reshape(B, nse, H),
        "semantic_attention_weights": sew_flat.reshape(B, nse, L),
    }


# ---------------------------------------------------------------------------
# Deterministic parameter construction (synthetic, PyTorch-like natural layout)
# ---------------------------------------------------------------------------
def make_params(key, wordvec_dim, H, nse):
    Hh = H // 2            # rnn hidden dim per direction
    Ha = H // 2            # attention hidden dim
    ks = jax.random.split(key, 16)
    s = 0.1

    def rnd(k, shape):
        return (s * jax.random.normal(k, shape)).astype(jnp.float32)

    return {
        "H": H,
        "nse": nse,
        # LSTM fwd/bwd (stored transposed for x @ W; bias = b_ih + b_hh fused)
        "wih_f": rnd(ks[0], (wordvec_dim, 4 * Hh)),
        "whh_f": rnd(ks[1], (Hh, 4 * Hh)),
        "b_f":   rnd(ks[2], (1, 4 * Hh)),
        "wih_b": rnd(ks[3], (wordvec_dim, 4 * Hh)),
        "whh_b": rnd(ks[4], (Hh, 4 * Hh)),
        "b_b":   rnd(ks[5], (1, 4 * Hh)),
        # global_emb_fn: nse x Linear(H, H)
        "wg": rnd(ks[6], (nse, H, H)),
        "bg": rnd(ks[7], (nse, H)),
        # guide_emb_fn: Linear(2H, H) + ReLU
        "wgu": rnd(ks[8], (2 * H, H)),
        "bgu": rnd(ks[9], (1, H)),
        # Attention(kdim=H, cdim=H, att_hdim=H//2), bias-free
        "wk": rnd(ks[10], (H, Ha)),
        "wc": rnd(ks[11], (H, Ha)),
        "wa": rnd(ks[12], (1, Ha)),
    }


# ---------------------------------------------------------------------------
# Pure-JAX reference (mirrors the PyTorch module) for a numerical self-check
# ---------------------------------------------------------------------------
def reference_forward(queries, wordlens, word_masks, params):
    B, L, Dw = queries.shape
    H, nse = params["H"], params["nse"]
    Hh = H // 2
    lens = wordlens.astype(jnp.int32)[:, None]

    def cell(x_t, h, c, Wih, Whh, b):
        g = x_t @ Wih + h @ Whh + b
        i = jax.nn.sigmoid(g[:, 0 * Hh:1 * Hh])
        f = jax.nn.sigmoid(g[:, 1 * Hh:2 * Hh])
        gg = jnp.tanh(g[:, 2 * Hh:3 * Hh])
        o = jax.nn.sigmoid(g[:, 3 * Hh:4 * Hh])
        c2 = f * c + i * gg
        return o * jnp.tanh(c2), c2

    h = jnp.zeros((B, Hh)); c = jnp.zeros((B, Hh)); outs_f = []
    for t in range(L):
        hn, cn = cell(queries[:, t], h, c, params["wih_f"], params["whh_f"], params["b_f"])
        v = (lens > t).astype(jnp.float32)
        h = v * hn + (1 - v) * h; c = v * cn + (1 - v) * c
        outs_f.append(v * hn)
    hf_fin = h
    h = jnp.zeros((B, Hh)); c = jnp.zeros((B, Hh)); outs_b = [None] * L
    for t in range(L - 1, -1, -1):
        hn, cn = cell(queries[:, t], h, c, params["wih_b"], params["whh_b"], params["b_b"])
        v = (lens > t).astype(jnp.float32)
        h = v * hn + (1 - v) * h; c = v * cn + (1 - v) * c
        outs_b[t] = v * hn
    hb_fin = h
    wf = jnp.concatenate([jnp.stack(outs_f, 1), jnp.stack(outs_b, 1)], -1)
    sent = jnp.concatenate([hf_fin, hb_fin], -1)

    Wk, Wc, wa = params["wk"], params["wc"], params["wa"]
    Ha = Wk.shape[1]
    mask = word_masks.astype(jnp.float32)
    att_c = (wf.reshape(B * L, H) @ Wc).reshape(B, L, Ha)
    prev = jnp.zeros((B, H)); sefs, sews = [], []
    for n in range(nse):
        q_n = sent @ params["wg"][n] + params["bg"][n:n + 1]
        g_n = jnp.maximum(jnp.concatenate([q_n, prev], 1) @ params["wgu"] + params["bgu"], 0.0)
        att_k = g_n @ Wk
        d3 = jnp.tanh(att_c + att_k[:, None, :])
        logits = jnp.sum(d3 * wa.reshape(1, 1, Ha), -1)
        logits = jnp.where(mask == 0.0, -1e9, logits)
        w = jax.nn.softmax(logits, axis=1)
        att_f = jnp.sum(w[:, :, None] * wf, 1)
        prev = att_f; sefs.append(att_f); sews.append(w)
    return wf, sent, jnp.stack(sefs, 1), jnp.stack(sews, 1)


if __name__ == "__main__":
    B, L, Dw, H, nse = 2, 8, 32, 32, 3

    key = jax.random.PRNGKey(0)
    k_q, k_p = jax.random.split(key)
    queries = jax.random.normal(k_q, (B, L, Dw), dtype=jnp.float32)
    wordlens = jnp.array([8, 5], dtype=jnp.int32)
    word_masks = (jnp.arange(L)[None, :] < wordlens[:, None]).astype(jnp.float32)
    params = make_params(k_p, Dw, H, nse)

    fwd = jax.jit(lambda q, wl, wm: lgi_query_encoder(q, wl, wm, params))
    out = fwd(queries, wordlens, word_masks)
    jax.block_until_ready(out)

    assert out["word_features"].shape == (B, L, H)
    assert out["sentence_features"].shape == (B, H)
    assert out["semantic_features"].shape == (B, nse, H)
    assert out["semantic_attention_weights"].shape == (B, nse, L)

    ref_wf, ref_sent, ref_sef, ref_sew = jax.jit(
        lambda q, wl, wm: reference_forward(q, wl, wm, params))(queries, wordlens, word_masks)
    # bf16 MXU operands introduce ~1e-3 absolute error vs. the f32 reference.
    np.testing.assert_allclose(np.asarray(out["word_features"]), np.asarray(ref_wf),
                               rtol=2e-2, atol=2e-2)
    np.testing.assert_allclose(np.asarray(out["sentence_features"]), np.asarray(ref_sent),
                               rtol=2e-2, atol=2e-2)
    np.testing.assert_allclose(np.asarray(out["semantic_features"]), np.asarray(ref_sef),
                               rtol=2e-2, atol=2e-2)
    np.testing.assert_allclose(np.asarray(out["semantic_attention_weights"]), np.asarray(ref_sew),
                               rtol=2e-2, atol=2e-2)

    print("KERNEL_OK")
</pallas_src>

<mosaic_0001>
module attributes {stable_mosaic.version = 11 : i64} {
  func.func @lgi_encoder_kernel(%arg0: i32, %arg1: memref<2x8x32xf32, #tpu.memory_space<vmem>>, %arg2: memref<2x8xf32, #tpu.memory_space<vmem>>, %arg3: memref<2x8xf32, #tpu.memory_space<vmem>>, %arg4: memref<2x8xf32, #tpu.memory_space<vmem>>, %arg5: memref<32x256xbf16, #tpu.memory_space<vmem>>, %arg6: memref<1x128xf32, #tpu.memory_space<vmem>>, %arg7: memref<32x128xbf16, #tpu.memory_space<vmem>>, %arg8: memref<32x96xbf16, #tpu.memory_space<vmem>>, %arg9: memref<1x96xf32, #tpu.memory_space<vmem>>, %arg10: memref<32x32xbf16, #tpu.memory_space<vmem>>, %arg11: memref<32x16xbf16, #tpu.memory_space<vmem>>, %arg12: memref<32x16xbf16, #tpu.memory_space<vmem>>, %arg13: memref<1x16xf32, #tpu.memory_space<vmem>>, %arg14: memref<2x256xf32, #tpu.memory_space<vmem>>, %arg15: memref<2x32xf32, #tpu.memory_space<vmem>>, %arg16: memref<2x96xf32, #tpu.memory_space<vmem>>, %arg17: memref<2x24xf32, #tpu.memory_space<vmem>>) attributes {dimension_semantics = [#tpu.dimension_semantics<parallel>], iteration_bounds = array<i64: 1>, scalar_prefetch = 0 : i64, scratch_operands = 0 : i64, tpu.core_type = #tpu.core_type<tc>, window_params = [{transform_indices = @transform_0, window_bounds = array<i64: 2, 8, 32>}, {transform_indices = @transform_1, window_bounds = array<i64: 2, 8>}, {transform_indices = @transform_2, window_bounds = array<i64: 2, 8>}, {transform_indices = @transform_3, window_bounds = array<i64: 2, 8>}, {pipeline_mode = #tpu.pipeline_mode<synchronous>, transform_indices = @transform_4, window_bounds = array<i64: 32, 256>}, {pipeline_mode = #tpu.pipeline_mode<synchronous>, transform_indices = @transform_5, window_bounds = array<i64: 1, 128>}, {pipeline_mode = #tpu.pipeline_mode<synchronous>, transform_indices = @transform_6, window_bounds = array<i64: 32, 128>}, {pipeline_mode = #tpu.pipeline_mode<synchronous>, transform_indices = @transform_7, window_bounds = array<i64: 32, 96>}, {pipeline_mode = #tpu.pipeline_mode<synchronous>, transform_indices = @transform_8, window_bounds = array<i64: 1, 96>}, {pipeline_mode = #tpu.pipeline_mode<synchronous>, transform_indices = @transform_9, window_bounds = array<i64: 32, 32>}, {pipeline_mode = #tpu.pipeline_mode<synchronous>, transform_indices = @transform_10, window_bounds = array<i64: 32, 16>}, {pipeline_mode = #tpu.pipeline_mode<synchronous>, transform_indices = @transform_11, window_bounds = array<i64: 32, 16>}, {pipeline_mode = #tpu.pipeline_mode<synchronous>, transform_indices = @transform_12, window_bounds = array<i64: 1, 16>}, {transform_indices = @transform_13, window_bounds = array<i64: 2, 256>}, {transform_indices = @transform_14, window_bounds = array<i64: 2, 32>}, {transform_indices = @transform_15, window_bounds = array<i64: 2, 96>}, {transform_indices = @transform_16, window_bounds = array<i64: 2, 24>}]} {
    %c0 = arith.constant 0 : index
    %c0_0 = arith.constant 0 : index
    %c0_1 = arith.constant 0 : index
    %0 = vector.load %arg1[%c0, %c0_0, %c0_1] : memref<2x8x32xf32, #tpu.memory_space<vmem>>, vector<2x8x32xf32>
    %c0_2 = arith.constant 0 : index
    %c0_3 = arith.constant 0 : index
    %1 = vector.load %arg7[%c0_2, %c0_3] : memref<32x128xbf16, #tpu.memory_space<vmem>>, vector<32x128xbf16>
    %c0_4 = arith.constant 0 : index
    %c0_5 = arith.constant 0 : index
    %2 = vector.load %arg2[%c0_4, %c0_5] : memref<2x8xf32, #tpu.memory_space<vmem>>, vector<2x8xf32>
    %3 = vector.shape_cast %2 : vector<2x8xf32> to vector<2x8x1xf32>
    %4 = vector.shape_cast %3 : vector<2x8x1xf32> to vector<2x8x1xf32>
    %5 = vector.broadcast %4 : vector<2x8x1xf32> to vector<2x8x16xf32>
    %c0_6 = arith.constant 0 : index
    %c0_7 = arith.constant 0 : index
    %6 = vector.load %arg3[%c0_6, %c0_7] : memref<2x8xf32, #tpu.memory_space<vmem>>, vector<2x8xf32>
    %7 = vector.shape_cast %6 : vector<2x8xf32> to vector<2x8x1xf32>
    %8 = vector.shape_cast %7 : vector<2x8x1xf32> to vector<2x8x1xf32>
    %9 = vector.broadcast %8 : vector<2x8x1xf32> to vector<2x8x16xf32>
    %10 = tpu.concatenate %5, %9 in 2 : vector<2x8x16xf32>, vector<2x8x16xf32> -> vector<2x8x32xf32>
    %cst = arith.constant 0.000000e+00 : f32
    %11 = vector.broadcast %cst : f32 to vector<2x8x32xf32>
    %12 = arith.cmpf ogt, %10, %11 : vector<2x8x32xf32>
    %13 = vector.shape_cast %0 : vector<2x8x32xf32> to vector<16x32xf32>
    %14 = arith.truncf %13 : vector<16x32xf32> to vector<16x32xbf16>
    %c0_8 = arith.constant 0 : index
    %c0_9 = arith.constant 0 : index
    %15 = vector.load %arg5[%c0_8, %c0_9] : memref<32x256xbf16, #tpu.memory_space<vmem>>, vector<32x256xbf16>
    %cst_10 = arith.constant dense<0.000000e+00> : vector<16x256xf32>
    %16 = tpu.matmul %14, %15, %cst_10 {dimension_numbers = #tpu.dot_dimension_numbers<[1], [0], [0], [1], [0, 0, 1, 1], [], []>} : vector<16x32xbf16>, vector<32x256xbf16>, vector<16x256xf32> -> vector<16x256xf32>
    %17 = vector.shape_cast %16 : vector<16x256xf32> to vector<2x8x256xf32>
    %18 = vector.extract_strided_slice %17 {offsets = [0, 0, 0], sizes = [2, 8, 128], strides = [1, 1, 1]} : vector<2x8x256xf32> to vector<2x8x128xf32>
    %c0_11 = arith.constant 0 : index
    %c0_12 = arith.constant 0 : index
    %19 = vector.load %arg6[%c0_11, %c0_12] : memref<1x128xf32, #tpu.memory_space<vmem>>, vector<1x128xf32>
    %20 = vector.shape_cast %19 : vector<1x128xf32> to vector<1x1x128xf32>
    %21 = vector.broadcast %20 : vector<1x1x128xf32> to vector<2x8x128xf32>
    %22 = arith.addf %18, %21 : vector<2x8x128xf32>
    %23 = vector.extract_strided_slice %17 {offsets = [0, 0, 128], sizes = [2, 8, 128], strides = [1, 1, 1]} : vector<2x8x256xf32> to vector<2x8x128xf32>
    %cst_13 = arith.constant 0.000000e+00 : f32
    %24 = vector.broadcast %cst_13 : f32 to vector<2x32xf32>
    %cst_14 = arith.constant 0.000000e+00 : f32
    %25 = vector.broadcast %cst_14 : f32 to vector<2x32xf32>
    %26 = vector.extract_strided_slice %22 {offsets = [0, 0, 0], sizes = [2, 1, 128], strides = [1, 1, 1]} : vector<2x8x128xf32> to vector<2x1x128xf32>
    %27 = vector.shape_cast %26 : vector<2x1x128xf32> to vector<2x128xf32>
    %28 = vector.extract_strided_slice %23 {offsets = [0, 7, 0], sizes = [2, 1, 128], strides = [1, 1, 1]} : vector<2x8x128xf32> to vector<2x1x128xf32>
    %29 = vector.shape_cast %28 : vector<2x1x128xf32> to vector<2x128xf32>
    %30 = arith.addf %27, %29 : vector<2x128xf32>
    %31 = vector.extract_strided_slice %12 {offsets = [0, 0, 0], sizes = [2, 1, 32], strides = [1, 1, 1]} : vector<2x8x32xi1> to vector<2x1x32xi1>
    %32 = vector.shape_cast %31 : vector<2x1x32xi1> to vector<2x32xi1>
    %33 = arith.truncf %24 : vector<2x32xf32> to vector<2x32xbf16>
    %cst_15 = arith.constant dense<0.000000e+00> : vector<2x128xf32>
    %34 = tpu.matmul %33, %1, %cst_15 {dimension_numbers = #tpu.dot_dimension_numbers<[1], [0], [0], [1], [0, 0, 1, 1], [], []>} : vector<2x32xbf16>, vector<32x128xbf16>, vector<2x128xf32> -> vector<2x128xf32>
    %35 = arith.addf %34, %30 : vector<2x128xf32>
    %36 = vector.extract_strided_slice %35 {offsets = [0, 0], sizes = [2, 32], strides = [1, 1]} : vector<2x128xf32> to vector<2x32xf32>
    %37 = arith.negf %36 : vector<2x32xf32>
    %38 = math.exp %37 : vector<2x32xf32>
    %cst_16 = arith.constant 1.000000e+00 : f32
    %39 = vector.broadcast %cst_16 : f32 to vector<2x32xf32>
    %40 = arith.addf %39, %38 : vector<2x32xf32>
    %41 = arith.divf %39, %40 : vector<2x32xf32>
    %42 = vector.extract_strided_slice %35 {offsets = [0, 32], sizes = [2, 32], strides = [1, 1]} : vector<2x128xf32> to vector<2x32xf32>
    %43 = arith.negf %42 : vector<2x32xf32>
    %44 = math.exp %43 : vector<2x32xf32>
    %cst_17 = arith.constant 1.000000e+00 : f32
    %45 = vector.broadcast %cst_17 : f32 to vector<2x32xf32>
    %46 = arith.addf %45, %44 : vector<2x32xf32>
    %47 = arith.divf %45, %46 : vector<2x32xf32>
    %48 = vector.extract_strided_slice %35 {offsets = [0, 64], sizes = [2, 32], strides = [1, 1]} : vector<2x128xf32> to vector<2x32xf32>
    %49 = math.tanh %48 : vector<2x32xf32>
    %50 = vector.extract_strided_slice %35 {offsets = [0, 96], sizes = [2, 32], strides = [1, 1]} : vector<2x128xf32> to vector<2x32xf32>
    %51 = arith.negf %50 : vector<2x32xf32>
    %52 = math.exp %51 : vector<2x32xf32>
    %cst_18 = arith.constant 1.000000e+00 : f32
    %53 = vector.broadcast %cst_18 : f32 to vector<2x32xf32>
    %54 = arith.addf %53, %52 : vector<2x32xf32>
    %55 = arith.divf %53, %54 : vector<2x32xf32>
    %56 = arith.mulf %47, %25 : vector<2x32xf32>
    %57 = arith.mulf %41, %49 : vector<2x32xf32>
    %58 = arith.addf %56, %57 : vector<2x32xf32>
    %59 = math.tanh %58 : vector<2x32xf32>
    %60 = arith.mulf %55, %59 : vector<2x32xf32>
    %61 = arith.select %32, %60, %24 : vector<2x32xi1>, vector<2x32xf32>
    %62 = arith.select %32, %58, %25 : vector<2x32xi1>, vector<2x32xf32>
    %cst_19 = arith.constant 0.000000e+00 : f32
    %63 = vector.broadcast %cst_19 : f32 to vector<2x32xf32>
    %64 = arith.select %32, %60, %63 : vector<2x32xi1>, vector<2x32xf32>
    %65 = vector.extract_strided_slice %64 {offsets = [0, 0], sizes = [2, 16], strides = [1, 1]} : vector<2x32xf32> to vector<2x16xf32>
    %66 = vector.extract_strided_slice %64 {offsets = [0, 16], sizes = [2, 16], strides = [1, 1]} : vector<2x32xf32> to vector<2x16xf32>
    %67 = vector.extract_strided_slice %22 {offsets = [0, 1, 0], sizes = [2, 1, 128], strides = [1, 1, 1]} : vector<2x8x128xf32> to vector<2x1x128xf32>
    %68 = vector.shape_cast %67 : vector<2x1x128xf32> to vector<2x128xf32>
    %69 = vector.extract_strided_slice %23 {offsets = [0, 6, 0], sizes = [2, 1, 128], strides = [1, 1, 1]} : vector<2x8x128xf32> to vector<2x1x128xf32>
    %70 = vector.shape_cast %69 : vector<2x1x128xf32> to vector<2x128xf32>
    %71 = arith.addf %68, %70 : vector<2x128xf32>
    %72 = vector.extract_strided_slice %12 {offsets = [0, 1, 0], sizes = [2, 1, 32], strides = [1, 1, 1]} : vector<2x8x32xi1> to vector<2x1x32xi1>
    %73 = vector.shape_cast %72 : vector<2x1x32xi1> to vector<2x32xi1>
    %74 = arith.truncf %61 : vector<2x32xf32> to vector<2x32xbf16>
    %cst_20 = arith.constant dense<0.000000e+00> : vector<2x128xf32>
    %75 = tpu.matmul %74, %1, %cst_20 {dimension_numbers = #tpu.dot_dimension_numbers<[1], [0], [0], [1], [0, 0, 1, 1], [], []>} : vector<2x32xbf16>, vector<32x128xbf16>, vector<2x128xf32> -> vector<2x128xf32>
    %76 = arith.addf %75, %71 : vector<2x128xf32>
    %77 = vector.extract_strided_slice %76 {offsets = [0, 0], sizes = [2, 32], strides = [1, 1]} : vector<2x128xf32> to vector<2x32xf32>
    %78 = arith.negf %77 : vector<2x32xf32>
    %79 = math.exp %78 : vector<2x32xf32>
    %cst_21 = arith.constant 1.000000e+00 : f32
    %80 = vector.broadcast %cst_21 : f32 to vector<2x32xf32>
    %81 = arith.addf %80, %79 : vector<2x32xf32>
    %82 = arith.divf %80, %81 : vector<2x32xf32>
    %83 = vector.extract_strided_slice %76 {offsets = [0, 32], sizes = [2, 32], strides = [1, 1]} : vector<2x128xf32> to vector<2x32xf32>
    %84 = arith.negf %83 : vector<2x32xf32>
    %85 = math.exp %84 : vector<2x32xf32>
    %cst_22 = arith.constant 1.000000e+00 : f32
    %86 = vector.broadcast %cst_22 : f32 to vector<2x32xf32>
    %87 = arith.addf %86, %85 : vector<2x32xf32>
    %88 = arith.divf %86, %87 : vector<2x32xf32>
    %89 = vector.extract_strided_slice %76 {offsets = [0, 64], sizes = [2, 32], strides = [1, 1]} : vector<2x128xf32> to vector<2x32xf32>
    %90 = math.tanh %89 : vector<2x32xf32>
    %91 = vector.extract_strided_slice %76 {offsets = [0, 96], sizes = [2, 32], strides = [1, 1]} : vector<2x128xf32> to vector<2x32xf32>
    %92 = arith.negf %91 : vector<2x32xf32>
    %93 = math.exp %92 : vector<2x32xf32>
    %cst_23 = arith.constant 1.000000e+00 : f32
    %94 = vector.broadcast %cst_23 : f32 to vector<2x32xf32>
    %95 = arith.addf %94, %93 : vector<2x32xf32>
    %96 = arith.divf %94, %95 : vector<2x32xf32>
    %97 = arith.mulf %88, %62 : vector<2x32xf32>
    %98 = arith.mulf %82, %90 : vector<2x32xf32>
    %99 = arith.addf %97, %98 : vector<2x32xf32>
    %100 = math.tanh %99 : vector<2x32xf32>
    %101 = arith.mulf %96, %100 : vector<2x32xf32>
    %102 = arith.select %73, %101, %61 : vector<2x32xi1>, vector<2x32xf32>
    %103 = arith.select %73, %99, %62 : vector<2x32xi1>, vector<2x32xf32>
    %cst_24 = arith.constant 0.000000e+00 : f32
    %104 = vector.broadcast %cst_24 : f32 to vector<2x32xf32>
    %105 = arith.select %73, %101, %104 : vector<2x32xi1>, vector<2x32xf32>
    %106 = vector.extract_strided_slice %105 {offsets = [0, 0], sizes = [2, 16], strides = [1, 1]} : vector<2x32xf32> to vector<2x16xf32>
    %107 = vector.extract_strided_slice %105 {offsets = [0, 16], sizes = [2, 16], strides = [1, 1]} : vector<2x32xf32> to vector<2x16xf32>
    %108 = vector.extract_strided_slice %22 {offsets = [0, 2, 0], sizes = [2, 1, 128], strides = [1, 1, 1]} : vector<2x8x128xf32> to vector<2x1x128xf32>
    %109 = vector.shape_cast %108 : vector<2x1x128xf32> to vector<2x128xf32>
    %110 = vector.extract_strided_slice %23 {offsets = [0, 5, 0], sizes = [2, 1, 128], strides = [1, 1, 1]} : vector<2x8x128xf32> to vector<2x1x128xf32>
    %111 = vector.shape_cast %110 : vector<2x1x128xf32> to vector<2x128xf32>
    %112 = arith.addf %109, %111 : vector<2x128xf32>
    %113 = vector.extract_strided_slice %12 {offsets = [0, 2, 0], sizes = [2, 1, 32], strides = [1, 1, 1]} : vector<2x8x32xi1> to vector<2x1x32xi1>
    %114 = vector.shape_cast %113 : vector<2x1x32xi1> to vector<2x32xi1>
    %115 = arith.truncf %102 : vector<2x32xf32> to vector<2x32xbf16>
    %cst_25 = arith.constant dense<0.000000e+00> : vector<2x128xf32>
    %116 = tpu.matmul %115, %1, %cst_25 {dimension_numbers = #tpu.dot_dimension_numbers<[1], [0], [0], [1], [0, 0, 1, 1], [], []>} : vector<2x32xbf16>, vector<32x128xbf16>, vector<2x128xf32> -> vector<2x128xf32>
    %117 = arith.addf %116, %112 : vector<2x128xf32>
    %118 = vector.extract_strided_slice %117 {offsets = [0, 0], sizes = [2, 32], strides = [1, 1]} : vector<2x128xf32> to vector<2x32xf32>
    %119 = arith.negf %118 : vector<2x32xf32>
    %120 = math.exp %119 : vector<2x32xf32>
    %cst_26 = arith.constant 1.000000e+00 : f32
    %121 = vector.broadcast %cst_26 : f32 to vector<2x32xf32>
    %122 = arith.addf %121, %120 : vector<2x32xf32>
    %123 = arith.divf %121, %122 : vector<2x32xf32>
    %124 = vector.extract_strided_slice %117 {offsets = [0, 32], sizes = [2, 32], strides = [1, 1]} : vector<2x128xf32> to vector<2x32xf32>
    %125 = arith.negf %124 : vector<2x32xf32>
    %126 = math.exp %125 : vector<2x32xf32>
    %cst_27 = arith.constant 1.000000e+00 : f32
    %127 = vector.broadcast %cst_27 : f32 to vector<2x32xf32>
    %128 = arith.addf %127, %126 : vector<2x32xf32>
    %129 = arith.divf %127, %128 : vector<2x32xf32>
    %130 = vector.extract_strided_slice %117 {offsets = [0, 64], sizes = [2, 32], strides = [1, 1]} : vector<2x128xf32> to vector<2x32xf32>
    %131 = math.tanh %130 : vector<2x32xf32>
    %132 = vector.extract_strided_slice %117 {offsets = [0, 96], sizes = [2, 32], strides = [1, 1]} : vector<2x128xf32> to vector<2x32xf32>
    %133 = arith.negf %132 : vector<2x32xf32>
    %134 = math.exp %133 : vector<2x32xf32>
    %cst_28 = arith.constant 1.000000e+00 : f32
    %135 = vector.broadcast %cst_28 : f32 to vector<2x32xf32>
    %136 = arith.addf %135, %134 : vector<2x32xf32>
    %137 = arith.divf %135, %136 : vector<2x32xf32>
    %138 = arith.mulf %129, %103 : vector<2x32xf32>
    %139 = arith.mulf %123, %131 : vector<2x32xf32>
    %140 = arith.addf %138, %139 : vector<2x32xf32>
    %141 = math.tanh %140 : vector<2x32xf32>
    %142 = arith.mulf %137, %141 : vector<2x32xf32>
    %143 = arith.select %114, %142, %102 : vector<2x32xi1>, vector<2x32xf32>
    %144 = arith.select %114, %140, %103 : vector<2x32xi1>, vector<2x32xf32>
    %cst_29 = arith.constant 0.000000e+00 : f32
    %145 = vector.broadcast %cst_29 : f32 to vector<2x32xf32>
    %146 = arith.select %114, %142, %145 : vector<2x32xi1>, vector<2x32xf32>
    %147 = vector.extract_strided_slice %146 {offsets = [0, 0], sizes = [2, 16], strides = [1, 1]} : vector<2x32xf32> to vector<2x16xf32>
    %148 = vector.extract_strided_slice %146 {offsets = [0, 16], sizes = [2, 16], strides = [1, 1]} : vector<2x32xf32> to vector<2x16xf32>
    %149 = vector.extract_strided_slice %22 {offsets = [0, 3, 0], sizes = [2, 1, 128], strides = [1, 1, 1]} : vector<2x8x128xf32> to vector<2x1x128xf32>
    %150 = vector.shape_cast %149 : vector<2x1x128xf32> to vector<2x128xf32>
    %151 = vector.extract_strided_slice %23 {offsets = [0, 4, 0], sizes = [2, 1, 128], strides = [1, 1, 1]} : vector<2x8x128xf32> to vector<2x1x128xf32>
    %152 = vector.shape_cast %151 : vector<2x1x128xf32> to vector<2x128xf32>
    %153 = arith.addf %150, %152 : vector<2x128xf32>
    %154 = vector.extract_strided_slice %12 {offsets = [0, 3, 0], sizes = [2, 1, 32], strides = [1, 1, 1]} : vector<2x8x32xi1> to vector<2x1x32xi1>
    %155 = vector.shape_cast %154 : vector<2x1x32xi1> to vector<2x32xi1>
    %156 = arith.truncf %143 : vector<2x32xf32> to vector<2x32xbf16>
    %cst_30 = arith.constant dense<0.000000e+00> : vector<2x128xf32>
    %157 = tpu.matmul %156, %1, %cst_30 {dimension_numbers = #tpu.dot_dimension_numbers<[1], [0], [0], [1], [0, 0, 1, 1], [], []>} : vector<2x32xbf16>, vector<32x128xbf16>, vector<2x128xf32> -> vector<2x128xf32>
    %158 = arith.addf %157, %153 : vector<2x128xf32>
    %159 = vector.extract_strided_slice %158 {offsets = [0, 0], sizes = [2, 32], strides = [1, 1]} : vector<2x128xf32> to vector<2x32xf32>
    %160 = arith.negf %159 : vector<2x32xf32>
    %161 = math.exp %160 : vector<2x32xf32>
    %cst_31 = arith.constant 1.000000e+00 : f32
    %162 = vector.broadcast %cst_31 : f32 to vector<2x32xf32>
    %163 = arith.addf %162, %161 : vector<2x32xf32>
    %164 = arith.divf %162, %163 : vector<2x32xf32>
    %165 = vector.extract_strided_slice %158 {offsets = [0, 32], sizes = [2, 32], strides = [1, 1]} : vector<2x128xf32> to vector<2x32xf32>
    %166 = arith.negf %165 : vector<2x32xf32>
    %167 = math.exp %166 : vector<2x32xf32>
    %cst_32 = arith.constant 1.000000e+00 : f32
    %168 = vector.broadcast %cst_32 : f32 to vector<2x32xf32>
    %169 = arith.addf %168, %167 : vector<2x32xf32>
    %170 = arith.divf %168, %169 : vector<2x32xf32>
    %171 = vector.extract_strided_slice %158 {offsets = [0, 64], sizes = [2, 32], strides = [1, 1]} : vector<2x128xf32> to vector<2x32xf32>
    %172 = math.tanh %171 : vector<2x32xf32>
    %173 = vector.extract_strided_slice %158 {offsets = [0, 96], sizes = [2, 32], strides = [1, 1]} : vector<2x128xf32> to vector<2x32xf32>
    %174 = arith.negf %173 : vector<2x32xf32>
    %175 = math.exp %174 : vector<2x32xf32>
    %cst_33 = arith.constant 1.000000e+00 : f32
    %176 = vector.broadcast %cst_33 : f32 to vector<2x32xf32>
    %177 = arith.addf %176, %175 : vector<2x32xf32>
    %178 = arith.divf %176, %177 : vector<2x32xf32>
    %179 = arith.mulf %170, %144 : vector<2x32xf32>
    %180 = arith.mulf %164, %172 : vector<2x32xf32>
    %181 = arith.addf %179, %180 : vector<2x32xf32>
    %182 = math.tanh %181 : vector<2x32xf32>
    %183 = arith.mulf %178, %182 : vector<2x32xf32>
    %184 = arith.select %155, %183, %143 : vector<2x32xi1>, vector<2x32xf32>
    %185 = arith.select %155, %181, %144 : vector<2x32xi1>, vector<2x32xf32>
    %cst_34 = arith.constant 0.000000e+00 : f32
    %186 = vector.broadcast %cst_34 : f32 to vector<2x32xf32>
    %187 = arith.select %155, %183, %186 : vector<2x32xi1>, vector<2x32xf32>
    %188 = vector.extract_strided_slice %187 {offsets = [0, 0], sizes = [2, 16], strides = [1, 1]} : vector<2x32xf32> to vector<2x16xf32>
    %189 = vector.extract_strided_slice %187 {offsets = [0, 16], sizes = [2, 16], strides = [1, 1]} : vector<2x32xf32> to vector<2x16xf32>
    %190 = vector.extract_strided_slice %22 {offsets = [0, 4, 0], sizes = [2, 1, 128], strides = [1, 1, 1]} : vector<2x8x128xf32> to vector<2x1x128xf32>
    %191 = vector.shape_cast %190 : vector<2x1x128xf32> to vector<2x128xf32>
    %192 = vector.extract_strided_slice %23 {offsets = [0, 3, 0], sizes = [2, 1, 128], strides = [1, 1, 1]} : vector<2x8x128xf32> to vector<2x1x128xf32>
    %193 = vector.shape_cast %192 : vector<2x1x128xf32> to vector<2x128xf32>
    %194 = arith.addf %191, %193 : vector<2x128xf32>
    %195 = vector.extract_strided_slice %12 {offsets = [0, 4, 0], sizes = [2, 1, 32], strides = [1, 1, 1]} : vector<2x8x32xi1> to vector<2x1x32xi1>
    %196 = vector.shape_cast %195 : vector<2x1x32xi1> to vector<2x32xi1>
    %197 = arith.truncf %184 : vector<2x32xf32> to vector<2x32xbf16>
    %cst_35 = arith.constant dense<0.000000e+00> : vector<2x128xf32>
    %198 = tpu.matmul %197, %1, %cst_35 {dimension_numbers = #tpu.dot_dimension_numbers<[1], [0], [0], [1], [0, 0, 1, 1], [], []>} : vector<2x32xbf16>, vector<32x128xbf16>, vector<2x128xf32> -> vector<2x128xf32>
    %199 = arith.addf %198, %194 : vector<2x128xf32>
    %200 = vector.extract_strided_slice %199 {offsets = [0, 0], sizes = [2, 32], strides = [1, 1]} : vector<2x128xf32> to vector<2x32xf32>
    %201 = arith.negf %200 : vector<2x32xf32>
    %202 = math.exp %201 : vector<2x32xf32>
    %cst_36 = arith.constant 1.000000e+00 : f32
    %203 = vector.broadcast %cst_36 : f32 to vector<2x32xf32>
    %204 = arith.addf %203, %202 : vector<2x32xf32>
    %205 = arith.divf %203, %204 : vector<2x32xf32>
    %206 = vector.extract_strided_slice %199 {offsets = [0, 32], sizes = [2, 32], strides = [1, 1]} : vector<2x128xf32> to vector<2x32xf32>
    %207 = arith.negf %206 : vector<2x32xf32>
    %208 = math.exp %207 : vector<2x32xf32>
    %cst_37 = arith.constant 1.000000e+00 : f32
    %209 = vector.broadcast %cst_37 : f32 to vector<2x32xf32>
    %210 = arith.addf %209, %208 : vector<2x32xf32>
    %211 = arith.divf %209, %210 : vector<2x32xf32>
    %212 = vector.extract_strided_slice %199 {offsets = [0, 64], sizes = [2, 32], strides = [1, 1]} : vector<2x128xf32> to vector<2x32xf32>
    %213 = math.tanh %212 : vector<2x32xf32>
    %214 = vector.extract_strided_slice %199 {offsets = [0, 96], sizes = [2, 32], strides = [1, 1]} : vector<2x128xf32> to vector<2x32xf32>
    %215 = arith.negf %214 : vector<2x32xf32>
    %216 = math.exp %215 : vector<2x32xf32>
    %cst_38 = arith.constant 1.000000e+00 : f32
    %217 = vector.broadcast %cst_38 : f32 to vector<2x32xf32>
    %218 = arith.addf %217, %216 : vector<2x32xf32>
    %219 = arith.divf %217, %218 : vector<2x32xf32>
    %220 = arith.mulf %211, %185 : vector<2x32xf32>
    %221 = arith.mulf %205, %213 : vector<2x32xf32>
    %222 = arith.addf %220, %221 : vector<2x32xf32>
    %223 = math.tanh %222 : vector<2x32xf32>
    %224 = arith.mulf %219, %223 : vector<2x32xf32>
    %225 = arith.select %196, %224, %184 : vector<2x32xi1>, vector<2x32xf32>
    %226 = arith.select %196, %222, %185 : vector<2x32xi1>, vector<2x32xf32>
    %cst_39 = arith.constant 0.000000e+00 : f32
    %227 = vector.broadcast %cst_39 : f32 to vector<2x32xf32>
    %228 = arith.select %196, %224, %227 : vector<2x32xi1>, vector<2x32xf32>
    %229 = vector.extract_strided_slice %228 {offsets = [0, 0], sizes = [2, 16], strides = [1, 1]} : vector<2x32xf32> to vector<2x16xf32>
    %230 = vector.extract_strided_slice %228 {offsets = [0, 16], sizes = [2, 16], strides = [1, 1]} : vector<2x32xf32> to vector<2x16xf32>
    %231 = vector.extract_strided_slice %22 {offsets = [0, 5, 0], sizes = [2, 1, 128], strides = [1, 1, 1]} : vector<2x8x128xf32> to vector<2x1x128xf32>
    %232 = vector.shape_cast %231 : vector<2x1x128xf32> to vector<2x128xf32>
    %233 = vector.extract_strided_slice %23 {offsets = [0, 2, 0], sizes = [2, 1, 128], strides = [1, 1, 1]} : vector<2x8x128xf32> to vector<2x1x128xf32>
    %234 = vector.shape_cast %233 : vector<2x1x128xf32> to vector<2x128xf32>
    %235 = arith.addf %232, %234 : vector<2x128xf32>
    %236 = vector.extract_strided_slice %12 {offsets = [0, 5, 0], sizes = [2, 1, 32], strides = [1, 1, 1]} : vector<2x8x32xi1> to vector<2x1x32xi1>
    %237 = vector.shape_cast %236 : vector<2x1x32xi1> to vector<2x32xi1>
    %238 = arith.truncf %225 : vector<2x32xf32> to vector<2x32xbf16>
    %cst_40 = arith.constant dense<0.000000e+00> : vector<2x128xf32>
    %239 = tpu.matmul %238, %1, %cst_40 {dimension_numbers = #tpu.dot_dimension_numbers<[1], [0], [0], [1], [0, 0, 1, 1], [], []>} : vector<2x32xbf16>, vector<32x128xbf16>, vector<2x128xf32> -> vector<2x128xf32>
    %240 = arith.addf %239, %235 : vector<2x128xf32>
    %241 = vector.extract_strided_slice %240 {offsets = [0, 0], sizes = [2, 32], strides = [1, 1]} : vector<2x128xf32> to vector<2x32xf32>
    %242 = arith.negf %241 : vector<2x32xf32>
    %243 = math.exp %242 : vector<2x32xf32>
    %cst_41 = arith.constant 1.000000e+00 : f32
    %244 = vector.broadcast %cst_41 : f32 to vector<2x32xf32>
    %245 = arith.addf %244, %243 : vector<2x32xf32>
    %246 = arith.divf %244, %245 : vector<2x32xf32>
    %247 = vector.extract_strided_slice %240 {offsets = [0, 32], sizes = [2, 32], strides = [1, 1]} : vector<2x128xf32> to vector<2x32xf32>
    %248 = arith.negf %247 : vector<2x32xf32>
    %249 = math.exp %248 : vector<2x32xf32>
    %cst_42 = arith.constant 1.000000e+00 : f32
    %250 = vector.broadcast %cst_42 : f32 to vector<2x32xf32>
    %251 = arith.addf %250, %249 : vector<2x32xf32>
    %252 = arith.divf %250, %251 : vector<2x32xf32>
    %253 = vector.extract_strided_slice %240 {offsets = [0, 64], sizes = [2, 32], strides = [1, 1]} : vector<2x128xf32> to vector<2x32xf32>
    %254 = math.tanh %253 : vector<2x32xf32>
    %255 = vector.extract_strided_slice %240 {offsets = [0, 96], sizes = [2, 32], strides = [1, 1]} : vector<2x128xf32> to vector<2x32xf32>
    %256 = arith.negf %255 : vector<2x32xf32>
    %257 = math.exp %256 : vector<2x32xf32>
    %cst_43 = arith.constant 1.000000e+00 : f32
    %258 = vector.broadcast %cst_43 : f32 to vector<2x32xf32>
    %259 = arith.addf %258, %257 : vector<2x32xf32>
    %260 = arith.divf %258, %259 : vector<2x32xf32>
    %261 = arith.mulf %252, %226 : vector<2x32xf32>
    %262 = arith.mulf %246, %254 : vector<2x32xf32>
    %263 = arith.addf %261, %262 : vector<2x32xf32>
    %264 = math.tanh %263 : vector<2x32xf32>
    %265 = arith.mulf %260, %264 : vector<2x32xf32>
    %266 = arith.select %237, %265, %225 : vector<2x32xi1>, vector<2x32xf32>
    %267 = arith.select %237, %263, %226 : vector<2x32xi1>, vector<2x32xf32>
    %cst_44 = arith.constant 0.000000e+00 : f32
    %268 = vector.broadcast %cst_44 : f32 to vector<2x32xf32>
    %269 = arith.select %237, %265, %268 : vector<2x32xi1>, vector<2x32xf32>
    %270 = vector.extract_strided_slice %269 {offsets = [0, 0], sizes = [2, 16], strides = [1, 1]} : vector<2x32xf32> to vector<2x16xf32>
    %271 = vector.extract_strided_slice %269 {offsets = [0, 16], sizes = [2, 16], strides = [1, 1]} : vector<2x32xf32> to vector<2x16xf32>
    %272 = vector.extract_strided_slice %22 {offsets = [0, 6, 0], sizes = [2, 1, 128], strides = [1, 1, 1]} : vector<2x8x128xf32> to vector<2x1x128xf32>
    %273 = vector.shape_cast %272 : vector<2x1x128xf32> to vector<2x128xf32>
    %274 = vector.extract_strided_slice %23 {offsets = [0, 1, 0], sizes = [2, 1, 128], strides = [1, 1, 1]} : vector<2x8x128xf32> to vector<2x1x128xf32>
    %275 = vector.shape_cast %274 : vector<2x1x128xf32> to vector<2x128xf32>
    %276 = arith.addf %273, %275 : vector<2x128xf32>
    %277 = vector.extract_strided_slice %12 {offsets = [0, 6, 0], sizes = [2, 1, 32], strides = [1, 1, 1]} : vector<2x8x32xi1> to vector<2x1x32xi1>
    %278 = vector.shape_cast %277 : vector<2x1x32xi1> to vector<2x32xi1>
    %279 = arith.truncf %266 : vector<2x32xf32> to vector<2x32xbf16>
    %cst_45 = arith.constant dense<0.000000e+00> : vector<2x128xf32>
    %280 = tpu.matmul %279, %1, %cst_45 {dimension_numbers = #tpu.dot_dimension_numbers<[1], [0], [0], [1], [0, 0, 1, 1], [], []>} : vector<2x32xbf16>, vector<32x128xbf16>, vector<2x128xf32> -> vector<2x128xf32>
    %281 = arith.addf %280, %276 : vector<2x128xf32>
    %282 = vector.extract_strided_slice %281 {offsets = [0, 0], sizes = [2, 32], strides = [1, 1]} : vector<2x128xf32> to vector<2x32xf32>
    %283 = arith.negf %282 : vector<2x32xf32>
    %284 = math.exp %283 : vector<2x32xf32>
    %cst_46 = arith.constant 1.000000e+00 : f32
    %285 = vector.broadcast %cst_46 : f32 to vector<2x32xf32>
    %286 = arith.addf %285, %284 : vector<2x32xf32>
    %287 = arith.divf %285, %286 : vector<2x32xf32>
    %288 = vector.extract_strided_slice %281 {offsets = [0, 32], sizes = [2, 32], strides = [1, 1]} : vector<2x128xf32> to vector<2x32xf32>
    %289 = arith.negf %288 : vector<2x32xf32>
    %290 = math.exp %289 : vector<2x32xf32>
    %cst_47 = arith.constant 1.000000e+00 : f32
    %291 = vector.broadcast %cst_47 : f32 to vector<2x32xf32>
    %292 = arith.addf %291, %290 : vector<2x32xf32>
    %293 = arith.divf %291, %292 : vector<2x32xf32>
    %294 = vector.extract_strided_slice %281 {offsets = [0, 64], sizes = [2, 32], strides = [1, 1]} : vector<2x128xf32> to vector<2x32xf32>
    %295 = math.tanh %294 : vector<2x32xf32>
    %296 = vector.extract_strided_slice %281 {offsets = [0, 96], sizes = [2, 32], strides = [1, 1]} : vector<2x128xf32> to vector<2x32xf32>
    %297 = arith.negf %296 : vector<2x32xf32>
    %298 = math.exp %297 : vector<2x32xf32>
    %cst_48 = arith.constant 1.000000e+00 : f32
    %299 = vector.broadcast %cst_48 : f32 to vector<2x32xf32>
    %300 = arith.addf %299, %298 : vector<2x32xf32>
    %301 = arith.divf %299, %300 : vector<2x32xf32>
    %302 = arith.mulf %293, %267 : vector<2x32xf32>
    %303 = arith.mulf %287, %295 : vector<2x32xf32>
    %304 = arith.addf %302, %303 : vector<2x32xf32>
    %305 = math.tanh %304 : vector<2x32xf32>
    %306 = arith.mulf %301, %305 : vector<2x32xf32>
    %307 = arith.select %278, %306, %266 : vector<2x32xi1>, vector<2x32xf32>
    %308 = arith.select %278, %304, %267 : vector<2x32xi1>, vector<2x32xf32>
    %cst_49 = arith.constant 0.000000e+00 : f32
    %309 = vector.broadcast %cst_49 : f32 to vector<2x32xf32>
    %310 = arith.select %278, %306, %309 : vector<2x32xi1>, vector<2x32xf32>
    %311 = vector.extract_strided_slice %310 {offsets = [0, 0], sizes = [2, 16], strides = [1, 1]} : vector<2x32xf32> to vector<2x16xf32>
    %312 = vector.extract_strided_slice %310 {offsets = [0, 16], sizes = [2, 16], strides = [1, 1]} : vector<2x32xf32> to vector<2x16xf32>
    %313 = vector.extract_strided_slice %22 {offsets = [0, 7, 0], sizes = [2, 1, 128], strides = [1, 1, 1]} : vector<2x8x128xf32> to vector<2x1x128xf32>
    %314 = vector.shape_cast %313 : vector<2x1x128xf32> to vector<2x128xf32>
    %315 = vector.extract_strided_slice %23 {offsets = [0, 0, 0], sizes = [2, 1, 128], strides = [1, 1, 1]} : vector<2x8x128xf32> to vector<2x1x128xf32>
    %316 = vector.shape_cast %315 : vector<2x1x128xf32> to vector<2x128xf32>
    %317 = arith.addf %314, %316 : vector<2x128xf32>
    %318 = vector.extract_strided_slice %12 {offsets = [0, 7, 0], sizes = [2, 1, 32], strides = [1, 1, 1]} : vector<2x8x32xi1> to vector<2x1x32xi1>
    %319 = vector.shape_cast %318 : vector<2x1x32xi1> to vector<2x32xi1>
    %320 = arith.truncf %307 : vector<2x32xf32> to vector<2x32xbf16>
    %cst_50 = arith.constant dense<0.000000e+00> : vector<2x128xf32>
    %321 = tpu.matmul %320, %1, %cst_50 {dimension_numbers = #tpu.dot_dimension_numbers<[1], [0], [0], [1], [0, 0, 1, 1], [], []>} : vector<2x32xbf16>, vector<32x128xbf16>, vector<2x128xf32> -> vector<2x128xf32>
    %322 = arith.addf %321, %317 : vector<2x128xf32>
    %323 = vector.extract_strided_slice %322 {offsets = [0, 0], sizes = [2, 32], strides = [1, 1]} : vector<2x128xf32> to vector<2x32xf32>
    %324 = arith.negf %323 : vector<2x32xf32>
    %325 = math.exp %324 : vector<2x32xf32>
    %cst_51 = arith.constant 1.000000e+00 : f32
    %326 = vector.broadcast %cst_51 : f32 to vector<2x32xf32>
    %327 = arith.addf %326, %325 : vector<2x32xf32>
    %328 = arith.divf %326, %327 : vector<2x32xf32>
    %329 = vector.extract_strided_slice %322 {offsets = [0, 32], sizes = [2, 32], strides = [1, 1]} : vector<2x128xf32> to vector<2x32xf32>
    %330 = arith.negf %329 : vector<2x32xf32>
    %331 = math.exp %330 : vector<2x32xf32>
    %cst_52 = arith.constant 1.000000e+00 : f32
    %332 = vector.broadcast %cst_52 : f32 to vector<2x32xf32>
    %333 = arith.addf %332, %331 : vector<2x32xf32>
    %334 = arith.divf %332, %333 : vector<2x32xf32>
    %335 = vector.extract_strided_slice %322 {offsets = [0, 64], sizes = [2, 32], strides = [1, 1]} : vector<2x128xf32> to vector<2x32xf32>
    %336 = math.tanh %335 : vector<2x32xf32>
    %337 = vector.extract_strided_slice %322 {offsets = [0, 96], sizes = [2, 32], strides = [1, 1]} : vector<2x128xf32> to vector<2x32xf32>
    %338 = arith.negf %337 : vector<2x32xf32>
    %339 = math.exp %338 : vector<2x32xf32>
    %cst_53 = arith.constant 1.000000e+00 : f32
    %340 = vector.broadcast %cst_53 : f32 to vector<2x32xf32>
    %341 = arith.addf %340, %339 : vector<2x32xf32>
    %342 = arith.divf %340, %341 : vector<2x32xf32>
    %343 = arith.mulf %334, %308 : vector<2x32xf32>
    %344 = arith.mulf %328, %336 : vector<2x32xf32>
    %345 = arith.addf %343, %344 : vector<2x32xf32>
    %346 = math.tanh %345 : vector<2x32xf32>
    %347 = arith.mulf %342, %346 : vector<2x32xf32>
    %348 = arith.select %319, %347, %307 : vector<2x32xi1>, vector<2x32xf32>
    %cst_54 = arith.constant 0.000000e+00 : f32
    %349 = vector.broadcast %cst_54 : f32 to vector<2x32xf32>
    %350 = arith.select %319, %347, %349 : vector<2x32xi1>, vector<2x32xf32>
    %351 = vector.extract_strided_slice %350 {offsets = [0, 0], sizes = [2, 16], strides = [1, 1]} : vector<2x32xf32> to vector<2x16xf32>
    %352 = vector.extract_strided_slice %350 {offsets = [0, 16], sizes = [2, 16], strides = [1, 1]} : vector<2x32xf32> to vector<2x16xf32>
    %c0_55 = arith.constant 0 : index
    %c0_56 = arith.constant 0 : index
    %353 = vector.load %arg15[%c0_55, %c0_56] : memref<2x32xf32, #tpu.memory_space<vmem>>, vector<2x32xf32>
    tpu.vector_store %arg15[%c0_55, %c0_56], %348 {strides = array<i32>} : memref<2x32xf32, #tpu.memory_space<vmem>>, vector<2x32xf32>,
    %354 = tpu.concatenate %65, %352 in 1 : vector<2x16xf32>, vector<2x16xf32> -> vector<2x32xf32>
    %355 = tpu.concatenate %106, %312 in 1 : vector<2x16xf32>, vector<2x16xf32> -> vector<2x32xf32>
    %356 = tpu.concatenate %147, %271 in 1 : vector<2x16xf32>, vector<2x16xf32> -> vector<2x32xf32>
    %357 = tpu.concatenate %188, %230 in 1 : vector<2x16xf32>, vector<2x16xf32> -> vector<2x32xf32>
    %358 = tpu.concatenate %229, %189 in 1 : vector<2x16xf32>, vector<2x16xf32> -> vector<2x32xf32>
    %359 = tpu.concatenate %270, %148 in 1 : vector<2x16xf32>, vector<2x16xf32> -> vector<2x32xf32>
    %360 = tpu.concatenate %311, %107 in 1 : vector<2x16xf32>, vector<2x16xf32> -> vector<2x32xf32>
    %361 = tpu.concatenate %351, %66 in 1 : vector<2x16xf32>, vector<2x16xf32> -> vector<2x32xf32>
    %362 = vector.shape_cast %354 : vector<2x32xf32> to vector<2x1x32xf32>
    %363 = vector.shape_cast %355 : vector<2x32xf32> to vector<2x1x32xf32>
    %364 = vector.shape_cast %356 : vector<2x32xf32> to vector<2x1x32xf32>
    %365 = vector.shape_cast %357 : vector<2x32xf32> to vector<2x1x32xf32>
    %366 = vector.shape_cast %358 : vector<2x32xf32> to vector<2x1x32xf32>
    %367 = vector.shape_cast %359 : vector<2x32xf32> to vector<2x1x32xf32>
    %368 = vector.shape_cast %360 : vector<2x32xf32> to vector<2x1x32xf32>
    %369 = vector.shape_cast %361 : vector<2x32xf32> to vector<2x1x32xf32>
    %370 = tpu.concatenate %362, %363, %364, %365, %366, %367, %368, %369 in 1 : vector<2x1x32xf32>, vector<2x1x32xf32>, vector<2x1x32xf32>, vector<2x1x32xf32>, vector<2x1x32xf32>, vector<2x1x32xf32>, vector<2x1x32xf32>, vector<2x1x32xf32> -> vector<2x8x32xf32>
    %371 = tpu.concatenate %354, %355, %356, %357, %358, %359, %360, %361 in 1 : vector<2x32xf32>, vector<2x32xf32>, vector<2x32xf32>, vector<2x32xf32>, vector<2x32xf32>, vector<2x32xf32>, vector<2x32xf32>, vector<2x32xf32> -> vector<2x256xf32>
    %c0_57 = arith.constant 0 : index
    %c0_58 = arith.constant 0 : index
    %372 = vector.load %arg14[%c0_57, %c0_58] : memref<2x256xf32, #tpu.memory_space<vmem>>, vector<2x256xf32>
    tpu.vector_store %arg14[%c0_57, %c0_58], %371 {strides = array<i32>} : memref<2x256xf32, #tpu.memory_space<vmem>>, vector<2x256xf32>,
    %c0_59 = arith.constant 0 : index
    %c0_60 = arith.constant 0 : index
    %373 = vector.load %arg11[%c0_59, %c0_60] : memref<32x16xbf16, #tpu.memory_space<vmem>>, vector<32x16xbf16>
    %c0_61 = arith.constant 0 : index
    %c0_62 = arith.constant 0 : index
    %374 = vector.load %arg12[%c0_61, %c0_62] : memref<32x16xbf16, #tpu.memory_space<vmem>>, vector<32x16xbf16>
    %c0_63 = arith.constant 0 : index
    %c0_64 = arith.constant 0 : index
    %375 = vector.load %arg10[%c0_63, %c0_64] : memref<32x32xbf16, #tpu.memory_space<vmem>>, vector<32x32xbf16>
    %c0_65 = arith.constant 0 : index
    %c0_66 = arith.constant 0 : index
    %376 = vector.load %arg13[%c0_65, %c0_66] : memref<1x16xf32, #tpu.memory_space<vmem>>, vector<1x16xf32>
    %377 = vector.shape_cast %370 : vector<2x8x32xf32> to vector<16x32xf32>
    %378 = arith.truncf %377 : vector<16x32xf32> to vector<16x32xbf16>
    %cst_67 = arith.constant dense<0.000000e+00> : vector<16x16xf32>
    %379 = tpu.matmul %378, %374, %cst_67 {dimension_numbers = #tpu.dot_dimension_numbers<[1], [0], [0], [1], [0, 0, 1, 1], [], []>} : vector<16x32xbf16>, vector<32x16xbf16>, vector<16x16xf32> -> vector<16x16xf32>
    %380 = vector.shape_cast %379 : vector<16x16xf32> to vector<2x8x16xf32>
    %381 = arith.truncf %348 : vector<2x32xf32> to vector<2x32xbf16>
    %c0_68 = arith.constant 0 : index
    %c0_69 = arith.constant 0 : index
    %382 = vector.load %arg8[%c0_68, %c0_69] : memref<32x96xbf16, #tpu.memory_space<vmem>>, vector<32x96xbf16>
    %cst_70 = arith.constant dense<0.000000e+00> : vector<2x96xf32>
    %383 = tpu.matmul %381, %382, %cst_70 {dimension_numbers = #tpu.dot_dimension_numbers<[1], [0], [0], [1], [0, 0, 1, 1], [], []>} : vector<2x32xbf16>, vector<32x96xbf16>, vector<2x96xf32> -> vector<2x96xf32>
    %c0_71 = arith.constant 0 : index
    %c0_72 = arith.constant 0 : index
    %384 = vector.load %arg9[%c0_71, %c0_72] : memref<1x96xf32, #tpu.memory_space<vmem>>, vector<1x96xf32>
    %385 = vector.broadcast %384 : vector<1x96xf32> to vector<2x96xf32>
    %386 = arith.addf %383, %385 : vector<2x96xf32>
    %c0_73 = arith.constant 0 : index
    %c0_74 = arith.constant 0 : index
    %387 = vector.load %arg4[%c0_73, %c0_74] : memref<2x8xf32, #tpu.memory_space<vmem>>, vector<2x8xf32>
    %cst_75 = arith.constant 1.000000e+00 : f32
    %388 = vector.broadcast %cst_75 : f32 to vector<2x8xf32>
    %389 = arith.subf %388, %387 : vector<2x8xf32>
    %cst_76 = arith.constant -1.000000e+09 : f32
    %390 = vector.broadcast %cst_76 : f32 to vector<2x8xf32>
    %391 = arith.mulf %389, %390 : vector<2x8xf32>
    %cst_77 = arith.constant 0.000000e+00 : f32
    %392 = vector.broadcast %cst_77 : f32 to vector<2x32xf32>
    %393 = vector.extract_strided_slice %386 {offsets = [0, 0], sizes = [2, 32], strides = [1, 1]} : vector<2x96xf32> to vector<2x32xf32>
    %394 = arith.truncf %392 : vector<2x32xf32> to vector<2x32xbf16>
    %cst_78 = arith.constant dense<0.000000e+00> : vector<2x32xf32>
    %395 = tpu.matmul %394, %375, %cst_78 {dimension_numbers = #tpu.dot_dimension_numbers<[1], [0], [0], [1], [0, 0, 1, 1], [], []>} : vector<2x32xbf16>, vector<32x32xbf16>, vector<2x32xf32> -> vector<2x32xf32>
    %396 = arith.addf %393, %395 : vector<2x32xf32>
    %cst_79 = arith.constant 0.000000e+00 : f32
    %397 = vector.broadcast %cst_79 : f32 to vector<2x32xf32>
    %398 = arith.maximumf %396, %397 : vector<2x32xf32>
    %399 = arith.truncf %398 : vector<2x32xf32> to vector<2x32xbf16>
    %cst_80 = arith.constant dense<0.000000e+00> : vector<2x16xf32>
    %400 = tpu.matmul %399, %373, %cst_80 {dimension_numbers = #tpu.dot_dimension_numbers<[1], [0], [0], [1], [0, 0, 1, 1], [], []>} : vector<2x32xbf16>, vector<32x16xbf16>, vector<2x16xf32> -> vector<2x16xf32>
    %401 = vector.shape_cast %400 : vector<2x16xf32> to vector<2x1x16xf32>
    %402 = vector.broadcast %401 : vector<2x1x16xf32> to vector<2x8x16xf32>
    %403 = arith.addf %380, %402 : vector<2x8x16xf32>
    %404 = math.tanh %403 : vector<2x8x16xf32>
    %405 = vector.shape_cast %376 : vector<1x16xf32> to vector<1x1x16xf32>
    %406 = vector.broadcast %405 : vector<1x1x16xf32> to vector<2x8x16xf32>
    %407 = arith.mulf %404, %406 : vector<2x8x16xf32>
    %cst_81 = arith.constant dense<0.000000e+00> : vector<2x8xf32>
    %408 = vector.multi_reduction <add>, %407, %cst_81 [2] : vector<2x8x16xf32> to vector<2x8xf32>
    %409 = arith.addf %408, %391 : vector<2x8xf32>
    %cst_82 = arith.constant dense<0xFF800000> : vector<2xf32>
    %410 = vector.multi_reduction <maximumf>, %409, %cst_82 [1] : vector<2x8xf32> to vector<2xf32>
    %411 = vector.shape_cast %410 : vector<2xf32> to vector<2x1xf32>
    %412 = vector.broadcast %411 : vector<2x1xf32> to vector<2x8xf32>
    %413 = arith.subf %409, %412 : vector<2x8xf32>
    %414 = math.exp %413 : vector<2x8xf32>
    %cst_83 = arith.constant dense<0.000000e+00> : vector<2xf32>
    %415 = vector.multi_reduction <add>, %414, %cst_83 [1] : vector<2x8xf32> to vector<2xf32>
    %416 = vector.shape_cast %415 : vector<2xf32> to vector<2x1xf32>
    %417 = tpu.reciprocal %416 {approx = true} : vector<2x1xf32> -> vector<2x1xf32>
    %418 = vector.broadcast %417 : vector<2x1xf32> to vector<2x8xf32>
    %419 = arith.mulf %414, %418 : vector<2x8xf32>
    %420 = vector.shape_cast %419 : vector<2x8xf32> to vector<2x8x1xf32>
    %421 = vector.broadcast %420 : vector<2x8x1xf32> to vector<2x8x32xf32>
    %422 = arith.mulf %421, %370 : vector<2x8x32xf32>
    %cst_84 = arith.constant dense<0.000000e+00> : vector<2x32xf32>
    %423 = vector.multi_reduction <add>, %422, %cst_84 [1] : vector<2x8x32xf32> to vector<2x32xf32>
    %424 = vector.extract_strided_slice %386 {offsets = [0, 32], sizes = [2, 32], strides = [1, 1]} : vector<2x96xf32> to vector<2x32xf32>
    %425 = arith.truncf %423 : vector<2x32xf32> to vector<2x32xbf16>
    %cst_85 = arith.constant dense<0.000000e+00> : vector<2x32xf32>
    %426 = tpu.matmul %425, %375, %cst_85 {dimension_numbers = #tpu.dot_dimension_numbers<[1], [0], [0], [1], [0, 0, 1, 1], [], []>} : vector<2x32xbf16>, vector<32x32xbf16>, vector<2x32xf32> -> vector<2x32xf32>
    %427 = arith.addf %424, %426 : vector<2x32xf32>
    %cst_86 = arith.constant 0.000000e+00 : f32
    %428 = vector.broadcast %cst_86 : f32 to vector<2x32xf32>
    %429 = arith.maximumf %427, %428 : vector<2x32xf32>
    %430 = arith.truncf %429 : vector<2x32xf32> to vector<2x32xbf16>
    %cst_87 = arith.constant dense<0.000000e+00> : vector<2x16xf32>
    %431 = tpu.matmul %430, %373, %cst_87 {dimension_numbers = #tpu.dot_dimension_numbers<[1], [0], [0], [1], [0, 0, 1, 1], [], []>} : vector<2x32xbf16>, vector<32x16xbf16>, vector<2x16xf32> -> vector<2x16xf32>
    %432 = vector.shape_cast %431 : vector<2x16xf32> to vector<2x1x16xf32>
    %433 = vector.broadcast %432 : vector<2x1x16xf32> to vector<2x8x16xf32>
    %434 = arith.addf %380, %433 : vector<2x8x16xf32>
    %435 = math.tanh %434 : vector<2x8x16xf32>
    %436 = vector.shape_cast %376 : vector<1x16xf32> to vector<1x1x16xf32>
    %437 = vector.broadcast %436 : vector<1x1x16xf32> to vector<2x8x16xf32>
    %438 = arith.mulf %435, %437 : vector<2x8x16xf32>
    %cst_88 = arith.constant dense<0.000000e+00> : vector<2x8xf32>
    %439 = vector.multi_reduction <add>, %438, %cst_88 [2] : vector<2x8x16xf32> to vector<2x8xf32>
    %440 = arith.addf %439, %391 : vector<2x8xf32>
    %cst_89 = arith.constant dense<0xFF800000> : vector<2xf32>
    %441 = vector.multi_reduction <maximumf>, %440, %cst_89 [1] : vector<2x8xf32> to vector<2xf32>
    %442 = vector.shape_cast %441 : vector<2xf32> to vector<2x1xf32>
    %443 = vector.broadcast %442 : vector<2x1xf32> to vector<2x8xf32>
    %444 = arith.subf %440, %443 : vector<2x8xf32>
    %445 = math.exp %444 : vector<2x8xf32>
    %cst_90 = arith.constant dense<0.000000e+00> : vector<2xf32>
    %446 = vector.multi_reduction <add>, %445, %cst_90 [1] : vector<2x8xf32> to vector<2xf32>
    %447 = vector.shape_cast %446 : vector<2xf32> to vector<2x1xf32>
    %448 = tpu.reciprocal %447 {approx = true} : vector<2x1xf32> -> vector<2x1xf32>
    %449 = vector.broadcast %448 : vector<2x1xf32> to vector<2x8xf32>
    %450 = arith.mulf %445, %449 : vector<2x8xf32>
    %451 = vector.shape_cast %450 : vector<2x8xf32> to vector<2x8x1xf32>
    %452 = vector.broadcast %451 : vector<2x8x1xf32> to vector<2x8x32xf32>
    %453 = arith.mulf %452, %370 : vector<2x8x32xf32>
    %cst_91 = arith.constant dense<0.000000e+00> : vector<2x32xf32>
    %454 = vector.multi_reduction <add>, %453, %cst_91 [1] : vector<2x8x32xf32> to vector<2x32xf32>
    %455 = vector.extract_strided_slice %386 {offsets = [0, 64], sizes = [2, 32], strides = [1, 1]} : vector<2x96xf32> to vector<2x32xf32>
    %456 = arith.truncf %454 : vector<2x32xf32> to vector<2x32xbf16>
    %cst_92 = arith.constant dense<0.000000e+00> : vector<2x32xf32>
    %457 = tpu.matmul %456, %375, %cst_92 {dimension_numbers = #tpu.dot_dimension_numbers<[1], [0], [0], [1], [0, 0, 1, 1], [], []>} : vector<2x32xbf16>, vector<32x32xbf16>, vector<2x32xf32> -> vector<2x32xf32>
    %458 = arith.addf %455, %457 : vector<2x32xf32>
    %cst_93 = arith.constant 0.000000e+00 : f32
    %459 = vector.broadcast %cst_93 : f32 to vector<2x32xf32>
    %460 = arith.maximumf %458, %459 : vector<2x32xf32>
    %461 = arith.truncf %460 : vector<2x32xf32> to vector<2x32xbf16>
    %cst_94 = arith.constant dense<0.000000e+00> : vector<2x16xf32>
    %462 = tpu.matmul %461, %373, %cst_94 {dimension_numbers = #tpu.dot_dimension_numbers<[1], [0], [0], [1], [0, 0, 1, 1], [], []>} : vector<2x32xbf16>, vector<32x16xbf16>, vector<2x16xf32> -> vector<2x16xf32>
    %463 = vector.shape_cast %462 : vector<2x16xf32> to vector<2x1x16xf32>
    %464 = vector.broadcast %463 : vector<2x1x16xf32> to vector<2x8x16xf32>
    %465 = arith.addf %380, %464 : vector<2x8x16xf32>
    %466 = math.tanh %465 : vector<2x8x16xf32>
    %467 = vector.shape_cast %376 : vector<1x16xf32> to vector<1x1x16xf32>
    %468 = vector.broadcast %467 : vector<1x1x16xf32> to vector<2x8x16xf32>
    %469 = arith.mulf %466, %468 : vector<2x8x16xf32>
    %cst_95 = arith.constant dense<0.000000e+00> : vector<2x8xf32>
    %470 = vector.multi_reduction <add>, %469, %cst_95 [2] : vector<2x8x16xf32> to vector<2x8xf32>
    %471 = arith.addf %470, %391 : vector<2x8xf32>
    %cst_96 = arith.constant dense<0xFF800000> : vector<2xf32>
    %472 = vector.multi_reduction <maximumf>, %471, %cst_96 [1] : vector<2x8xf32> to vector<2xf32>
    %473 = vector.shape_cast %472 : vector<2xf32> to vector<2x1xf32>
    %474 = vector.broadcast %473 : vector<2x1xf32> to vector<2x8xf32>
    %475 = arith.subf %471, %474 : vector<2x8xf32>
    %476 = math.exp %475 : vector<2x8xf32>
    %cst_97 = arith.constant dense<0.000000e+00> : vector<2xf32>
    %477 = vector.multi_reduction <add>, %476, %cst_97 [1] : vector<2x8xf32> to vector<2xf32>
    %478 = vector.shape_cast %477 : vector<2xf32> to vector<2x1xf32>
    %479 = tpu.reciprocal %478 {approx = true} : vector<2x1xf32> -> vector<2x1xf32>
    %480 = vector.broadcast %479 : vector<2x1xf32> to vector<2x8xf32>
    %481 = arith.mulf %476, %480 : vector<2x8xf32>
    %482 = vector.shape_cast %481 : vector<2x8xf32> to vector<2x8x1xf32>
    %483 = vector.broadcast %482 : vector<2x8x1xf32> to vector<2x8x32xf32>
    %484 = arith.mulf %483, %370 : vector<2x8x32xf32>
    %cst_98 = arith.constant dense<0.000000e+00> : vector<2x32xf32>
    %485 = vector.multi_reduction <add>, %484, %cst_98 [1] : vector<2x8x32xf32> to vector<2x32xf32>
    %486 = tpu.concatenate %423, %454, %485 in 1 : vector<2x32xf32>, vector<2x32xf32>, vector<2x32xf32> -> vector<2x96xf32>
    %c0_99 = arith.constant 0 : index
    %c0_100 = arith.constant 0 : index
    %487 = vector.load %arg16[%c0_99, %c0_100] : memref<2x96xf32, #tpu.memory_space<vmem>>, vector<2x96xf32>
    tpu.vector_store %arg16[%c0_99, %c0_100], %486 {strides = array<i32>} : memref<2x96xf32, #tpu.memory_space<vmem>>, vector<2x96xf32>,
    %488 = tpu.concatenate %419, %450, %481 in 1 : vector<2x8xf32>, vector<2x8xf32>, vector<2x8xf32> -> vector<2x24xf32>
    %c0_101 = arith.constant 0 : index
    %c0_102 = arith.constant 0 : index
    %489 = vector.load %arg17[%c0_101, %c0_102] : memref<2x24xf32, #tpu.memory_space<vmem>>, vector<2x24xf32>
    tpu.vector_store %arg17[%c0_101, %c0_102], %488 {strides = array<i32>} : memref<2x24xf32, #tpu.memory_space<vmem>>, vector<2x24xf32>,
    return
  }
  func.func @transform_0(%arg0: i32) -> (i32, i32, i32) {
    %c0_i32 = arith.constant 0 : i32
    %c0_i32_0 = arith.constant 0 : i32
    %c0_i32_1 = arith.constant 0 : i32
    return %arg0, %c0_i32, %c0_i32_0 : i32, i32, i32
  }
  func.func @transform_1(%arg0: i32) -> (i32, i32) {
    %c0_i32 = arith.constant 0 : i32
    %c0_i32_0 = arith.constant 0 : i32
    return %arg0, %c0_i32 : i32, i32
  }
  func.func @transform_2(%arg0: i32) -> (i32, i32) {
    %c0_i32 = arith.constant 0 : i32
    %c0_i32_0 = arith.constant 0 : i32
    return %arg0, %c0_i32 : i32, i32
  }
  func.func @transform_3(%arg0: i32) -> (i32, i32) {
    %c0_i32 = arith.constant 0 : i32
    %c0_i32_0 = arith.constant 0 : i32
    return %arg0, %c0_i32 : i32, i32
  }
  func.func @transform_4(%arg0: i32) -> (i32, i32) {
    %c0_i32 = arith.constant 0 : i32
    %c0_i32_0 = arith.constant 0 : i32
    %c0_i32_1 = arith.constant 0 : i32
    return %c0_i32, %c0_i32_0 : i32, i32
  }
  func.func @transform_5(%arg0: i32) -> (i32, i32) {
    %c0_i32 = arith.constant 0 : i32
    %c0_i32_0 = arith.constant 0 : i32
    %c0_i32_1 = arith.constant 0 : i32
    return %c0_i32, %c0_i32_0 : i32, i32
  }
  func.func @transform_6(%arg0: i32) -> (i32, i32) {
    %c0_i32 = arith.constant 0 : i32
    %c0_i32_0 = arith.constant 0 : i32
    %c0_i32_1 = arith.constant 0 : i32
    return %c0_i32, %c0_i32_0 : i32, i32
  }
  func.func @transform_7(%arg0: i32) -> (i32, i32) {
    %c0_i32 = arith.constant 0 : i32
    %c0_i32_0 = arith.constant 0 : i32
    %c0_i32_1 = arith.constant 0 : i32
    return %c0_i32, %c0_i32_0 : i32, i32
  }
  func.func @transform_8(%arg0: i32) -> (i32, i32) {
    %c0_i32 = arith.constant 0 : i32
    %c0_i32_0 = arith.constant 0 : i32
    %c0_i32_1 = arith.constant 0 : i32
    return %c0_i32, %c0_i32_0 : i32, i32
  }
  func.func @transform_9(%arg0: i32) -> (i32, i32) {
    %c0_i32 = arith.constant 0 : i32
    %c0_i32_0 = arith.constant 0 : i32
    %c0_i32_1 = arith.constant 0 : i32
    return %c0_i32, %c0_i32_0 : i32, i32
  }
  func.func @transform_10(%arg0: i32) -> (i32, i32) {
    %c0_i32 = arith.constant 0 : i32
    %c0_i32_0 = arith.constant 0 : i32
    %c0_i32_1 = arith.constant 0 : i32
    return %c0_i32, %c0_i32_0 : i32, i32
  }
  func.func @transform_11(%arg0: i32) -> (i32, i32) {
    %c0_i32 = arith.constant 0 : i32
    %c0_i32_0 = arith.constant 0 : i32
    %c0_i32_1 = arith.constant 0 : i32
    return %c0_i32, %c0_i32_0 : i32, i32
  }
  func.func @transform_12(%arg0: i32) -> (i32, i32) {
    %c0_i32 = arith.constant 0 : i32
    %c0_i32_0 = arith.constant 0 : i32
    %c0_i32_1 = arith.constant 0 : i32
    return %c0_i32, %c0_i32_0 : i32, i32
  }
  func.func @transform_13(%arg0: i32) -> (i32, i32) {
    %c0_i32 = arith.constant 0 : i32
    %c0_i32_0 = arith.constant 0 : i32
    return %arg0, %c0_i32 : i32, i32
  }
  func.func @transform_14(%arg0: i32) -> (i32, i32) {
    %c0_i32 = arith.constant 0 : i32
    %c0_i32_0 = arith.constant 0 : i32
    return %arg0, %c0_i32 : i32, i32
  }
  func.func @transform_15(%arg0: i32) -> (i32, i32) {
    %c0_i32 = arith.constant 0 : i32
    %c0_i32_0 = arith.constant 0 : i32
    return %arg0, %c0_i32 : i32, i32
  }
  func.func @transform_16(%arg0: i32) -> (i32, i32) {
    %c0_i32 = arith.constant 0 : i32
    %c0_i32_0 = arith.constant 0 : i32
    return %arg0, %c0_i32 : i32, i32
  }
}

</mosaic_0001>

<llo_original>
// kernel: _lambda_.1
$region0: #{_lambda_.1}
  #allocation0 [shape = 'u32[]', space=smem, size = 0x4, offset = 0x4, fixed_abs, tag = 'smem constant byte address 0x4 - core index']
  #allocation1 [shape = 'u32[144,128]{1,0:T(1,128)}', space=vmem, size = 0x12000, scoped, tag = 'internal scratch']
  %s0 = inlined_call_operand.hbm [shape: f32[2,8,32], index: 0, kind: input, shape index: {}]
  %s1 = inlined_call_operand.vmem [shape: f32[2,8], index: 1, kind: input, shape index: {}]
  %s2 = inlined_call_operand.vmem [shape: f32[2,8], index: 2, kind: input, shape index: {}]
  %s3 = inlined_call_operand.vmem [shape: f32[2,8], index: 3, kind: input, shape index: {}]
  %s4 = inlined_call_operand.hbm [shape: bf16[32,256], index: 4, kind: input, shape index: {}]
  %s5 = inlined_call_operand.vmem [shape: f32[1,128], index: 5, kind: input, shape index: {}]
  %s6 = inlined_call_operand.hbm [shape: bf16[32,128], index: 6, kind: input, shape index: {}]
  %s7 = inlined_call_operand.vmem [shape: bf16[32,96], index: 7, kind: input, shape index: {}]
  %s8 = inlined_call_operand.vmem [shape: f32[1,96], index: 8, kind: input, shape index: {}]
  %s9 = inlined_call_operand.hbm [shape: bf16[32,32], index: 9, kind: input, shape index: {}]
  %s10 = inlined_call_operand.hbm [shape: bf16[32,16], index: 10, kind: input, shape index: {}]
  %s11 = inlined_call_operand.hbm [shape: bf16[32,16], index: 11, kind: input, shape index: {}]
  %s12 = inlined_call_operand.vmem [shape: f32[1,16], index: 12, kind: input, shape index: {}]
  %s13 = inlined_call_operand.vmem [shape: f32[2,256], index: 13, kind: output, shape index: {0}]
  %s14 = inlined_call_operand.hbm [shape: f32[2,32], index: 14, kind: output, shape index: {1}]
  %s15 = inlined_call_operand.vmem [shape: f32[2,96], index: 15, kind: output, shape index: {2}]
  %s16 = inlined_call_operand.vmem [shape: f32[2,24], index: 16, kind: output, shape index: {3}]
  %17 = xla_tuple %s13, %s14, %s15, %s16
  %s18 = sld [smem:[#allocation0]]
  $region110: #{_lambda_.1} parent=0
    _
  %s20 = ssub.s32 1, %s18
  %s21 = scalar_select 0, %s20, %s18
  $region1: #{_lambda_.1} parent=0
    #allocation2 [shape = 'u8[8192]{0}', space=vmem, size = 0x2000, scoped, tag = 'input window, operand 0, single buffered']
    #allocation3 [shape = 's32[1]{0}', space=sflag, size = 0x4, scoped, tag = 'scoped memory for _lambda_.1']
    #allocation4 [shape = 's32[1]{0}', space=sflag, size = 0x4, scoped, tag = 'scoped memory for _lambda_.1']
    #allocation5 [shape = 'u8[16384]{0}', space=vmem, size = 0x4000, scoped, tag = 'input window, operand 4, single buffered']
    #allocation6 [shape = 's32[1]{0}', space=sflag, size = 0x4, scoped, tag = 'scoped memory for _lambda_.1']
    #allocation7 [shape = 'u8[8192]{0}', space=vmem, size = 0x2000, scoped, tag = 'input window, operand 6, single buffered']
    #allocation8 [shape = 'u8[8192]{0}', space=vmem, size = 0x2000, scoped, tag = 'input window, operand 9, single buffered']
    #allocation9 [shape = 's32[1]{0}', space=sflag, size = 0x4, scoped, tag = 'scoped memory for _lambda_.1']
    #allocation10 [shape = 'u8[8192]{0}', space=vmem, size = 0x2000, scoped, tag = 'input window, operand 10, single buffered']
    #allocation11 [shape = 'u8[8192]{0}', space=vmem, size = 0x2000, scoped, tag = 'input window, operand 11, single buffered']
    #allocation12 [shape = 's32[1]{0}', space=sflag, size = 0x4, scoped, tag = 'scoped memory for _lambda_.1']
    #allocation13 [shape = 'u8[1024]{0}', space=vmem, size = 0x400, scoped, tag = 'output window, operand 1, single buffered']
    %22 = vsyncpa [#allocation3], 0
    %23 = vsyncpa [#allocation6], 0
    %24 = vsyncpa [#allocation9], 0
    %25 = vsyncpa [#allocation12], 0
    %26 = vsyncpa [#allocation4], 0
    // Predicated region
    $region2: #{_lambda_.1} parent=1 // pred_check
      _
    $region3: #{_lambda_.1} parent=1 // pred_check_branch
      %28 = sbr.rel (0) target = $region5
    $region4: #{_lambda_.1} parent=1 // pred_region
      %s30 = ssub.s32 256, 256
      %31 = vsyncadd [#allocation3], %s30
      %s32 = sshll.u32 [#allocation2], 4
      %s33 = int_to_ptr.vmem [resolvable:$true] %s32
      %38 = dma.hbm_to_vmem [thread:$0]  %s0, 256, %s33, [#allocation3], 128, 128, 8
    $region5: #{_lambda_.1} parent=1 // pred_fallthru
      _
    // Predicated region
    $region6: #{_lambda_.1} parent=1 // pred_check
      _
    $region7: #{_lambda_.1} parent=1 // pred_check_branch
      %40 = sbr.rel (0) target = $region9
    $region8: #{_lambda_.1} parent=1 // pred_region
      _
    $region9: #{_lambda_.1} parent=1 // pred_fallthru
      _
    // Predicated region
    $region10: #{_lambda_.1} parent=1 // pred_check
      _
    $region11: #{_lambda_.1} parent=1 // pred_check_branch
      %42 = sbr.rel (0) target = $region13
    $region12: #{_lambda_.1} parent=1 // pred_region
      _
    $region13: #{_lambda_.1} parent=1 // pred_fallthru
      _
    // Predicated region
    $region14: #{_lambda_.1} parent=1 // pred_check
      _
    $region15: #{_lambda_.1} parent=1 // pred_check_branch
      %44 = sbr.rel (0) target = $region17
    $region16: #{_lambda_.1} parent=1 // pred_region
      _
    $region17: #{_lambda_.1} parent=1 // pred_fallthru
      _
    // Predicated region
    $region18: #{_lambda_.1} parent=1 // pred_check
      _
    $region19: #{_lambda_.1} parent=1 // pred_check_branch
      %46 = sbr.rel (0) target = $region21
    $region20: #{_lambda_.1} parent=1 // pred_region
      %s48 = ssub.s32 512, 512
      %49 = vsyncadd [#allocation6], %s48
      %s50 = sshll.u32 [#allocation5], 4
      %s51 = int_to_ptr.vmem [resolvable:$true] %s50
      %56 = dma.hbm_to_vmem [thread:$0]  %s4, 512, %s51, [#allocation6], 128, 128, 8
    $region21: #{_lambda_.1} parent=1 // pred_fallthru
      _
    // Predicated region
    $region22: #{_lambda_.1} parent=1 // pred_check
      _
    $region23: #{_lambda_.1} parent=1 // pred_check_branch
      %58 = sbr.rel (0) target = $region25
    $region24: #{_lambda_.1} parent=1 // pred_region
      _
    $region25: #{_lambda_.1} parent=1 // pred_fallthru
      _
    // Predicated region
    $region26: #{_lambda_.1} parent=1 // pred_check
      _
    $region27: #{_lambda_.1} parent=1 // pred_check_branch
      %60 = sbr.rel (0) target = $region29
    $region28: #{_lambda_.1} parent=1 // pred_region
      %s62 = ssub.s32 256, 256
      %63 = vsyncadd [#allocation6], %s62
      %s64 = sshll.u32 [#allocation7], 4
      %s65 = int_to_ptr.vmem [resolvable:$true] %s64
      %70 = dma.hbm_to_vmem [thread:$0]  %s6, 256, %s65, [#allocation6], 64, 64, 4
    $region29: #{_lambda_.1} parent=1 // pred_fallthru
      _
    // Predicated region
    $region30: #{_lambda_.1} parent=1 // pred_check
      _
    $region31: #{_lambda_.1} parent=1 // pred_check_branch
      %72 = sbr.rel (0) target = $region33
    $region32: #{_lambda_.1} parent=1 // pred_region
      _
    $region33: #{_lambda_.1} parent=1 // pred_fallthru
      _
    // Predicated region
    $region34: #{_lambda_.1} parent=1 // pred_check
      _
    $region35: #{_lambda_.1} parent=1 // pred_check_branch
      %74 = sbr.rel (0) target = $region37
    $region36: #{_lambda_.1} parent=1 // pred_region
      _
    $region37: #{_lambda_.1} parent=1 // pred_fallthru
      _
    // Predicated region
    $region38: #{_lambda_.1} parent=1 // pred_check
      _
    $region39: #{_lambda_.1} parent=1 // pred_check_branch
      %76 = sbr.rel (0) target = $region41
    $region40: #{_lambda_.1} parent=1 // pred_region
      %s78 = ssub.s32 256, 256
      %79 = vsyncadd [#allocation9], %s78
      %s80 = sshll.u32 [#allocation8], 4
      %s81 = int_to_ptr.vmem [resolvable:$true] %s80
      %86 = dma.hbm_to_vmem [thread:$0]  %s9, 256, %s81, [#allocation9], 64, 64, 4
    $region41: #{_lambda_.1} parent=1 // pred_fallthru
      _
    // Predicated region
    $region42: #{_lambda_.1} parent=1 // pred_check
      _
    $region43: #{_lambda_.1} parent=1 // pred_check_branch
      %88 = sbr.rel (0) target = $region45
    $region44: #{_lambda_.1} parent=1 // pred_region
      %s90 = ssub.s32 256, 256
      %91 = vsyncadd [#allocation9], %s90
      %s92 = sshll.u32 [#allocation10], 4
      %s93 = int_to_ptr.vmem [resolvable:$true] %s92
      %98 = dma.hbm_to_vmem [thread:$0]  %s10, 256, %s93, [#allocation9], 64, 64, 4
    $region45: #{_lambda_.1} parent=1 // pred_fallthru
      _
    // Predicated region
    $region46: #{_lambda_.1} parent=1 // pred_check
      _
    $region47: #{_lambda_.1} parent=1 // pred_check_branch
      %100 = sbr.rel (0) target = $region49
    $region48: #{_lambda_.1} parent=1 // pred_region
      %s102 = ssub.s32 256, 256
      %103 = vsyncadd [#allocation12], %s102
      %s104 = sshll.u32 [#allocation11], 4
      %s105 = int_to_ptr.vmem [resolvable:$true] %s104
      %110 = dma.hbm_to_vmem [thread:$0]  %s11, 256, %s105, [#allocation12], 64, 64, 4
    $region49: #{_lambda_.1} parent=1 // pred_fallthru
      _
    // Predicated region
    $region50: #{_lambda_.1} parent=1 // pred_check
      _
    $region51: #{_lambda_.1} parent=1 // pred_check_branch
      %112 = sbr.rel (0) target = $region53
    $region52: #{_lambda_.1} parent=1 // pred_region
      _
    $region53: #{_lambda_.1} parent=1 // pred_fallthru
      _
    // Predicated region
    $region54: #{_lambda_.1} parent=1 // pred_check
      _
    $region55: #{_lambda_.1} parent=1 // pred_check_branch
      %114 = sbr.rel (0) target = $region57
    $region56: #{_lambda_.1} parent=1 // pred_region
      %115 = dma.done [#allocation3], 256
    $region57: #{_lambda_.1} parent=1 // pred_fallthru
      _
    // Predicated region
    $region58: #{_lambda_.1} parent=1 // pred_check
      _
    $region59: #{_lambda_.1} parent=1 // pred_check_branch
      %117 = sbr.rel (0) target = $region61
    $region60: #{_lambda_.1} parent=1 // pred_region
      %118 = dma.done [#allocation6], 512
    $region61: #{_lambda_.1} parent=1 // pred_fallthru
      _
    // Predicated region
    $region62: #{_lambda_.1} parent=1 // pred_check
      _
    $region63: #{_lambda_.1} parent=1 // pred_check_branch
      %120 = sbr.rel (0) target = $region65
    $region64: #{_lambda_.1} parent=1 // pred_region
      %121 = dma.done [#allocation6], 256
    $region65: #{_lambda_.1} parent=1 // pred_fallthru
      _
    // Predicated region
    $region66: #{_lambda_.1} parent=1 // pred_check
      _
    $region67: #{_lambda_.1} parent=1 // pred_check_branch
      %123 = sbr.rel (0) target = $region69
    $region68: #{_lambda_.1} parent=1 // pred_region
      %124 = dma.done [#allocation9], 256
    $region69: #{_lambda_.1} parent=1 // pred_fallthru
      _
    // Predicated region
    $region70: #{_lambda_.1} parent=1 // pred_check
      _
    $region71: #{_lambda_.1} parent=1 // pred_check_branch
      %126 = sbr.rel (0) target = $region73
    $region72: #{_lambda_.1} parent=1 // pred_region
      %127 = dma.done [#allocation9], 256
    $region73: #{_lambda_.1} parent=1 // pred_fallthru
      _
    // Predicated region
    $region74: #{_lambda_.1} parent=1 // pred_check
      _
    $region75: #{_lambda_.1} parent=1 // pred_check_branch
      %129 = sbr.rel (0) target = $region77
    $region76: #{_lambda_.1} parent=1 // pred_region
      %130 = dma.done [#allocation12], 256
    $region77: #{_lambda_.1} parent=1 // pred_fallthru
      _
    %v132 = vld [vmem:[#allocation2] sm:$0xff]
    %v133 = vld [vmem:[#allocation2 + $0x8] sm:$0xff]
    %v134 = vld [vmem:[#allocation7] sm:$0xf]
    %v135 = vld [vmem:[#allocation7 + $0x4] sm:$0xf]
    %v136 = vld [vmem:[#allocation7 + $0x8] sm:$0xf]
    %v137 = vld [vmem:[#allocation7 + $0xc] sm:$0xf]
    %v138 = vld [vmem:[%s1] sm:$0x3]
    %v139 = vlaneseq
    %v140 = vshrl.u32 %v139, 7
    %v141 = vsub.s32 0, %v140
    %v142 = vrot.slane %v138, %v141
    %144 = vbcast.lane.b32.xlu0 %v142, 256
    %v145 = vpop.permute.xlu0 %144
    %v146 = vlaneseq
    %v147 = vshrl.u32 %v146, 7
    %v148 = vsub.s32 1, %v147
    %v149 = vrot.slane %v138, %v148
    %151 = vbcast.lane.b32.xlu0 %v149, 256
    %v152 = vpop.permute.xlu0 %151
    %v153 = vld [vmem:[%s2] sm:$0x3]
    %v154 = vlaneseq
    %v155 = vshrl.u32 %v154, 7
    %v156 = vsub.s32 0, %v155
    %v157 = vrot.slane %v153, %v156
    %159 = vbcast.lane.b32.xlu0 %v157, 256
    %v160 = vpop.permute.xlu0 %159
    %v161 = vlaneseq
    %v162 = vshrl.u32 %v161, 7
    %v163 = vsub.s32 1, %v162
    %v164 = vrot.slane %v153, %v163
    %166 = vbcast.lane.b32.xlu0 %v164, 256
    %v167 = vpop.permute.xlu0 %166
    %vm168 = vcmask 130048
    %v169 = vsel %vm168, %v145, %v160
    %v170 = vsel %vm168, %v152, %v167
    %vm171 = vcmp.gt.f32.partialorder %v169, 0.0
    %vm172 = vcmp.gt.f32.partialorder %v170, 0.0
    %v173 = vpack.c.bf16 %v133, %v132
    %v174 = vld [vmem:[#allocation5] sm:$0xff]
    %v175 = vld [vmem:[#allocation5 + $0x8] sm:$0xff]
    %v176 = vld [vmem:[#allocation5 + $0x10] sm:$0xff]
    %v177 = vld [vmem:[#allocation5 + $0x18] sm:$0xff]
    %v182 = vunpack.c.l.b16 %v174
    %v183 = vunpack.c.h.b16 %v174
    %v184 = vunpack.c.l.b16 %v175
    %v185 = vunpack.c.h.b16 %v175
    %v186 = vunpack.c.l.b16 %v176
    %v187 = vunpack.c.h.b16 %v176
    %v188 = vunpack.c.l.b16 %v177
    %v189 = vunpack.c.h.b16 %v177
    %v190 = vpack.c.b16 %v184, %v182
    %v191 = vpack.c.b16 %v185, %v183
    %v192 = vpack.c.b16 %v188, %v186
    %v193 = vpack.c.b16 %v189, %v187
    %vm198 = vcmask 261120
    %v200 = vsel %vm198, %v173, 0
    %202 = vmatprep.subr.bf16.mxu0 0
    %203 = vmatpush1.bf16.msra.mxu0 0
    %204 = vmatprep.subr.bf16.mxu0 0
    %205 = vmatpush1.bf16.msra.mxu0 0
    %206 = vmatprep.subr.bf16.mxu0 0
    %207 = vmatpush1.bf16.msra.mxu0 0
    %208 = vmatprep.subr.bf16.mxu0 0
    %209 = vmatpush1.bf16.msra.mxu0 0
    %210 = vmatprep.subr.bf16.mxu0 0
    %211 = vmatpush1.bf16.msra.mxu0 0
    %212 = vmatprep.subr.bf16.mxu0 0
    %213 = vmatpush1.bf16.msra.mxu0 0
    %214 = vmatprep.subr.bf16.mxu0 %v193
    %215 = vmatpush1.bf16.msra.mxu0 %v192
    %216 = vmatprep.subr.bf16.mxu0 %v191
    %217 = vmatpush1.bf16.msra.mxu0 %v190
    %218 = vmatprep.subr.bf16.mxu0 0
    %219 = vmatpush2.bf16.msra.mxu0 0
    %220 = vmatprep.subr.bf16.mxu0 0
    %221 = vmatpush2.bf16.msra.mxu0 0
    %222 = vmatprep.subr.bf16.mxu0 0
    %223 = vmatpush2.bf16.msra.mxu0 0
    %224 = vmatprep.subr.bf16.mxu0 0
    %225 = vmatpush2.bf16.msra.mxu0 0
    %226 = vmatprep.subr.bf16.mxu0 0
    %227 = vmatpush2.bf16.msra.mxu0 0
    %228 = vmatprep.subr.bf16.mxu0 0
    %229 = vmatpush2.bf16.msra.mxu0 0
    %230 = vmatprep.subr.bf16.mxu0 0
    %231 = vmatpush2.bf16.msra.mxu0 0
    %232 = vmatprep.subr.bf16.mxu0 0
    %233 = vmatpush2.bf16.msra.mxu0 0
    %234 = vmatprep.mubr.bf16.mxu0 0
    %235 = vmatmul.mubr.bf16.gmra.mxu0 %v200
    %v236 = vpop.f32.mrf.mxu0
    %v237 = vadd.f32 0.0, %v236
    %v238 = vpop.f32.mrf.mxu0
    %v239 = vadd.f32 0.0, %v238
    %v240 = vpop.f32.mrf.mxu0
    %v241 = vadd.f32 0.0, %v240
    %v242 = vpop.f32.mrf.mxu0
    %v243 = vadd.f32 0.0, %v242
    %244 = vdwg.mxu0
    %v245 = vld [vmem:[%s5] sm:$0x1]
    %v247 = vlaneseq
    %v248 = vshrl.u32 %v247, 7
    %v249 = vsub.s32 0, %v248
    %v250 = vrot.slane %v245, %v249
    %v252 = vadd.f32 %v237, %v250
    %v253 = vadd.f32 %v241, %v250
    %v256 = vrot.slane %v239, 7
    %v257 = vrot.slane %v243, 7
    %v260 = vadd.f32 %v252, %v256
    %v261 = vadd.f32 %v253, %v257
    %v266 = vunpack.c.l.b16 %v134
    %v267 = vunpack.c.l.b16 %v135
    %v268 = vunpack.c.l.b16 %v136
    %v269 = vunpack.c.l.b16 %v137
    %v270 = vpack.c.b16 %v267, %v266
    %v271 = vpack.c.b16 %v269, %v268
    %v276 = vrot.slane %v261, 7
    %vm277 = vcmask 1041409
    %v278 = vsel %vm277, %v276, %v260
    %v281 = vsel %vm198, 0, 0
    %283 = vmatprep.subr.bf16.mxu0 0
    %284 = vmatpush1.bf16.msra.mxu0 0
    %285 = vmatprep.subr.bf16.mxu0 0
    %286 = vmatpush1.bf16.msra.mxu0 0
    %287 = vmatprep.subr.bf16.mxu0 0
    %288 = vmatpush1.bf16.msra.mxu0 0
    %289 = vmatprep.subr.bf16.mxu0 0
    %290 = vmatpush1.bf16.msra.mxu0 0
    %291 = vmatprep.subr.bf16.mxu0 0
    %292 = vmatpush1.bf16.msra.mxu0 0
    %293 = vmatprep.subr.bf16.mxu0 0
    %294 = vmatpush1.bf16.msra.mxu0 0
    %295 = vmatprep.subr.bf16.mxu0 0
    %296 = vmatpush1.bf16.msra.mxu0 %v271
    %297 = vmatprep.subr.bf16.mxu0 0
    %298 = vmatpush1.bf16.msra.mxu0 %v270
    %299 = vmatprep.subr.bf16.mxu0 0
    %300 = vmatpush2.bf16.msra.mxu0 0
    %301 = vmatprep.subr.bf16.mxu0 0
    %302 = vmatpush2.bf16.msra.mxu0 0
    %303 = vmatprep.subr.bf16.mxu0 0
    %304 = vmatpush2.bf16.msra.mxu0 0
    %305 = vmatprep.subr.bf16.mxu0 0
    %306 = vmatpush2.bf16.msra.mxu0 0
    %307 = vmatprep.subr.bf16.mxu0 0
    %308 = vmatpush2.bf16.msra.mxu0 0
    %309 = vmatprep.subr.bf16.mxu0 0
    %310 = vmatpush2.bf16.msra.mxu0 0
    %311 = vmatprep.subr.bf16.mxu0 0
    %312 = vmatpush2.bf16.msra.mxu0 0
    %313 = vmatprep.subr.bf16.mxu0 0
    %314 = vmatpush2.bf16.msra.mxu0 0
    %315 = vmatprep.mubr.bf16.mxu0 0
    %316 = vmatmul.mubr.bf16.gmra.mxu0 %v281
    %v317 = vpop.f32.mrf.mxu0
    %v318 = vadd.f32 %v278, %v317
    %v319 = vpop.f32.mrf.mxu0
    %v320 = vpop.f32.mrf.mxu0
    %v321 = vpop.f32.mrf.mxu0
    %322 = vdwg.mxu0
    %v323 = vxor.u32 %v318, 2147483648
    %v324 = vmul.f32 %v323, 1.442695
    %v325 = vpow.pop %v324
    %v326 = vadd.f32 %v325, 1.0
    %v327 = vrcp.pop %v326
    %v328 = vmul.f32 1.0, %v327
    %v329 = vtanh.pop %v318
    %v330 = vmul.f32 %v328, 0.0
    %332 = vrot.lane.b32.xlu0 %v329, 64
    %v333 = vpop.permute.xlu0 %332
    %v335 = vmul.f32 %v328, %v333
    %337 = vrot.lane.b32.xlu0 %v335, 32
    %v338 = vpop.permute.xlu0 %337
    %v340 = vadd.f32 %v330, %v338
    %v341 = vtanh.pop %v340
    %343 = vrot.lane.b32.xlu0 %v341, 64
    %v344 = vpop.permute.xlu0 %343
    %v346 = vmul.f32 %v328, %v344
    %v348 = vrot.slane %v346, 1
    %349 = vrot.lane.b32.xlu0 %v346, 32
    %v350 = vpop.permute.xlu0 %349
    %351 = vrot.lane.b32.xlu0 %v348, 32
    %v352 = vpop.permute.xlu0 %351
    %v355 = vsel %vm171, %v350, 0.0
    %v356 = vsel %vm172, %v352, 0.0
    %v358 = vrot.slane %v340, 1
    %359 = vrot.lane.b32.xlu0 %v340, 96
    %v360 = vpop.permute.xlu0 %359
    %361 = vrot.lane.b32.xlu0 %v358, 96
    %v362 = vpop.permute.xlu0 %361
    %v365 = vsel %vm171, %v360, 0.0
    %v366 = vsel %vm172, %v362, 0.0
    %v367 = vrot.slane %v239, 5
    %v368 = vrot.slane %v243, 5
    %v371 = vadd.f32 %v252, %v367
    %v372 = vadd.f32 %v253, %v368
    %v373 = vpack.c.bf16 %v355, %v355
    %v374 = vpack.c.bf16 %v356, %v356
    %v377 = vunpack.c.l.b16 %v373
    %v378 = vunpack.c.l.b16 %v374
    %v379 = vrot.slane %v378, 7
    %v380 = vsel %vm277, %v379, %v377
    %v381 = vpack.c.b16 %v380, %v380
    %v384 = vrot.slane %v371, 1
    %v385 = vsel %vm277, %v372, %v384
    %v388 = vsel %vm198, %v381, 0
    %390 = vmatprep.subr.bf16.mxu0 0
    %391 = vmatpush1.bf16.msra.mxu0 0
    %392 = vmatprep.subr.bf16.mxu0 0
    %393 = vmatpush1.bf16.msra.mxu0 0
    %394 = vmatprep.subr.bf16.mxu0 0
    %395 = vmatpush1.bf16.msra.mxu0 0
    %396 = vmatprep.subr.bf16.mxu0 0
    %397 = vmatpush1.bf16.msra.mxu0 0
    %398 = vmatprep.subr.bf16.mxu0 0
    %399 = vmatpush1.bf16.msra.mxu0 0
    %400 = vmatprep.subr.bf16.mxu0 0
    %401 = vmatpush1.bf16.msra.mxu0 0
    %402 = vmatprep.subr.bf16.mxu0 0
    %403 = vmatpush1.bf16.msra.mxu0 %v271
    %404 = vmatprep.subr.bf16.mxu0 0
    %405 = vmatpush1.bf16.msra.mxu0 %v270
    %406 = vmatprep.subr.bf16.mxu0 0
    %407 = vmatpush2.bf16.msra.mxu0 0
    %408 = vmatprep.subr.bf16.mxu0 0
    %409 = vmatpush2.bf16.msra.mxu0 0
    %410 = vmatprep.subr.bf16.mxu0 0
    %411 = vmatpush2.bf16.msra.mxu0 0
    %412 = vmatprep.subr.bf16.mxu0 0
    %413 = vmatpush2.bf16.msra.mxu0 0
    %414 = vmatprep.subr.bf16.mxu0 0
    %415 = vmatpush2.bf16.msra.mxu0 0
    %416 = vmatprep.subr.bf16.mxu0 0
    %417 = vmatpush2.bf16.msra.mxu0 0
    %418 = vmatprep.subr.bf16.mxu0 0
    %419 = vmatpush2.bf16.msra.mxu0 0
    %420 = vmatprep.subr.bf16.mxu0 0
    %421 = vmatpush2.bf16.msra.mxu0 0
    %422 = vmatprep.mubr.bf16.mxu0 0
    %423 = vmatmul.mubr.bf16.gmra.mxu0 %v388
    %v424 = vpop.f32.mrf.mxu0
    %v425 = vadd.f32 %v385, %v424
    %v426 = vpop.f32.mrf.mxu0
    %v427 = vpop.f32.mrf.mxu0
    %v428 = vpop.f32.mrf.mxu0
    %429 = vdwg.mxu0
    %v430 = vxor.u32 %v425, 2147483648
    %v431 = vmul.f32 %v430, 1.442695
    %v432 = vpow.pop %v431
    %v433 = vadd.f32 %v432, 1.0
    %v434 = vrcp.pop %v433
    %v435 = vmul.f32 1.0, %v434
    %v436 = vtanh.pop %v425
    %v439 = vrot.slane %v366, 7
    %v440 = vsel %vm277, %v439, %v365
    %441 = vrot.lane.b32.xlu0 %v440, 32
    %v442 = vpop.permute.xlu0 %441
    %v444 = vmul.f32 %v435, %v442
    %446 = vrot.lane.b32.xlu0 %v436, 64
    %v447 = vpop.permute.xlu0 %446
    %v449 = vmul.f32 %v435, %v447
    %451 = vrot.lane.b32.xlu0 %v449, 32
    %v452 = vpop.permute.xlu0 %451
    %v454 = vadd.f32 %v444, %v452
    %v455 = vtanh.pop %v454
    %457 = vrot.lane.b32.xlu0 %v455, 64
    %v458 = vpop.permute.xlu0 %457
    %v460 = vmul.f32 %v435, %v458
    %v462 = vrot.slane %v460, 7
    %463 = vrot.lane.b32.xlu0 %v462, 32
    %v464 = vpop.permute.xlu0 %463
    %465 = vrot.lane.b32.xlu0 %v460, 32
    %v466 = vpop.permute.xlu0 %465
    %v471 = vrot.slane %v355, 7
    %v472 = vrot.slane %v356, 7
    %v475 = vsel %vm171, %v464, %v471
    %v476 = vsel %vm172, %v466, %v472
    %v478 = vrot.slane %v454, 7
    %479 = vrot.lane.b32.xlu0 %v478, 96
    %v480 = vpop.permute.xlu0 %479
    %481 = vrot.lane.b32.xlu0 %v454, 96
    %v482 = vpop.permute.xlu0 %481
    %v485 = vrot.slane %v365, 7
    %v488 = vsel %vm171, %v480, %v485
    %v489 = vsel %vm172, %v482, %v439
    %v490 = vsel %vm171, %v464, 0.0
    %v491 = vsel %vm172, %v466, 0.0
    %v492 = vrot.slane %v239, 3
    %v493 = vrot.slane %v243, 3
    %v496 = vadd.f32 %v252, %v492
    %v497 = vadd.f32 %v253, %v493
    %v498 = vpack.c.bf16 %v475, %v475
    %v499 = vpack.c.bf16 %v476, %v476
    %v502 = vunpack.c.l.b16 %v498
    %v503 = vunpack.c.l.b16 %v499
    %v504 = vrot.slane %v502, 1
    %v505 = vsel %vm277, %v503, %v504
    %v506 = vpack.c.b16 %v505, %v505
    %v509 = vrot.slane %v496, 2
    %v510 = vrot.slane %v497, 1
    %v511 = vsel %vm277, %v510, %v509
    %v514 = vsel %vm198, %v506, 0
    %516 = vmatprep.subr.bf16.mxu0 0
    %517 = vmatpush1.bf16.msra.mxu0 0
    %518 = vmatprep.subr.bf16.mxu0 0
    %519 = vmatpush1.bf16.msra.mxu0 0
    %520 = vmatprep.subr.bf16.mxu0 0
    %521 = vmatpush1.bf16.msra.mxu0 0
    %522 = vmatprep.subr.bf16.mxu0 0
    %523 = vmatpush1.bf16.msra.mxu0 0
    %524 = vmatprep.subr.bf16.mxu0 0
    %525 = vmatpush1.bf16.msra.mxu0 0
    %526 = vmatprep.subr.bf16.mxu0 0
    %527 = vmatpush1.bf16.msra.mxu0 0
    %528 = vmatprep.subr.bf16.mxu0 0
    %529 = vmatpush1.bf16.msra.mxu0 %v271
    %530 = vmatprep.subr.bf16.mxu0 0
    %531 = vmatpush1.bf16.msra.mxu0 %v270
    %532 = vmatprep.subr.bf16.mxu0 0
    %533 = vmatpush2.bf16.msra.mxu0 0
    %534 = vmatprep.subr.bf16.mxu0 0
    %535 = vmatpush2.bf16.msra.mxu0 0
    %536 = vmatprep.subr.bf16.mxu0 0
    %537 = vmatpush2.bf16.msra.mxu0 0
    %538 = vmatprep.subr.bf16.mxu0 0
    %539 = vmatpush2.bf16.msra.mxu0 0
    %540 = vmatprep.subr.bf16.mxu0 0
    %541 = vmatpush2.bf16.msra.mxu0 0
    %542 = vmatprep.subr.bf16.mxu0 0
    %543 = vmatpush2.bf16.msra.mxu0 0
    %544 = vmatprep.subr.bf16.mxu0 0
    %545 = vmatpush2.bf16.msra.mxu0 0
    %546 = vmatprep.subr.bf16.mxu0 0
    %547 = vmatpush2.bf16.msra.mxu0 0
    %548 = vmatprep.mubr.bf16.mxu0 0
    %549 = vmatmul.mubr.bf16.gmra.mxu0 %v514
    %v550 = vpop.f32.mrf.mxu0
    %v551 = vadd.f32 %v511, %v550
    %v552 = vpop.f32.mrf.mxu0
    %v553 = vpop.f32.mrf.mxu0
    %v554 = vpop.f32.mrf.mxu0
    %555 = vdwg.mxu0
    %v556 = vxor.u32 %v551, 2147483648
    %v557 = vmul.f32 %v556, 1.442695
    %v558 = vpow.pop %v557
    %v559 = vadd.f32 %v558, 1.0
    %v560 = vrcp.pop %v559
    %v561 = vmul.f32 1.0, %v560
    %v562 = vtanh.pop %v551
    %v565 = vrot.slane %v488, 1
    %v566 = vsel %vm277, %v489, %v565
    %567 = vrot.lane.b32.xlu0 %v566, 32
    %v568 = vpop.permute.xlu0 %567
    %v570 = vmul.f32 %v561, %v568
    %572 = vrot.lane.b32.xlu0 %v562, 64
    %v573 = vpop.permute.xlu0 %572
    %v575 = vmul.f32 %v561, %v573
    %577 = vrot.lane.b32.xlu0 %v575, 32
    %v578 = vpop.permute.xlu0 %577
    %v580 = vadd.f32 %v570, %v578
    %v581 = vtanh.pop %v580
    %583 = vrot.lane.b32.xlu0 %v581, 64
    %v584 = vpop.permute.xlu0 %583
    %v586 = vmul.f32 %v561, %v584
    %v588 = vrot.slane %v586, 6
    %v589 = vrot.slane %v586, 7
    %590 = vrot.lane.b32.xlu0 %v588, 32
    %v591 = vpop.permute.xlu0 %590
    %592 = vrot.lane.b32.xlu0 %v589, 32
    %v593 = vpop.permute.xlu0 %592
    %v598 = vrot.slane %v475, 7
    %v599 = vrot.slane %v476, 7
    %v602 = vsel %vm171, %v591, %v598
    %v603 = vsel %vm172, %v593, %v599
    %v605 = vrot.slane %v580, 6
    %v606 = vrot.slane %v580, 7
    %607 = vrot.lane.b32.xlu0 %v605, 96
    %v608 = vpop.permute.xlu0 %607
    %609 = vrot.lane.b32.xlu0 %v606, 96
    %v610 = vpop.permute.xlu0 %609
    %v613 = vrot.slane %v488, 7
    %v614 = vrot.slane %v489, 7
    %v617 = vsel %vm171, %v608, %v613
    %v618 = vsel %vm172, %v610, %v614
    %v619 = vsel %vm171, %v591, 0.0
    %v620 = vsel %vm172, %v593, 0.0
    %v621 = vrot.slane %v239, 1
    %v622 = vrot.slane %v243, 1
    %v625 = vadd.f32 %v252, %v621
    %v626 = vadd.f32 %v253, %v622
    %v627 = vpack.c.bf16 %v602, %v602
    %v628 = vpack.c.bf16 %v603, %v603
    %v631 = vunpack.c.l.b16 %v627
    %v632 = vunpack.c.l.b16 %v628
    %v633 = vrot.slane %v631, 2
    %v634 = vrot.slane %v632, 1
    %v635 = vsel %vm277, %v634, %v633
    %v636 = vpack.c.b16 %v635, %v635
    %v639 = vrot.slane %v625, 3
    %v640 = vrot.slane %v626, 2
    %v641 = vsel %vm277, %v640, %v639
    %v644 = vsel %vm198, %v636, 0
    %646 = vmatprep.subr.bf16.mxu0 0
    %647 = vmatpush1.bf16.msra.mxu0 0
    %648 = vmatprep.subr.bf16.mxu0 0
    %649 = vmatpush1.bf16.msra.mxu0 0
    %650 = vmatprep.subr.bf16.mxu0 0
    %651 = vmatpush1.bf16.msra.mxu0 0
    %652 = vmatprep.subr.bf16.mxu0 0
    %653 = vmatpush1.bf16.msra.mxu0 0
    %654 = vmatprep.subr.bf16.mxu0 0
    %655 = vmatpush1.bf16.msra.mxu0 0
    %656 = vmatprep.subr.bf16.mxu0 0
    %657 = vmatpush1.bf16.msra.mxu0 0
    %658 = vmatprep.subr.bf16.mxu0 0
    %659 = vmatpush1.bf16.msra.mxu0 %v271
    %660 = vmatprep.subr.bf16.mxu0 0
    %661 = vmatpush1.bf16.msra.mxu0 %v270
    %662 = vmatprep.subr.bf16.mxu0 0
    %663 = vmatpush2.bf16.msra.mxu0 0
    %664 = vmatprep.subr.bf16.mxu0 0
    %665 = vmatpush2.bf16.msra.mxu0 0
    %666 = vmatprep.subr.bf16.mxu0 0
    %667 = vmatpush2.bf16.msra.mxu0 0
    %668 = vmatprep.subr.bf16.mxu0 0
    %669 = vmatpush2.bf16.msra.mxu0 0
    %670 = vmatprep.subr.bf16.mxu0 0
    %671 = vmatpush2.bf16.msra.mxu0 0
    %672 = vmatprep.subr.bf16.mxu0 0
    %673 = vmatpush2.bf16.msra.mxu0 0
    %674 = vmatprep.subr.bf16.mxu0 0
    %675 = vmatpush2.bf16.msra.mxu0 0
    %676 = vmatprep.subr.bf16.mxu0 0
    %677 = vmatpush2.bf16.msra.mxu0 0
    %678 = vmatprep.mubr.bf16.mxu0 0
    %679 = vmatmul.mubr.bf16.gmra.mxu0 %v644
    %v680 = vpop.f32.mrf.mxu0
    %v681 = vadd.f32 %v641, %v680
    %v682 = vpop.f32.mrf.mxu0
    %v683 = vpop.f32.mrf.mxu0
    %v684 = vpop.f32.mrf.mxu0
    %685 = vdwg.mxu0
    %v686 = vxor.u32 %v681, 2147483648
    %v687 = vmul.f32 %v686, 1.442695
    %v688 = vpow.pop %v687
    %v689 = vadd.f32 %v688, 1.0
    %v690 = vrcp.pop %v689
    %v691 = vmul.f32 1.0, %v690
    %v692 = vtanh.pop %v681
    %v695 = vrot.slane %v617, 2
    %v696 = vrot.slane %v618, 1
    %v697 = vsel %vm277, %v696, %v695
    %698 = vrot.lane.b32.xlu0 %v697, 32
    %v699 = vpop.permute.xlu0 %698
    %v701 = vmul.f32 %v691, %v699
    %703 = vrot.lane.b32.xlu0 %v692, 64
    %v704 = vpop.permute.xlu0 %703
    %v706 = vmul.f32 %v691, %v704
    %708 = vrot.lane.b32.xlu0 %v706, 32
    %v709 = vpop.permute.xlu0 %708
    %v711 = vadd.f32 %v701, %v709
    %v712 = vtanh.pop %v711
    %714 = vrot.lane.b32.xlu0 %v712, 64
    %v715 = vpop.permute.xlu0 %714
    %v717 = vmul.f32 %v691, %v715
    %v719 = vrot.slane %v717, 5
    %v720 = vrot.slane %v717, 6
    %721 = vrot.lane.b32.xlu0 %v719, 32
    %v722 = vpop.permute.xlu0 %721
    %723 = vrot.lane.b32.xlu0 %v720, 32
    %v724 = vpop.permute.xlu0 %723
    %v729 = vrot.slane %v602, 7
    %v730 = vrot.slane %v603, 7
    %v733 = vsel %vm171, %v722, %v729
    %v734 = vsel %vm172, %v724, %v730
    %v736 = vrot.slane %v711, 5
    %v737 = vrot.slane %v711, 6
    %738 = vrot.lane.b32.xlu0 %v736, 96
    %v739 = vpop.permute.xlu0 %738
    %740 = vrot.lane.b32.xlu0 %v737, 96
    %v741 = vpop.permute.xlu0 %740
    %v744 = vrot.slane %v617, 7
    %v745 = vrot.slane %v618, 7
    %v748 = vsel %vm171, %v739, %v744
    %v749 = vsel %vm172, %v741, %v745
    %v750 = vsel %vm171, %v722, 0.0
    %v751 = vsel %vm172, %v724, 0.0
    %v752 = vpack.c.bf16 %v733, %v733
    %v753 = vpack.c.bf16 %v734, %v734
    %v756 = vunpack.c.l.b16 %v752
    %v757 = vunpack.c.l.b16 %v753
    %v758 = vrot.slane %v756, 3
    %v759 = vrot.slane %v757, 2
    %v760 = vsel %vm277, %v759, %v758
    %v761 = vpack.c.b16 %v760, %v760
    %v762 = vrot.slane %v260, 4
    %v763 = vrot.slane %v261, 3
    %v764 = vsel %vm277, %v763, %v762
    %v767 = vsel %vm198, %v761, 0
    %769 = vmatprep.subr.bf16.mxu0 0
    %770 = vmatpush1.bf16.msra.mxu0 0
    %771 = vmatprep.subr.bf16.mxu0 0
    %772 = vmatpush1.bf16.msra.mxu0 0
    %773 = vmatprep.subr.bf16.mxu0 0
    %774 = vmatpush1.bf16.msra.mxu0 0
    %775 = vmatprep.subr.bf16.mxu0 0
    %776 = vmatpush1.bf16.msra.mxu0 0
    %777 = vmatprep.subr.bf16.mxu0 0
    %778 = vmatpush1.bf16.msra.mxu0 0
    %779 = vmatprep.subr.bf16.mxu0 0
    %780 = vmatpush1.bf16.msra.mxu0 0
    %781 = vmatprep.subr.bf16.mxu0 0
    %782 = vmatpush1.bf16.msra.mxu0 %v271
    %783 = vmatprep.subr.bf16.mxu0 0
    %784 = vmatpush1.bf16.msra.mxu0 %v270
    %785 = vmatprep.subr.bf16.mxu0 0
    %786 = vmatpush2.bf16.msra.mxu0 0
    %787 = vmatprep.subr.bf16.mxu0 0
    %788 = vmatpush2.bf16.msra.mxu0 0
    %789 = vmatprep.subr.bf16.mxu0 0
    %790 = vmatpush2.bf16.msra.mxu0 0
    %791 = vmatprep.subr.bf16.mxu0 0
    %792 = vmatpush2.bf16.msra.mxu0 0
    %793 = vmatprep.subr.bf16.mxu0 0
    %794 = vmatpush2.bf16.msra.mxu0 0
    %795 = vmatprep.subr.bf16.mxu0 0
    %796 = vmatpush2.bf16.msra.mxu0 0
    %797 = vmatprep.subr.bf16.mxu0 0
    %798 = vmatpush2.bf16.msra.mxu0 0
    %799 = vmatprep.subr.bf16.mxu0 0
    %800 = vmatpush2.bf16.msra.mxu0 0
    %801 = vmatprep.mubr.bf16.mxu0 0
    %802 = vmatmul.mubr.bf16.gmra.mxu0 %v767
    %v803 = vpop.f32.mrf.mxu0
    %v804 = vadd.f32 %v764, %v803
    %v805 = vpop.f32.mrf.mxu0
    %v806 = vpop.f32.mrf.mxu0
    %v807 = vpop.f32.mrf.mxu0
    %808 = vdwg.mxu0
    %v809 = vxor.u32 %v804, 2147483648
    %v810 = vmul.f32 %v809, 1.442695
    %v811 = vpow.pop %v810
    %v812 = vadd.f32 %v811, 1.0
    %v813 = vrcp.pop %v812
    %v814 = vmul.f32 1.0, %v813
    %v815 = vtanh.pop %v804
    %v818 = vrot.slane %v748, 3
    %v819 = vrot.slane %v749, 2
    %v820 = vsel %vm277, %v819, %v818
    %821 = vrot.lane.b32.xlu0 %v820, 32
    %v822 = vpop.permute.xlu0 %821
    %v824 = vmul.f32 %v814, %v822
    %826 = vrot.lane.b32.xlu0 %v815, 64
    %v827 = vpop.permute.xlu0 %826
    %v829 = vmul.f32 %v814, %v827
    %831 = vrot.lane.b32.xlu0 %v829, 32
    %v832 = vpop.permute.xlu0 %831
    %v834 = vadd.f32 %v824, %v832
    %v835 = vtanh.pop %v834
    %837 = vrot.lane.b32.xlu0 %v835, 64
    %v838 = vpop.permute.xlu0 %837
    %v840 = vmul.f32 %v814, %v838
    %v842 = vrot.slane %v840, 4
    %v843 = vrot.slane %v840, 5
    %844 = vrot.lane.b32.xlu0 %v842, 32
    %v845 = vpop.permute.xlu0 %844
    %846 = vrot.lane.b32.xlu0 %v843, 32
    %v847 = vpop.permute.xlu0 %846
    %v852 = vrot.slane %v733, 7
    %v853 = vrot.slane %v734, 7
    %v856 = vsel %vm171, %v845, %v852
    %v857 = vsel %vm172, %v847, %v853
    %v859 = vrot.slane %v834, 4
    %v860 = vrot.slane %v834, 5
    %861 = vrot.lane.b32.xlu0 %v859, 96
    %v862 = vpop.permute.xlu0 %861
    %863 = vrot.lane.b32.xlu0 %v860, 96
    %v864 = vpop.permute.xlu0 %863
    %v867 = vrot.slane %v748, 7
    %v868 = vrot.slane %v749, 7
    %v871 = vsel %vm171, %v862, %v867
    %v872 = vsel %vm172, %v864, %v868
    %v873 = vsel %vm171, %v845, 0.0
    %v874 = vsel %vm172, %v847, 0.0
    %v875 = vpack.c.bf16 %v856, %v856
    %v876 = vpack.c.bf16 %v857, %v857
    %v879 = vunpack.c.l.b16 %v875
    %v880 = vunpack.c.l.b16 %v876
    %v881 = vrot.slane %v879, 4
    %v882 = vrot.slane %v880, 3
    %v883 = vsel %vm277, %v882, %v881
    %v884 = vpack.c.b16 %v883, %v883
    %v885 = vrot.slane %v371, 5
    %v886 = vrot.slane %v372, 4
    %v887 = vsel %vm277, %v886, %v885
    %v890 = vsel %vm198, %v884, 0
    %892 = vmatprep.subr.bf16.mxu0 0
    %893 = vmatpush1.bf16.msra.mxu0 0
    %894 = vmatprep.subr.bf16.mxu0 0
    %895 = vmatpush1.bf16.msra.mxu0 0
    %896 = vmatprep.subr.bf16.mxu0 0
    %897 = vmatpush1.bf16.msra.mxu0 0
    %898 = vmatprep.subr.bf16.mxu0 0
    %899 = vmatpush1.bf16.msra.mxu0 0
    %900 = vmatprep.subr.bf16.mxu0 0
    %901 = vmatpush1.bf16.msra.mxu0 0
    %902 = vmatprep.subr.bf16.mxu0 0
    %903 = vmatpush1.bf16.msra.mxu0 0
    %904 = vmatprep.subr.bf16.mxu0 0
    %905 = vmatpush1.bf16.msra.mxu0 %v271
    %906 = vmatprep.subr.bf16.mxu0 0
    %907 = vmatpush1.bf16.msra.mxu0 %v270
    %908 = vmatprep.subr.bf16.mxu0 0
    %909 = vmatpush2.bf16.msra.mxu0 0
    %910 = vmatprep.subr.bf16.mxu0 0
    %911 = vmatpush2.bf16.msra.mxu0 0
    %912 = vmatprep.subr.bf16.mxu0 0
    %913 = vmatpush2.bf16.msra.mxu0 0
    %914 = vmatprep.subr.bf16.mxu0 0
    %915 = vmatpush2.bf16.msra.mxu0 0
    %916 = vmatprep.subr.bf16.mxu0 0
    %917 = vmatpush2.bf16.msra.mxu0 0
    %918 = vmatprep.subr.bf16.mxu0 0
    %919 = vmatpush2.bf16.msra.mxu0 0
    %920 = vmatprep.subr.bf16.mxu0 0
    %921 = vmatpush2.bf16.msra.mxu0 0
    %922 = vmatprep.subr.bf16.mxu0 0
    %923 = vmatpush2.bf16.msra.mxu0 0
    %924 = vmatprep.mubr.bf16.mxu0 0
    %925 = vmatmul.mubr.bf16.gmra.mxu0 %v890
    %v926 = vpop.f32.mrf.mxu0
    %v927 = vadd.f32 %v887, %v926
    %v928 = vpop.f32.mrf.mxu0
    %v929 = vpop.f32.mrf.mxu0
    %v930 = vpop.f32.mrf.mxu0
    %931 = vdwg.mxu0
    %v932 = vxor.u32 %v927, 2147483648
    %v933 = vmul.f32 %v932, 1.442695
    %v934 = vpow.pop %v933
    %v935 = vadd.f32 %v934, 1.0
    %v936 = vrcp.pop %v935
    %v937 = vmul.f32 1.0, %v936
    %v938 = vtanh.pop %v927
    %v941 = vrot.slane %v871, 4
    %v942 = vrot.slane %v872, 3
    %v943 = vsel %vm277, %v942, %v941
    %944 = vrot.lane.b32.xlu0 %v943, 32
    %v945 = vpop.permute.xlu0 %944
    %v947 = vmul.f32 %v937, %v945
    %949 = vrot.lane.b32.xlu0 %v938, 64
    %v950 = vpop.permute.xlu0 %949
    %v952 = vmul.f32 %v937, %v950
    %954 = vrot.lane.b32.xlu0 %v952, 32
    %v955 = vpop.permute.xlu0 %954
    %v957 = vadd.f32 %v947, %v955
    %v958 = vtanh.pop %v957
    %960 = vrot.lane.b32.xlu0 %v958, 64
    %v961 = vpop.permute.xlu0 %960
    %v963 = vmul.f32 %v937, %v961
    %v965 = vrot.slane %v963, 3
    %v966 = vrot.slane %v963, 4
    %967 = vrot.lane.b32.xlu0 %v965, 32
    %v968 = vpop.permute.xlu0 %967
    %969 = vrot.lane.b32.xlu0 %v966, 32
    %v970 = vpop.permute.xlu0 %969
    %v975 = vrot.slane %v856, 7
    %v976 = vrot.slane %v857, 7
    %v979 = vsel %vm171, %v968, %v975
    %v980 = vsel %vm172, %v970, %v976
    %v982 = vrot.slane %v957, 3
    %v983 = vrot.slane %v957, 4
    %984 = vrot.lane.b32.xlu0 %v982, 96
    %v985 = vpop.permute.xlu0 %984
    %986 = vrot.lane.b32.xlu0 %v983, 96
    %v987 = vpop.permute.xlu0 %986
    %v990 = vrot.slane %v871, 7
    %v991 = vrot.slane %v872, 7
    %v994 = vsel %vm171, %v985, %v990
    %v995 = vsel %vm172, %v987, %v991
    %v996 = vsel %vm171, %v968, 0.0
    %v997 = vsel %vm172, %v970, 0.0
    %v998 = vpack.c.bf16 %v979, %v979
    %v999 = vpack.c.bf16 %v980, %v980
    %v1002 = vunpack.c.l.b16 %v998
    %v1003 = vunpack.c.l.b16 %v999
    %v1004 = vrot.slane %v1002, 5
    %v1005 = vrot.slane %v1003, 4
    %v1006 = vsel %vm277, %v1005, %v1004
    %v1007 = vpack.c.b16 %v1006, %v1006
    %v1008 = vrot.slane %v496, 6
    %v1009 = vrot.slane %v497, 5
    %v1010 = vsel %vm277, %v1009, %v1008
    %v1013 = vsel %vm198, %v1007, 0
    %1015 = vmatprep.subr.bf16.mxu0 0
    %1016 = vmatpush1.bf16.msra.mxu0 0
    %1017 = vmatprep.subr.bf16.mxu0 0
    %1018 = vmatpush1.bf16.msra.mxu0 0
    %1019 = vmatprep.subr.bf16.mxu0 0
    %1020 = vmatpush1.bf16.msra.mxu0 0
    %1021 = vmatprep.subr.bf16.mxu0 0
    %1022 = vmatpush1.bf16.msra.mxu0 0
    %1023 = vmatprep.subr.bf16.mxu0 0
    %1024 = vmatpush1.bf16.msra.mxu0 0
    %1025 = vmatprep.subr.bf16.mxu0 0
    %1026 = vmatpush1.bf16.msra.mxu0 0
    %1027 = vmatprep.subr.bf16.mxu0 0
    %1028 = vmatpush1.bf16.msra.mxu0 %v271
    %1029 = vmatprep.subr.bf16.mxu0 0
    %1030 = vmatpush1.bf16.msra.mxu0 %v270
    %1031 = vmatprep.subr.bf16.mxu0 0
    %1032 = vmatpush2.bf16.msra.mxu0 0
    %1033 = vmatprep.subr.bf16.mxu0 0
    %1034 = vmatpush2.bf16.msra.mxu0 0
    %1035 = vmatprep.subr.bf16.mxu0 0
    %1036 = vmatpush2.bf16.msra.mxu0 0
    %1037 = vmatprep.subr.bf16.mxu0 0
    %1038 = vmatpush2.bf16.msra.mxu0 0
    %1039 = vmatprep.subr.bf16.mxu0 0
    %1040 = vmatpush2.bf16.msra.mxu0 0
    %1041 = vmatprep.subr.bf16.mxu0 0
    %1042 = vmatpush2.bf16.msra.mxu0 0
    %1043 = vmatprep.subr.bf16.mxu0 0
    %1044 = vmatpush2.bf16.msra.mxu0 0
    %1045 = vmatprep.subr.bf16.mxu0 0
    %1046 = vmatpush2.bf16.msra.mxu0 0
    %1047 = vmatprep.mubr.bf16.mxu0 0
    %1048 = vmatmul.mubr.bf16.gmra.mxu0 %v1013
    %v1049 = vpop.f32.mrf.mxu0
    %v1050 = vadd.f32 %v1010, %v1049
    %v1051 = vpop.f32.mrf.mxu0
    %v1052 = vpop.f32.mrf.mxu0
    %v1053 = vpop.f32.mrf.mxu0
    %1054 = vdwg.mxu0
    %v1055 = vxor.u32 %v1050, 2147483648
    %v1056 = vmul.f32 %v1055, 1.442695
    %v1057 = vpow.pop %v1056
    %v1058 = vadd.f32 %v1057, 1.0
    %v1059 = vrcp.pop %v1058
    %v1060 = vmul.f32 1.0, %v1059
    %v1061 = vtanh.pop %v1050
    %v1064 = vrot.slane %v994, 5
    %v1065 = vrot.slane %v995, 4
    %v1066 = vsel %vm277, %v1065, %v1064
    %1067 = vrot.lane.b32.xlu0 %v1066, 32
    %v1068 = vpop.permute.xlu0 %1067
    %v1070 = vmul.f32 %v1060, %v1068
    %1072 = vrot.lane.b32.xlu0 %v1061, 64
    %v1073 = vpop.permute.xlu0 %1072
    %v1075 = vmul.f32 %v1060, %v1073
    %1077 = vrot.lane.b32.xlu0 %v1075, 32
    %v1078 = vpop.permute.xlu0 %1077
    %v1080 = vadd.f32 %v1070, %v1078
    %v1081 = vtanh.pop %v1080
    %1083 = vrot.lane.b32.xlu0 %v1081, 64
    %v1084 = vpop.permute.xlu0 %1083
    %v1086 = vmul.f32 %v1060, %v1084
    %v1088 = vrot.slane %v1086, 2
    %v1089 = vrot.slane %v1086, 3
    %1090 = vrot.lane.b32.xlu0 %v1088, 32
    %v1091 = vpop.permute.xlu0 %1090
    %1092 = vrot.lane.b32.xlu0 %v1089, 32
    %v1093 = vpop.permute.xlu0 %1092
    %v1098 = vrot.slane %v979, 7
    %v1099 = vrot.slane %v980, 7
    %v1102 = vsel %vm171, %v1091, %v1098
    %v1103 = vsel %vm172, %v1093, %v1099
    %v1105 = vrot.slane %v1080, 2
    %v1106 = vrot.slane %v1080, 3
    %1107 = vrot.lane.b32.xlu0 %v1105, 96
    %v1108 = vpop.permute.xlu0 %1107
    %1109 = vrot.lane.b32.xlu0 %v1106, 96
    %v1110 = vpop.permute.xlu0 %1109
    %v1113 = vrot.slane %v994, 7
    %v1114 = vrot.slane %v995, 7
    %v1117 = vsel %vm171, %v1108, %v1113
    %v1118 = vsel %vm172, %v1110, %v1114
    %v1119 = vsel %vm171, %v1091, 0.0
    %v1120 = vsel %vm172, %v1093, 0.0
    %v1121 = vpack.c.bf16 %v1102, %v1102
    %v1122 = vpack.c.bf16 %v1103, %v1103
    %v1125 = vunpack.c.l.b16 %v1121
    %v1126 = vunpack.c.l.b16 %v1122
    %v1127 = vrot.slane %v1125, 6
    %v1128 = vrot.slane %v1126, 5
    %v1129 = vsel %vm277, %v1128, %v1127
    %v1130 = vpack.c.b16 %v1129, %v1129
    %v1131 = vrot.slane %v625, 7
    %v1132 = vrot.slane %v626, 6
    %v1133 = vsel %vm277, %v1132, %v1131
    %v1136 = vsel %vm198, %v1130, 0
    %1138 = vmatprep.subr.bf16.mxu0 0
    %1139 = vmatpush1.bf16.msra.mxu0 0
    %1140 = vmatprep.subr.bf16.mxu0 0
    %1141 = vmatpush1.bf16.msra.mxu0 0
    %1142 = vmatprep.subr.bf16.mxu0 0
    %1143 = vmatpush1.bf16.msra.mxu0 0
    %1144 = vmatprep.subr.bf16.mxu0 0
    %1145 = vmatpush1.bf16.msra.mxu0 0
    %1146 = vmatprep.subr.bf16.mxu0 0
    %1147 = vmatpush1.bf16.msra.mxu0 0
    %1148 = vmatprep.subr.bf16.mxu0 0
    %1149 = vmatpush1.bf16.msra.mxu0 0
    %1150 = vmatprep.subr.bf16.mxu0 0
    %1151 = vmatpush1.bf16.msra.mxu0 %v271
    %1152 = vmatprep.subr.bf16.mxu0 0
    %1153 = vmatpush1.bf16.msra.mxu0 %v270
    %1154 = vmatprep.subr.bf16.mxu0 0
    %1155 = vmatpush2.bf16.msra.mxu0 0
    %1156 = vmatprep.subr.bf16.mxu0 0
    %1157 = vmatpush2.bf16.msra.mxu0 0
    %1158 = vmatprep.subr.bf16.mxu0 0
    %1159 = vmatpush2.bf16.msra.mxu0 0
    %1160 = vmatprep.subr.bf16.mxu0 0
    %1161 = vmatpush2.bf16.msra.mxu0 0
    %1162 = vmatprep.subr.bf16.mxu0 0
    %1163 = vmatpush2.bf16.msra.mxu0 0
    %1164 = vmatprep.subr.bf16.mxu0 0
    %1165 = vmatpush2.bf16.msra.mxu0 0
    %1166 = vmatprep.subr.bf16.mxu0 0
    %1167 = vmatpush2.bf16.msra.mxu0 0
    %1168 = vmatprep.subr.bf16.mxu0 0
    %1169 = vmatpush2.bf16.msra.mxu0 0
    %1170 = vmatprep.mubr.bf16.mxu0 0
    %1171 = vmatmul.mubr.bf16.gmra.mxu0 %v1136
    %v1172 = vpop.f32.mrf.mxu0
    %v1173 = vadd.f32 %v1133, %v1172
    %v1174 = vpop.f32.mrf.mxu0
    %v1175 = vpop.f32.mrf.mxu0
    %v1176 = vpop.f32.mrf.mxu0
    %1177 = vdwg.mxu0
    %v1178 = vxor.u32 %v1173, 2147483648
    %v1179 = vmul.f32 %v1178, 1.442695
    %v1180 = vpow.pop %v1179
    %v1181 = vadd.f32 %v1180, 1.0
    %v1182 = vrcp.pop %v1181
    %v1183 = vmul.f32 1.0, %v1182
    %v1184 = vtanh.pop %v1173
    %v1187 = vrot.slane %v1117, 6
    %v1188 = vrot.slane %v1118, 5
    %v1189 = vsel %vm277, %v1188, %v1187
    %1190 = vrot.lane.b32.xlu0 %v1189, 32
    %v1191 = vpop.permute.xlu0 %1190
    %v1193 = vmul.f32 %v1183, %v1191
    %1195 = vrot.lane.b32.xlu0 %v1184, 64
    %v1196 = vpop.permute.xlu0 %1195
    %v1198 = vmul.f32 %v1183, %v1196
    %1200 = vrot.lane.b32.xlu0 %v1198, 32
    %v1201 = vpop.permute.xlu0 %1200
    %v1203 = vadd.f32 %v1193, %v1201
    %v1204 = vtanh.pop %v1203
    %1206 = vrot.lane.b32.xlu0 %v1204, 64
    %v1207 = vpop.permute.xlu0 %1206
    %v1209 = vmul.f32 %v1183, %v1207
    %v1211 = vrot.slane %v1209, 1
    %v1212 = vrot.slane %v1209, 2
    %1213 = vrot.lane.b32.xlu0 %v1211, 32
    %v1214 = vpop.permute.xlu0 %1213
    %1215 = vrot.lane.b32.xlu0 %v1212, 32
    %v1216 = vpop.permute.xlu0 %1215
    %v1221 = vrot.slane %v1102, 7
    %v1222 = vrot.slane %v1103, 7
    %v1225 = vsel %vm171, %v1214, %v1221
    %v1226 = vsel %vm172, %v1216, %v1222
    %v1227 = vsel %vm171, %v1214, 0.0
    %v1228 = vsel %vm172, %v1216, 0.0
    %v1231 = vrot.slane %v1226, 7
    %vm1234 = vcmask 261127
    %1235 = vst.msk [vmem:[#allocation13 - $0x7] sm:$0x80] %vm1234, %v1225
    %vm1236 = vcmask 253952
    %1237 = vst.msk [vmem:[#allocation13 + $0x1] sm:$0x1] %vm1236, %v1231
    %v1238 = vsel %vm277, %v472, %v355
    %v1242 = vrot.slane %v1227, 7
    %v1243 = vrot.slane %v1228, 6
    %v1244 = vsel %vm277, %v1243, %v1242
    %v1246 = vsel %vm168, %v1238, %v1244
    %v1249 = vrot.slane %v491, 7
    %vm1250 = vcmask 1042434
    %v1251 = vsel %vm1250, %v1249, %v490
    %v1255 = vrot.slane %v1119, 5
    %v1256 = vrot.slane %v1120, 4
    %v1257 = vsel %vm1250, %v1256, %v1255
    %v1259 = vsel %vm168, %v1251, %v1257
    %v1262 = vrot.slane %v620, 7
    %vm1263 = vcmask 1043459
    %v1264 = vsel %vm1263, %v1262, %v619
    %v1268 = vrot.slane %v996, 3
    %v1269 = vrot.slane %v997, 2
    %v1270 = vsel %vm1263, %v1269, %v1268
    %v1272 = vsel %vm168, %v1264, %v1270
    %v1275 = vrot.slane %v751, 7
    %vm1276 = vcmask 1044484
    %v1277 = vsel %vm1276, %v1275, %v750
    %v1281 = vrot.slane %v873, 1
    %v1282 = vsel %vm1276, %v874, %v1281
    %v1284 = vsel %vm168, %v1277, %v1282
    %v1285 = vrot.slane %v874, 7
    %vm1286 = vcmask 1045509
    %v1287 = vsel %vm1286, %v1285, %v873
    %v1289 = vrot.slane %v750, 7
    %v1290 = vrot.slane %v751, 6
    %v1291 = vsel %vm1286, %v1290, %v1289
    %v1293 = vsel %vm168, %v1287, %v1291
    %v1294 = vrot.slane %v997, 7
    %vm1295 = vcmask 1046534
    %v1296 = vsel %vm1295, %v1294, %v996
    %v1298 = vrot.slane %v619, 5
    %v1299 = vrot.slane %v620, 4
    %v1300 = vsel %vm1295, %v1299, %v1298
    %v1302 = vsel %vm168, %v1296, %v1300
    %v1303 = vrot.slane %v1120, 7
    %vm1304 = vcmask 1047559
    %v1305 = vsel %vm1304, %v1303, %v1119
    %v1307 = vrot.slane %v490, 3
    %v1308 = vrot.slane %v491, 2
    %v1309 = vsel %vm1304, %v1308, %v1307
    %v1311 = vsel %vm168, %v1305, %v1309
    %v1312 = vrot.slane %v1228, 7
    %v1315 = vrot.slane %v355, 1
    %v1318 = vsel %vm168, %v1227, %v1315
    %v1319 = vsel %vm168, %v1312, %v356
    %v1322 = vunpack.c.l.s4 1966171168
    %v1323 = vunpack.c.0.s8 %v1322
    %v1324 = vlaneseq
    %v1325 = vshrl.u32 %v1324, 7
    %v1326 = vsub.s32 %v1323, %v1325
    %v1327 = vrot.slane %v1246, %v1326
    %v1328 = vcombine.high %v1327, %v1327
    %v1330 = vunpack.c.l.s4 1966171168
    %v1331 = vunpack.c.0.s8 %v1330
    %v1332 = vlaneseq
    %v1333 = vshrl.u32 %v1332, 7
    %v1334 = vsub.s32 %v1331, %v1333
    %v1335 = vrot.slane %v1327, %v1334
    %v1337 = vunpack.c.l.s4 1966171168
    %v1338 = vunpack.c.0.s8 %v1337
    %v1339 = vlaneseq
    %v1340 = vshrl.u32 %v1339, 7
    %v1341 = vsub.s32 %v1338, %v1340
    %v1342 = vrot.slane %v1328, %v1341
    %v1347 = vunpack.c.l.s4 1966171168
    %v1348 = vunpack.c.0.s8 %v1347
    %v1349 = vlaneseq
    %v1350 = vshrl.u32 %v1349, 7
    %v1351 = vsub.s32 %v1348, %v1350
    %v1352 = vrot.slane %v1259, %v1351
    %v1353 = vcombine.high %v1352, %v1352
    %v1355 = vunpack.c.l.s4 1966171168
    %v1356 = vunpack.c.0.s8 %v1355
    %v1357 = vlaneseq
    %v1358 = vshrl.u32 %v1357, 7
    %v1359 = vsub.s32 %v1356, %v1358
    %v1360 = vrot.slane %v1352, %v1359
    %v1362 = vunpack.c.l.s4 1966171168
    %v1363 = vunpack.c.0.s8 %v1362
    %v1364 = vlaneseq
    %v1365 = vshrl.u32 %v1364, 7
    %v1366 = vsub.s32 %v1363, %v1365
    %v1367 = vrot.slane %v1353, %v1366
    %v1368 = vcombine.high %v1360, %v1360
    %v1371 = vunpack.c.l.s4 1966171168
    %v1372 = vunpack.c.0.s8 %v1371
    %v1373 = vlaneseq
    %v1374 = vshrl.u32 %v1373, 7
    %v1375 = vsub.s32 %v1372, %v1374
    %v1376 = vrot.slane %v1272, %v1375
    %v1377 = vcombine.high %v1376, %v1376
    %v1379 = vunpack.c.l.s4 1966171168
    %v1380 = vunpack.c.0.s8 %v1379
    %v1381 = vlaneseq
    %v1382 = vshrl.u32 %v1381, 7
    %v1383 = vsub.s32 %v1380, %v1382
    %v1384 = vrot.slane %v1376, %v1383
    %v1386 = vunpack.c.l.s4 1966171168
    %v1387 = vunpack.c.0.s8 %v1386
    %v1388 = vlaneseq
    %v1389 = vshrl.u32 %v1388, 7
    %v1390 = vsub.s32 %v1387, %v1389
    %v1391 = vrot.slane %v1377, %v1390
    %v1392 = vcombine.high %v1384, %v1384
    %v1393 = vcombine.high %v1391, %v1391
    %v1395 = vcombine.high %v1284, %v1284
    %v1397 = vunpack.c.l.s4 1966171168
    %v1398 = vunpack.c.0.s8 %v1397
    %v1399 = vlaneseq
    %v1400 = vshrl.u32 %v1399, 7
    %v1401 = vsub.s32 %v1398, %v1400
    %v1402 = vrot.slane %v1284, %v1401
    %v1404 = vunpack.c.l.s4 1966171168
    %v1405 = vunpack.c.0.s8 %v1404
    %v1406 = vlaneseq
    %v1407 = vshrl.u32 %v1406, 7
    %v1408 = vsub.s32 %v1405, %v1407
    %v1409 = vrot.slane %v1395, %v1408
    %v1410 = vcombine.high %v1402, %v1402
    %v1412 = vunpack.c.l.s4 1966171168
    %v1413 = vunpack.c.0.s8 %v1412
    %v1414 = vlaneseq
    %v1415 = vshrl.u32 %v1414, 7
    %v1416 = vsub.s32 %v1413, %v1415
    %v1417 = vrot.slane %v1409, %v1416
    %v1419 = vunpack.c.l.s4 1966171168
    %v1420 = vunpack.c.0.s8 %v1419
    %v1421 = vlaneseq
    %v1422 = vshrl.u32 %v1421, 7
    %v1423 = vsub.s32 %v1420, %v1422
    %v1424 = vrot.slane %v1410, %v1423
    %v1425 = vcombine.high %v1424, %v1424
    %v1427 = vcombine.high %v1293, %v1293
    %v1429 = vunpack.c.l.s4 1966171168
    %v1430 = vunpack.c.0.s8 %v1429
    %v1431 = vlaneseq
    %v1432 = vshrl.u32 %v1431, 7
    %v1433 = vsub.s32 %v1430, %v1432
    %v1434 = vrot.slane %v1427, %v1433
    %v1435 = vcombine.high %v1434, %v1434
    %v1437 = vunpack.c.l.s4 1966171168
    %v1438 = vunpack.c.0.s8 %v1437
    %v1439 = vlaneseq
    %v1440 = vshrl.u32 %v1439, 7
    %v1441 = vsub.s32 %v1438, %v1440
    %v1442 = vrot.slane %v1434, %v1441
    %v1444 = vunpack.c.l.s4 1966171168
    %v1445 = vunpack.c.0.s8 %v1444
    %v1446 = vlaneseq
    %v1447 = vshrl.u32 %v1446, 7
    %v1448 = vsub.s32 %v1445, %v1447
    %v1449 = vrot.slane %v1435, %v1448
    %v1451 = vcombine.high %v1302, %v1302
    %v1453 = vunpack.c.l.s4 1966171168
    %v1454 = vunpack.c.0.s8 %v1453
    %v1455 = vlaneseq
    %v1456 = vshrl.u32 %v1455, 7
    %v1457 = vsub.s32 %v1454, %v1456
    %v1458 = vrot.slane %v1451, %v1457
    %v1459 = vcombine.high %v1458, %v1458
    %v1461 = vunpack.c.l.s4 1966171168
    %v1462 = vunpack.c.0.s8 %v1461
    %v1463 = vlaneseq
    %v1464 = vshrl.u32 %v1463, 7
    %v1465 = vsub.s32 %v1462, %v1464
    %v1466 = vrot.slane %v1458, %v1465
    %v1468 = vunpack.c.l.s4 1966171168
    %v1469 = vunpack.c.0.s8 %v1468
    %v1470 = vlaneseq
    %v1471 = vshrl.u32 %v1470, 7
    %v1472 = vsub.s32 %v1469, %v1471
    %v1473 = vrot.slane %v1459, %v1472
    %v1474 = vcombine.high %v1466, %v1466
    %v1476 = vcombine.high %v1311, %v1311
    %v1478 = vunpack.c.l.s4 1966171168
    %v1479 = vunpack.c.0.s8 %v1478
    %v1480 = vlaneseq
    %v1481 = vshrl.u32 %v1480, 7
    %v1482 = vsub.s32 %v1479, %v1481
    %v1483 = vrot.slane %v1476, %v1482
    %v1484 = vcombine.high %v1483, %v1483
    %v1486 = vunpack.c.l.s4 1966171168
    %v1487 = vunpack.c.0.s8 %v1486
    %v1488 = vlaneseq
    %v1489 = vshrl.u32 %v1488, 7
    %v1490 = vsub.s32 %v1487, %v1489
    %v1491 = vrot.slane %v1483, %v1490
    %v1493 = vunpack.c.l.s4 1966171168
    %v1494 = vunpack.c.0.s8 %v1493
    %v1495 = vlaneseq
    %v1496 = vshrl.u32 %v1495, 7
    %v1497 = vsub.s32 %v1494, %v1496
    %v1498 = vrot.slane %v1484, %v1497
    %v1499 = vcombine.high %v1491, %v1491
    %v1500 = vcombine.high %v1498, %v1498
    %v1503 = vcombine.high %v1318, %v1318
    %v1505 = vunpack.c.l.s4 1966171168
    %v1506 = vunpack.c.0.s8 %v1505
    %v1507 = vlaneseq
    %v1508 = vshrl.u32 %v1507, 7
    %v1509 = vsub.s32 %v1506, %v1508
    %v1510 = vrot.slane %v1503, %v1509
    %v1511 = vcombine.high %v1510, %v1510
    %v1513 = vunpack.c.l.s4 1966171168
    %v1514 = vunpack.c.0.s8 %v1513
    %v1515 = vlaneseq
    %v1516 = vshrl.u32 %v1515, 7
    %v1517 = vsub.s32 %v1514, %v1516
    %v1518 = vrot.slane %v1511, %v1517
    %v1519 = vcombine.high %v1518, %v1518
    %v1521 = vunpack.c.l.s4 1966171168
    %v1522 = vunpack.c.0.s8 %v1521
    %v1523 = vlaneseq
    %v1524 = vshrl.u32 %v1523, 7
    %v1525 = vsub.s32 %v1522, %v1524
    %v1526 = vrot.slane %v1319, %v1525
    %v1528 = vunpack.c.l.s4 1966171168
    %v1529 = vunpack.c.0.s8 %v1528
    %v1530 = vlaneseq
    %v1531 = vshrl.u32 %v1530, 7
    %v1532 = vsub.s32 %v1529, %v1531
    %v1533 = vrot.slane %v1526, %v1532
    %v1534 = vlaneseq
    %v1535 = vshrl.u32 %v1534, 7
    %v1536 = vsub.s32 0, %v1535
    %v1537 = vrot.slane %v1367, %v1536
    %v1538 = vlaneseq
    %v1539 = vshrl.u32 %v1538, 7
    %v1540 = vsub.s32 0, %v1539
    %v1541 = vrot.slane %v1368, %v1540
    %v1544 = vlaneseq
    %v1545 = vshrl.u32 %v1544, 7
    %v1546 = vsub.s32 0, %v1545
    %v1547 = vrot.slane %v1392, %v1546
    %v1548 = vlaneseq
    %v1549 = vshrl.u32 %v1548, 7
    %v1550 = vsub.s32 0, %v1549
    %v1551 = vrot.slane %v1393, %v1550
    %v1554 = vlaneseq
    %v1555 = vshrl.u32 %v1554, 7
    %v1556 = vsub.s32 0, %v1555
    %v1557 = vrot.slane %v1425, %v1556
    %v1558 = vlaneseq
    %v1559 = vshrl.u32 %v1558, 7
    %v1560 = vsub.s32 0, %v1559
    %v1561 = vrot.slane %v1417, %v1560
    %v1564 = vlaneseq
    %v1565 = vshrl.u32 %v1564, 7
    %v1566 = vsub.s32 0, %v1565
    %v1567 = vrot.slane %v1442, %v1566
    %v1568 = vlaneseq
    %v1569 = vshrl.u32 %v1568, 7
    %v1570 = vsub.s32 0, %v1569
    %v1571 = vrot.slane %v1449, %v1570
    %v1574 = vlaneseq
    %v1575 = vshrl.u32 %v1574, 7
    %v1576 = vsub.s32 0, %v1575
    %v1577 = vrot.slane %v1473, %v1576
    %v1578 = vlaneseq
    %v1579 = vshrl.u32 %v1578, 7
    %v1580 = vsub.s32 0, %v1579
    %v1581 = vrot.slane %v1474, %v1580
    %v1584 = vlaneseq
    %v1585 = vshrl.u32 %v1584, 7
    %v1586 = vsub.s32 0, %v1585
    %v1587 = vrot.slane %v1499, %v1586
    %v1588 = vlaneseq
    %v1589 = vshrl.u32 %v1588, 7
    %v1590 = vsub.s32 0, %v1589
    %v1591 = vrot.slane %v1500, %v1590
    %v1594 = vlaneseq
    %v1595 = vshrl.u32 %v1594, 7
    %v1596 = vsub.s32 0, %v1595
    %v1597 = vrot.slane %v1519, %v1596
    %v1598 = vlaneseq
    %v1599 = vshrl.u32 %v1598, 7
    %v1600 = vsub.s32 0, %v1599
    %v1601 = vrot.slane %v1533, %v1600
    %vm1604 = vcmask 1040384
    %v1605 = vsel %vm1604, %v1335, %v1537
    %v1606 = vsel %vm1604, %v1342, %v1541
    %vm1607 = vcmask 1041408
    %v1608 = vsel %vm1607, %v1605, %v1547
    %v1609 = vsel %vm1607, %v1606, %v1551
    %vm1610 = vcmask 1042432
    %v1611 = vsel %vm1610, %v1608, %v1557
    %v1612 = vsel %vm1610, %v1609, %v1561
    %vm1613 = vcmask 1043456
    %v1614 = vsel %vm1613, %v1611, %v1567
    %v1615 = vsel %vm1613, %v1612, %v1571
    %vm1616 = vcmask 1044480
    %v1617 = vsel %vm1616, %v1614, %v1577
    %v1618 = vsel %vm1616, %v1615, %v1581
    %vm1619 = vcmask 1045504
    %v1620 = vsel %vm1619, %v1617, %v1587
    %v1621 = vsel %vm1619, %v1618, %v1591
    %vm1622 = vcmask 1046528
    %v1623 = vsel %vm1622, %v1620, %v1597
    %v1624 = vsel %vm1622, %v1621, %v1601
    %v1625 = vrot.slane %v1259, 1
    %1626 = vrot.lane.b32.xlu0 %v1625, 32
    %v1627 = vpop.permute.xlu0 %1626
    %v1629 = vrot.slane %v1272, 2
    %1630 = vrot.lane.b32.xlu0 %v1629, 64
    %v1631 = vpop.permute.xlu0 %1630
    %v1633 = vrot.slane %v1284, 3
    %1634 = vrot.lane.b32.xlu0 %v1633, 96
    %v1635 = vpop.permute.xlu0 %1634
    %v1637 = vrot.slane %v1293, 4
    %v1639 = vrot.slane %v1302, 5
    %1640 = vrot.lane.b32.xlu0 %v1639, 32
    %v1641 = vpop.permute.xlu0 %1640
    %v1643 = vrot.slane %v1311, 6
    %1644 = vrot.lane.b32.xlu0 %v1643, 64
    %v1645 = vpop.permute.xlu0 %1644
    %v1647 = vrot.slane %v1318, 7
    %v1648 = vrot.slane %v1319, 7
    %v1649 = vsel %vm1604, %v1647, %v1648
    %1650 = vrot.lane.b32.xlu0 %v1649, 96
    %v1651 = vpop.permute.xlu0 %1650
    %v1653 = vsel %vm198, %v1246, %v1627
    %vm1654 = vcmask 523264
    %v1655 = vsel %vm1654, %v1653, %v1631
    %vm1656 = vcmask 785408
    %v1657 = vsel %vm1656, %v1655, %v1635
    %v1658 = vsel %vm198, %v1637, %v1641
    %v1659 = vsel %vm1654, %v1658, %v1645
    %v1660 = vsel %vm1656, %v1659, %v1651
    %v1663 = vcombine.low %v1657, %v1660
    %v1665 = vunpack.c.l.s4 1983009808
    %v1666 = vunpack.c.0.s8 %v1665
    %v1667 = vlaneseq
    %v1668 = vshrl.u32 %v1667, 7
    %v1669 = vsub.s32 %v1666, %v1668
    %v1670 = vrot.slane %v1663, %v1669
    %1672 = vst [vmem:[%s13] sm:$0xf] %v1670
    %v1673 = vld [vmem:[#allocation10] sm:$0xf]
    %v1674 = vld [vmem:[#allocation10 + $0x4] sm:$0xf]
    %v1675 = vld [vmem:[#allocation10 + $0x8] sm:$0xf]
    %v1676 = vld [vmem:[#allocation10 + $0xc] sm:$0xf]
    %v1677 = vld [vmem:[#allocation11] sm:$0xf]
    %v1678 = vld [vmem:[#allocation11 + $0x4] sm:$0xf]
    %v1679 = vld [vmem:[#allocation11 + $0x8] sm:$0xf]
    %v1680 = vld [vmem:[#allocation11 + $0xc] sm:$0xf]
    %v1681 = vld [vmem:[#allocation8] sm:$0xf]
    %v1682 = vld [vmem:[#allocation8 + $0x4] sm:$0xf]
    %v1683 = vld [vmem:[#allocation8 + $0x8] sm:$0xf]
    %v1684 = vld [vmem:[#allocation8 + $0xc] sm:$0xf]
    %v1685 = vld [vmem:[%s12] sm:$0x1]
    %v1686 = vpack.c.bf16 %v1624, %v1623
    %v1691 = vunpack.c.l.b16 %v1677
    %v1692 = vunpack.c.l.b16 %v1678
    %v1693 = vunpack.c.l.b16 %v1679
    %v1694 = vunpack.c.l.b16 %v1680
    %v1695 = vpack.c.b16 %v1692, %v1691
    %v1696 = vpack.c.b16 %v1694, %v1693
    %v1700 = vsel %vm198, %v1686, 0
    %1702 = vmatprep.subr.bf16.mxu0 0
    %1703 = vmatpush1.bf16.msra.mxu0 0
    %1704 = vmatprep.subr.bf16.mxu0 0
    %1705 = vmatpush1.bf16.msra.mxu0 0
    %1706 = vmatprep.subr.bf16.mxu0 0
    %1707 = vmatpush1.bf16.msra.mxu0 0
    %1708 = vmatprep.subr.bf16.mxu0 0
    %1709 = vmatpush1.bf16.msra.mxu0 0
    %1710 = vmatprep.subr.bf16.mxu0 0
    %1711 = vmatpush1.bf16.msra.mxu0 0
    %1712 = vmatprep.subr.bf16.mxu0 0
    %1713 = vmatpush1.bf16.msra.mxu0 0
    %1714 = vmatprep.subr.bf16.mxu0 0
    %1715 = vmatpush1.bf16.msra.mxu0 %v1696
    %1716 = vmatprep.subr.bf16.mxu0 0
    %1717 = vmatpush1.bf16.msra.mxu0 %v1695
    %1718 = vmatprep.subr.bf16.mxu0 0
    %1719 = vmatpush2.bf16.msra.mxu0 0
    %1720 = vmatprep.subr.bf16.mxu0 0
    %1721 = vmatpush2.bf16.msra.mxu0 0
    %1722 = vmatprep.subr.bf16.mxu0 0
    %1723 = vmatpush2.bf16.msra.mxu0 0
    %1724 = vmatprep.subr.bf16.mxu0 0
    %1725 = vmatpush2.bf16.msra.mxu0 0
    %1726 = vmatprep.subr.bf16.mxu0 0
    %1727 = vmatpush2.bf16.msra.mxu0 0
    %1728 = vmatprep.subr.bf16.mxu0 0
    %1729 = vmatpush2.bf16.msra.mxu0 0
    %1730 = vmatprep.subr.bf16.mxu0 0
    %1731 = vmatpush2.bf16.msra.mxu0 0
    %1732 = vmatprep.subr.bf16.mxu0 0
    %1733 = vmatpush2.bf16.msra.mxu0 0
    %1734 = vmatprep.mubr.bf16.mxu0 0
    %1735 = vmatmul.mubr.bf16.gmra.mxu0 %v1700
    %v1736 = vpop.f32.mrf.mxu0
    %v1737 = vadd.f32 0.0, %v1736
    %v1738 = vpop.f32.mrf.mxu0
    %v1739 = vpop.f32.mrf.mxu0
    %v1740 = vadd.f32 0.0, %v1739
    %v1741 = vpop.f32.mrf.mxu0
    %1742 = vdwg.mxu0
    %v1743 = vpack.c.bf16 %v1225, %v1225
    %v1744 = vpack.c.bf16 %v1226, %v1226
    %v1745 = vld [vmem:[%s7] sm:$0xf]
    %v1746 = vld [vmem:[%s7 + $0x4] sm:$0xf]
    %v1747 = vld [vmem:[%s7 + $0x8] sm:$0xf]
    %v1748 = vld [vmem:[%s7 + $0xc] sm:$0xf]
    %v1749 = vld [vmem:[%s8] sm:$0x1]
    %v1751 = vlaneseq
    %v1752 = vshrl.u32 %v1751, 7
    %v1753 = vsub.s32 0, %v1752
    %v1754 = vrot.slane %v1749, %v1753
    %v1758 = vunpack.c.l.b16 %v1743
    %v1759 = vunpack.c.l.b16 %v1744
    %v1760 = vrot.slane %v1758, 7
    %v1761 = vrot.slane %v1759, 6
    %v1762 = vsel %vm277, %v1761, %v1760
    %v1763 = vpack.c.b16 %v1762, %v1762
    %v1768 = vunpack.c.l.b16 %v1745
    %v1769 = vunpack.c.l.b16 %v1746
    %v1770 = vunpack.c.l.b16 %v1747
    %v1771 = vunpack.c.l.b16 %v1748
    %v1772 = vpack.c.b16 %v1769, %v1768
    %v1773 = vpack.c.b16 %v1771, %v1770
    %v1777 = vsel %vm198, %v1763, 0
    %1779 = vmatprep.subr.bf16.mxu0 0
    %1780 = vmatpush1.bf16.msra.mxu0 0
    %1781 = vmatprep.subr.bf16.mxu0 0
    %1782 = vmatpush1.bf16.msra.mxu0 0
    %1783 = vmatprep.subr.bf16.mxu0 0
    %1784 = vmatpush1.bf16.msra.mxu0 0
    %1785 = vmatprep.subr.bf16.mxu0 0
    %1786 = vmatpush1.bf16.msra.mxu0 0
    %1787 = vmatprep.subr.bf16.mxu0 0
    %1788 = vmatpush1.bf16.msra.mxu0 0
    %1789 = vmatprep.subr.bf16.mxu0 0
    %1790 = vmatpush1.bf16.msra.mxu0 0
    %1791 = vmatprep.subr.bf16.mxu0 0
    %1792 = vmatpush1.bf16.msra.mxu0 %v1773
    %1793 = vmatprep.subr.bf16.mxu0 0
    %1794 = vmatpush1.bf16.msra.mxu0 %v1772
    %1795 = vmatprep.subr.bf16.mxu0 0
    %1796 = vmatpush2.bf16.msra.mxu0 0
    %1797 = vmatprep.subr.bf16.mxu0 0
    %1798 = vmatpush2.bf16.msra.mxu0 0
    %1799 = vmatprep.subr.bf16.mxu0 0
    %1800 = vmatpush2.bf16.msra.mxu0 0
    %1801 = vmatprep.subr.bf16.mxu0 0
    %1802 = vmatpush2.bf16.msra.mxu0 0
    %1803 = vmatprep.subr.bf16.mxu0 0
    %1804 = vmatpush2.bf16.msra.mxu0 0
    %1805 = vmatprep.subr.bf16.mxu0 0
    %1806 = vmatpush2.bf16.msra.mxu0 0
    %1807 = vmatprep.subr.bf16.mxu0 0
    %1808 = vmatpush2.bf16.msra.mxu0 0
    %1809 = vmatprep.subr.bf16.mxu0 0
    %1810 = vmatpush2.bf16.msra.mxu0 0
    %1811 = vmatprep.mubr.bf16.mxu0 0
    %1812 = vmatmul.mubr.bf16.gmra.mxu0 %v1777
    %v1813 = vpop.f32.mrf.mxu0
    %v1814 = vadd.f32 %v1754, %v1813
    %v1815 = vpop.f32.mrf.mxu0
    %v1816 = vpop.f32.mrf.mxu0
    %v1817 = vpop.f32.mrf.mxu0
    %1818 = vdwg.mxu0
    %v1819 = vld [vmem:[%s3] sm:$0x3]
    %v1820 = vsub.f32 1.0, %v1819
    %v1821 = vmul.f32 %v1820, -1e+09
    %v1826 = vunpack.c.l.b16 %v1681
    %v1827 = vunpack.c.l.b16 %v1682
    %v1828 = vunpack.c.l.b16 %v1683
    %v1829 = vunpack.c.l.b16 %v1684
    %v1830 = vpack.c.b16 %v1827, %v1826
    %v1831 = vpack.c.b16 %v1829, %v1828
    %1834 = vmatprep.subr.bf16.mxu0 0
    %1835 = vmatpush1.bf16.msra.mxu0 0
    %1836 = vmatprep.subr.bf16.mxu0 0
    %1837 = vmatpush1.bf16.msra.mxu0 0
    %1838 = vmatprep.subr.bf16.mxu0 0
    %1839 = vmatpush1.bf16.msra.mxu0 0
    %1840 = vmatprep.subr.bf16.mxu0 0
    %1841 = vmatpush1.bf16.msra.mxu0 0
    %1842 = vmatprep.subr.bf16.mxu0 0
    %1843 = vmatpush1.bf16.msra.mxu0 0
    %1844 = vmatprep.subr.bf16.mxu0 0
    %1845 = vmatpush1.bf16.msra.mxu0 0
    %1846 = vmatprep.subr.bf16.mxu0 0
    %1847 = vmatpush1.bf16.msra.mxu0 %v1831
    %1848 = vmatprep.subr.bf16.mxu0 0
    %1849 = vmatpush1.bf16.msra.mxu0 %v1830
    %1850 = vmatprep.subr.bf16.mxu0 0
    %1851 = vmatpush2.bf16.msra.mxu0 0
    %1852 = vmatprep.subr.bf16.mxu0 0
    %1853 = vmatpush2.bf16.msra.mxu0 0
    %1854 = vmatprep.subr.bf16.mxu0 0
    %1855 = vmatpush2.bf16.msra.mxu0 0
    %1856 = vmatprep.subr.bf16.mxu0 0
    %1857 = vmatpush2.bf16.msra.mxu0 0
    %1858 = vmatprep.subr.bf16.mxu0 0
    %1859 = vmatpush2.bf16.msra.mxu0 0
    %1860 = vmatprep.subr.bf16.mxu0 0
    %1861 = vmatpush2.bf16.msra.mxu0 0
    %1862 = vmatprep.subr.bf16.mxu0 0
    %1863 = vmatpush2.bf16.msra.mxu0 0
    %1864 = vmatprep.subr.bf16.mxu0 0
    %1865 = vmatpush2.bf16.msra.mxu0 0
    %1866 = vmatprep.mubr.bf16.mxu0 0
    %1867 = vmatmul.mubr.bf16.gmra.mxu0 %v281
    %v1868 = vpop.f32.mrf.mxu0
    %v1869 = vadd.f32 0.0, %v1868
    %v1870 = vpop.f32.mrf.mxu0
    %v1871 = vpop.f32.mrf.mxu0
    %v1872 = vpop.f32.mrf.mxu0
    %1873 = vdwg.mxu0
    %v1874 = vadd.f32 %v1814, %v1869
    %v1875 = vmax.f32 %v1874, 0.0
    %v1876 = vpack.c.bf16 %v1875, %v1875
    %v1881 = vunpack.c.l.b16 %v1673
    %v1882 = vunpack.c.l.b16 %v1674
    %v1883 = vunpack.c.l.b16 %v1675
    %v1884 = vunpack.c.l.b16 %v1676
    %v1885 = vpack.c.b16 %v1882, %v1881
    %v1886 = vpack.c.b16 %v1884, %v1883
    %v1890 = vsel %vm198, %v1876, 0
    %1892 = vmatprep.subr.bf16.mxu0 0
    %1893 = vmatpush1.bf16.msra.mxu0 0
    %1894 = vmatprep.subr.bf16.mxu0 0
    %1895 = vmatpush1.bf16.msra.mxu0 0
    %1896 = vmatprep.subr.bf16.mxu0 0
    %1897 = vmatpush1.bf16.msra.mxu0 0
    %1898 = vmatprep.subr.bf16.mxu0 0
    %1899 = vmatpush1.bf16.msra.mxu0 0
    %1900 = vmatprep.subr.bf16.mxu0 0
    %1901 = vmatpush1.bf16.msra.mxu0 0
    %1902 = vmatprep.subr.bf16.mxu0 0
    %1903 = vmatpush1.bf16.msra.mxu0 0
    %1904 = vmatprep.subr.bf16.mxu0 0
    %1905 = vmatpush1.bf16.msra.mxu0 %v1886
    %1906 = vmatprep.subr.bf16.mxu0 0
    %1907 = vmatpush1.bf16.msra.mxu0 %v1885
    %1908 = vmatprep.subr.bf16.mxu0 0
    %1909 = vmatpush2.bf16.msra.mxu0 0
    %1910 = vmatprep.subr.bf16.mxu0 0
    %1911 = vmatpush2.bf16.msra.mxu0 0
    %1912 = vmatprep.subr.bf16.mxu0 0
    %1913 = vmatpush2.bf16.msra.mxu0 0
    %1914 = vmatprep.subr.bf16.mxu0 0
    %1915 = vmatpush2.bf16.msra.mxu0 0
    %1916 = vmatprep.subr.bf16.mxu0 0
    %1917 = vmatpush2.bf16.msra.mxu0 0
    %1918 = vmatprep.subr.bf16.mxu0 0
    %1919 = vmatpush2.bf16.msra.mxu0 0
    %1920 = vmatprep.subr.bf16.mxu0 0
    %1921 = vmatpush2.bf16.msra.mxu0 0
    %1922 = vmatprep.subr.bf16.mxu0 0
    %1923 = vmatpush2.bf16.msra.mxu0 0
    %1924 = vmatprep.mubr.bf16.mxu0 0
    %1925 = vmatmul.mubr.bf16.gmra.mxu0 %v1890
    %v1926 = vpop.f32.mrf.mxu0
    %v1927 = vadd.f32 0.0, %v1926
    %v1928 = vpop.f32.mrf.mxu0
    %v1929 = vpop.f32.mrf.mxu0
    %v1930 = vpop.f32.mrf.mxu0
    %1931 = vdwg.mxu0
    %v1934 = vunpack.c.l.s4 1966171168
    %v1935 = vunpack.c.0.s8 %v1934
    %v1936 = vlaneseq
    %v1937 = vshrl.u32 %v1936, 7
    %v1938 = vsub.s32 %v1935, %v1937
    %v1939 = vrot.slane %v1927, %v1938
    %v1940 = vcombine.high %v1939, %v1939
    %v1942 = vunpack.c.l.s4 1966171168
    %v1943 = vunpack.c.0.s8 %v1942
    %v1944 = vlaneseq
    %v1945 = vshrl.u32 %v1944, 7
    %v1946 = vsub.s32 %v1943, %v1945
    %v1947 = vrot.slane %v1939, %v1946
    %v1949 = vunpack.c.l.s4 1966171168
    %v1950 = vunpack.c.0.s8 %v1949
    %v1951 = vlaneseq
    %v1952 = vshrl.u32 %v1951, 7
    %v1953 = vsub.s32 %v1950, %v1952
    %v1954 = vrot.slane %v1940, %v1953
    %v1955 = vlaneseq
    %v1956 = vshrl.u32 %v1955, 7
    %v1957 = vsub.s32 0, %v1956
    %v1958 = vrot.slane %v1947, %v1957
    %v1959 = vlaneseq
    %v1960 = vshrl.u32 %v1959, 7
    %v1961 = vsub.s32 0, %v1960
    %v1962 = vrot.slane %v1954, %v1961
    %v1965 = vadd.f32 %v1737, %v1958
    %v1966 = vadd.f32 %v1740, %v1962
    %v1967 = vtanh.pop %v1965
    %v1968 = vtanh.pop %v1966
    %v1970 = vlaneseq
    %v1971 = vshrl.u32 %v1970, 7
    %v1972 = vsub.s32 0, %v1971
    %v1973 = vrot.slane %v1685, %v1972
    %v1975 = vmul.f32 %v1967, %v1973
    %v1976 = vmul.f32 %v1968, %v1973
    %v1977 = vsel %vm168, %v1975, 0.0
    %1978 = vadd.xlane.f32.xlu0 %v1977
    %v1979 = vpop.xlane.xlu0 %1978
    %v1980 = vsel %vm168, %v1976, 0.0
    %1981 = vadd.xlane.f32.xlu0 %v1980
    %v1982 = vpop.xlane.xlu0 %1981
    %v1984 = vlaneseq
    %v1985 = vshrl.u32 %v1984, 7
    %v1986 = vsub.s32 0, %v1985
    %v1987 = vrot.slane %v1821, %v1986
    %1989 = vbcast.lane.b32.xlu0 %v1987, 256
    %v1990 = vpop.permute.xlu0 %1989
    %v1991 = vlaneseq
    %v1992 = vshrl.u32 %v1991, 7
    %v1993 = vsub.s32 1, %v1992
    %v1994 = vrot.slane %v1821, %v1993
    %1996 = vbcast.lane.b32.xlu0 %v1994, 256
    %v1997 = vpop.permute.xlu0 %1996
    %v2000 = vadd.f32 %v1979, %v1990
    %v2001 = vadd.f32 %v1982, %v1997
    %2004 = vset.pattern.permute.xlu0 0
    %2005 = vperm.xlu0 %2004, %v2000
    %v2006 = vpop.permute.xlu0 %2005
    %2007 = vset.pattern.permute.xlu0 0
    %2008 = vperm.xlu0 %2007, %v2001
    %v2009 = vpop.permute.xlu0 %2008
    %v2010 = vlaneseq
    %v2011 = vand.u32 %v2010, 127
    %v2012 = vlaneseq
    %v2013 = vshrl.u32 %v2012, 7
    %v2014 = vsub.s32 %v2011, %v2013
    %v2015 = vrot.slane %v2006, %v2014
    %v2016 = vlaneseq
    %v2017 = vshrl.u32 %v2016, 7
    %v2018 = vsub.s32 %v2011, %v2017
    %v2019 = vrot.slane %v2009, %v2018
    %v2020 = vsel %vm277, %v2019, %v2015
    %vm2022 = vcmask 58368
    %v2023 = vsel %vm2022, %v2020, -inf
    %2024 = vmax.xlane.f32.xlu0 %v2023
    %v2025 = vpop.xlane.xlu0 %2024
    %v2027 = vlaneseq
    %v2028 = vshrl.u32 %v2027, 7
    %v2029 = vsub.s32 0, %v2028
    %v2030 = vrot.slane %v2025, %v2029
    %v2031 = vlaneseq
    %v2032 = vshrl.u32 %v2031, 7
    %v2033 = vsub.s32 1, %v2032
    %v2034 = vrot.slane %v2025, %v2033
    %v2037 = vsub.f32 %v2000, %v2030
    %v2038 = vsub.f32 %v2001, %v2034
    %v2039 = vmul.f32 %v2037, 1.442695
    %v2040 = vpow.pop %v2039
    %v2041 = vmul.f32 %v2038, 1.442695
    %v2042 = vpow.pop %v2041
    %2045 = vset.pattern.permute.xlu0 0
    %2046 = vperm.xlu0 %2045, %v2040
    %v2047 = vpop.permute.xlu0 %2046
    %2048 = vset.pattern.permute.xlu0 0
    %2049 = vperm.xlu0 %2048, %v2042
    %v2050 = vpop.permute.xlu0 %2049
    %v2051 = vlaneseq
    %v2052 = vshrl.u32 %v2051, 7
    %v2053 = vsub.s32 %v2011, %v2052
    %v2054 = vrot.slane %v2047, %v2053
    %v2055 = vlaneseq
    %v2056 = vshrl.u32 %v2055, 7
    %v2057 = vsub.s32 %v2011, %v2056
    %v2058 = vrot.slane %v2050, %v2057
    %v2059 = vsel %vm277, %v2058, %v2054
    %v2061 = vsel %vm2022, %v2059, 0.0
    %2062 = vadd.xlane.f32.xlu0 %v2061
    %v2063 = vpop.xlane.xlu0 %2062
    %v2064 = vrcp.pop %v2063
    %v2066 = vlaneseq
    %v2067 = vshrl.u32 %v2066, 7
    %v2068 = vsub.s32 0, %v2067
    %v2069 = vrot.slane %v2064, %v2068
    %v2070 = vlaneseq
    %v2071 = vshrl.u32 %v2070, 7
    %v2072 = vsub.s32 1, %v2071
    %v2073 = vrot.slane %v2064, %v2072
    %v2076 = vmul.f32 %v2040, %v2069
    %v2077 = vmul.f32 %v2042, %v2073
    %2079 = vset.pattern.permute.xlu0 0
    %2080 = vperm.xlu0 %2079, %v2076
    %v2081 = vpop.permute.xlu0 %2080
    %2084 = vset.pattern.permute.xlu0 0
    %2085 = vperm.xlu0 %2084, %v2077
    %v2086 = vpop.permute.xlu0 %2085
    %v2088 = vmul.f32 %v2081, %v1623
    %v2089 = vmul.f32 %v2086, %v1624
    %v2090 = vsel %vm198, %v2088, 0.0
    %v2091 = vrot.slane %v2090, 4
    %v2092 = vadd.f32 %v2090, %v2091
    %v2093 = vrot.slane %v2092, 2
    %v2094 = vadd.f32 %v2092, %v2093
    %v2095 = vrot.slane %v2094, 1
    %v2096 = vadd.f32 %v2094, %v2095
    %v2097 = vsel %vm198, %v2089, 0.0
    %v2098 = vrot.slane %v2097, 4
    %v2099 = vadd.f32 %v2097, %v2098
    %v2100 = vrot.slane %v2099, 2
    %v2101 = vadd.f32 %v2099, %v2100
    %v2102 = vrot.slane %v2101, 1
    %v2103 = vadd.f32 %v2101, %v2102
    %v2104 = vpack.c.bf16 %v2096, %v2096
    %v2105 = vpack.c.bf16 %v2103, %v2103
    %v2108 = vunpack.c.l.b16 %v2104
    %v2109 = vunpack.c.l.b16 %v2105
    %v2110 = vsel %vm277, %v2109, %v2108
    %v2111 = vpack.c.b16 %v2110, %v2110
    %v2113 = vsel %vm198, %v2111, 0
    %2115 = vmatprep.subr.bf16.mxu0 0
    %2116 = vmatpush1.bf16.msra.mxu0 0
    %2117 = vmatprep.subr.bf16.mxu0 0
    %2118 = vmatpush1.bf16.msra.mxu0 0
    %2119 = vmatprep.subr.bf16.mxu0 0
    %2120 = vmatpush1.bf16.msra.mxu0 0
    %2121 = vmatprep.subr.bf16.mxu0 0
    %2122 = vmatpush1.bf16.msra.mxu0 0
    %2123 = vmatprep.subr.bf16.mxu0 0
    %2124 = vmatpush1.bf16.msra.mxu0 0
    %2125 = vmatprep.subr.bf16.mxu0 0
    %2126 = vmatpush1.bf16.msra.mxu0 0
    %2127 = vmatprep.subr.bf16.mxu0 0
    %2128 = vmatpush1.bf16.msra.mxu0 %v1831
    %2129 = vmatprep.subr.bf16.mxu0 0
    %2130 = vmatpush1.bf16.msra.mxu0 %v1830
    %2131 = vmatprep.subr.bf16.mxu0 0
    %2132 = vmatpush2.bf16.msra.mxu0 0
    %2133 = vmatprep.subr.bf16.mxu0 0
    %2134 = vmatpush2.bf16.msra.mxu0 0
    %2135 = vmatprep.subr.bf16.mxu0 0
    %2136 = vmatpush2.bf16.msra.mxu0 0
    %2137 = vmatprep.subr.bf16.mxu0 0
    %2138 = vmatpush2.bf16.msra.mxu0 0
    %2139 = vmatprep.subr.bf16.mxu0 0
    %2140 = vmatpush2.bf16.msra.mxu0 0
    %2141 = vmatprep.subr.bf16.mxu0 0
    %2142 = vmatpush2.bf16.msra.mxu0 0
    %2143 = vmatprep.subr.bf16.mxu0 0
    %2144 = vmatpush2.bf16.msra.mxu0 0
    %2145 = vmatprep.subr.bf16.mxu0 0
    %2146 = vmatpush2.bf16.msra.mxu0 0
    %2147 = vmatprep.mubr.bf16.mxu0 0
    %2148 = vmatmul.mubr.bf16.gmra.mxu0 %v2113
    %v2149 = vpop.f32.mrf.mxu0
    %v2150 = vadd.f32 0.0, %v2149
    %v2151 = vpop.f32.mrf.mxu0
    %v2152 = vpop.f32.mrf.mxu0
    %v2153 = vpop.f32.mrf.mxu0
    %2154 = vdwg.mxu0
    %2156 = vrot.lane.b32.xlu0 %v2150, 32
    %v2157 = vpop.permute.xlu0 %2156
    %v2159 = vadd.f32 %v1814, %v2157
    %v2160 = vmax.f32 %v2159, 0.0
    %v2161 = vpack.c.bf16 %v2160, %v2160
    %2163 = vrot.lane.b32.xlu0 %v2161, 96
    %v2164 = vpop.permute.xlu0 %2163
    %v2166 = vsel %vm198, %v2164, 0
    %2168 = vmatprep.subr.bf16.mxu0 0
    %2169 = vmatpush1.bf16.msra.mxu0 0
    %2170 = vmatprep.subr.bf16.mxu0 0
    %2171 = vmatpush1.bf16.msra.mxu0 0
    %2172 = vmatprep.subr.bf16.mxu0 0
    %2173 = vmatpush1.bf16.msra.mxu0 0
    %2174 = vmatprep.subr.bf16.mxu0 0
    %2175 = vmatpush1.bf16.msra.mxu0 0
    %2176 = vmatprep.subr.bf16.mxu0 0
    %2177 = vmatpush1.bf16.msra.mxu0 0
    %2178 = vmatprep.subr.bf16.mxu0 0
    %2179 = vmatpush1.bf16.msra.mxu0 0
    %2180 = vmatprep.subr.bf16.mxu0 0
    %2181 = vmatpush1.bf16.msra.mxu0 %v1886
    %2182 = vmatprep.subr.bf16.mxu0 0
    %2183 = vmatpush1.bf16.msra.mxu0 %v1885
    %2184 = vmatprep.subr.bf16.mxu0 0
    %2185 = vmatpush2.bf16.msra.mxu0 0
    %2186 = vmatprep.subr.bf16.mxu0 0
    %2187 = vmatpush2.bf16.msra.mxu0 0
    %2188 = vmatprep.subr.bf16.mxu0 0
    %2189 = vmatpush2.bf16.msra.mxu0 0
    %2190 = vmatprep.subr.bf16.mxu0 0
    %2191 = vmatpush2.bf16.msra.mxu0 0
    %2192 = vmatprep.subr.bf16.mxu0 0
    %2193 = vmatpush2.bf16.msra.mxu0 0
    %2194 = vmatprep.subr.bf16.mxu0 0
    %2195 = vmatpush2.bf16.msra.mxu0 0
    %2196 = vmatprep.subr.bf16.mxu0 0
    %2197 = vmatpush2.bf16.msra.mxu0 0
    %2198 = vmatprep.subr.bf16.mxu0 0
    %2199 = vmatpush2.bf16.msra.mxu0 0
    %2200 = vmatprep.mubr.bf16.mxu0 0
    %2201 = vmatmul.mubr.bf16.gmra.mxu0 %v2166
    %v2202 = vpop.f32.mrf.mxu0
    %v2203 = vadd.f32 0.0, %v2202
    %v2204 = vpop.f32.mrf.mxu0
    %v2205 = vpop.f32.mrf.mxu0
    %v2206 = vpop.f32.mrf.mxu0
    %2207 = vdwg.mxu0
    %v2210 = vunpack.c.l.s4 1966171168
    %v2211 = vunpack.c.0.s8 %v2210
    %v2212 = vlaneseq
    %v2213 = vshrl.u32 %v2212, 7
    %v2214 = vsub.s32 %v2211, %v2213
    %v2215 = vrot.slane %v2203, %v2214
    %v2216 = vcombine.high %v2215, %v2215
    %v2218 = vunpack.c.l.s4 1966171168
    %v2219 = vunpack.c.0.s8 %v2218
    %v2220 = vlaneseq
    %v2221 = vshrl.u32 %v2220, 7
    %v2222 = vsub.s32 %v2219, %v2221
    %v2223 = vrot.slane %v2215, %v2222
    %v2225 = vunpack.c.l.s4 1966171168
    %v2226 = vunpack.c.0.s8 %v2225
    %v2227 = vlaneseq
    %v2228 = vshrl.u32 %v2227, 7
    %v2229 = vsub.s32 %v2226, %v2228
    %v2230 = vrot.slane %v2216, %v2229
    %v2231 = vlaneseq
    %v2232 = vshrl.u32 %v2231, 7
    %v2233 = vsub.s32 0, %v2232
    %v2234 = vrot.slane %v2223, %v2233
    %v2235 = vlaneseq
    %v2236 = vshrl.u32 %v2235, 7
    %v2237 = vsub.s32 0, %v2236
    %v2238 = vrot.slane %v2230, %v2237
    %v2241 = vadd.f32 %v1737, %v2234
    %v2242 = vadd.f32 %v1740, %v2238
    %v2243 = vtanh.pop %v2241
    %v2244 = vtanh.pop %v2242
    %v2245 = vmul.f32 %v2243, %v1973
    %v2246 = vmul.f32 %v2244, %v1973
    %v2247 = vsel %vm168, %v2245, 0.0
    %2248 = vadd.xlane.f32.xlu0 %v2247
    %v2249 = vpop.xlane.xlu0 %2248
    %v2250 = vsel %vm168, %v2246, 0.0
    %2251 = vadd.xlane.f32.xlu0 %v2250
    %v2252 = vpop.xlane.xlu0 %2251
    %v2253 = vadd.f32 %v2249, %v1990
    %v2254 = vadd.f32 %v2252, %v1997
    %2257 = vset.pattern.permute.xlu0 0
    %2258 = vperm.xlu0 %2257, %v2253
    %v2259 = vpop.permute.xlu0 %2258
    %2260 = vset.pattern.permute.xlu0 0
    %2261 = vperm.xlu0 %2260, %v2254
    %v2262 = vpop.permute.xlu0 %2261
    %v2263 = vlaneseq
    %v2264 = vshrl.u32 %v2263, 7
    %v2265 = vsub.s32 %v2011, %v2264
    %v2266 = vrot.slane %v2259, %v2265
    %v2267 = vlaneseq
    %v2268 = vshrl.u32 %v2267, 7
    %v2269 = vsub.s32 %v2011, %v2268
    %v2270 = vrot.slane %v2262, %v2269
    %v2271 = vsel %vm277, %v2270, %v2266
    %v2273 = vsel %vm2022, %v2271, -inf
    %2274 = vmax.xlane.f32.xlu0 %v2273
    %v2275 = vpop.xlane.xlu0 %2274
    %v2277 = vlaneseq
    %v2278 = vshrl.u32 %v2277, 7
    %v2279 = vsub.s32 0, %v2278
    %v2280 = vrot.slane %v2275, %v2279
    %v2281 = vlaneseq
    %v2282 = vshrl.u32 %v2281, 7
    %v2283 = vsub.s32 1, %v2282
    %v2284 = vrot.slane %v2275, %v2283
    %v2287 = vsub.f32 %v2253, %v2280
    %v2288 = vsub.f32 %v2254, %v2284
    %v2289 = vmul.f32 %v2287, 1.442695
    %v2290 = vpow.pop %v2289
    %v2291 = vmul.f32 %v2288, 1.442695
    %v2292 = vpow.pop %v2291
    %2295 = vset.pattern.permute.xlu0 0
    %2296 = vperm.xlu0 %2295, %v2290
    %v2297 = vpop.permute.xlu0 %2296
    %2298 = vset.pattern.permute.xlu0 0
    %2299 = vperm.xlu0 %2298, %v2292
    %v2300 = vpop.permute.xlu0 %2299
    %v2301 = vlaneseq
    %v2302 = vshrl.u32 %v2301, 7
    %v2303 = vsub.s32 %v2011, %v2302
    %v2304 = vrot.slane %v2297, %v2303
    %v2305 = vlaneseq
    %v2306 = vshrl.u32 %v2305, 7
    %v2307 = vsub.s32 %v2011, %v2306
    %v2308 = vrot.slane %v2300, %v2307
    %v2309 = vsel %vm277, %v2308, %v2304
    %v2311 = vsel %vm2022, %v2309, 0.0
    %2312 = vadd.xlane.f32.xlu0 %v2311
    %v2313 = vpop.xlane.xlu0 %2312
    %v2314 = vrcp.pop %v2313
    %v2316 = vlaneseq
    %v2317 = vshrl.u32 %v2316, 7
    %v2318 = vsub.s32 0, %v2317
    %v2319 = vrot.slane %v2314, %v2318
    %v2320 = vlaneseq
    %v2321 = vshrl.u32 %v2320, 7
    %v2322 = vsub.s32 1, %v2321
    %v2323 = vrot.slane %v2314, %v2322
    %v2326 = vmul.f32 %v2290, %v2319
    %v2327 = vmul.f32 %v2292, %v2323
    %2329 = vset.pattern.permute.xlu0 0
    %2330 = vperm.xlu0 %2329, %v2326
    %v2331 = vpop.permute.xlu0 %2330
    %2334 = vset.pattern.permute.xlu0 0
    %2335 = vperm.xlu0 %2334, %v2327
    %v2336 = vpop.permute.xlu0 %2335
    %v2338 = vmul.f32 %v2331, %v1623
    %v2339 = vmul.f32 %v2336, %v1624
    %v2340 = vsel %vm198, %v2338, 0.0
    %v2341 = vrot.slane %v2340, 4
    %v2342 = vadd.f32 %v2340, %v2341
    %v2343 = vrot.slane %v2342, 2
    %v2344 = vadd.f32 %v2342, %v2343
    %v2345 = vrot.slane %v2344, 1
    %v2346 = vadd.f32 %v2344, %v2345
    %v2347 = vsel %vm198, %v2339, 0.0
    %v2348 = vrot.slane %v2347, 4
    %v2349 = vadd.f32 %v2347, %v2348
    %v2350 = vrot.slane %v2349, 2
    %v2351 = vadd.f32 %v2349, %v2350
    %v2352 = vrot.slane %v2351, 1
    %v2353 = vadd.f32 %v2351, %v2352
    %v2354 = vpack.c.bf16 %v2346, %v2346
    %v2355 = vpack.c.bf16 %v2353, %v2353
    %v2358 = vunpack.c.l.b16 %v2354
    %v2359 = vunpack.c.l.b16 %v2355
    %v2360 = vsel %vm277, %v2359, %v2358
    %v2361 = vpack.c.b16 %v2360, %v2360
    %v2363 = vsel %vm198, %v2361, 0
    %2365 = vmatprep.subr.bf16.mxu0 0
    %2366 = vmatpush1.bf16.msra.mxu0 0
    %2367 = vmatprep.subr.bf16.mxu0 0
    %2368 = vmatpush1.bf16.msra.mxu0 0
    %2369 = vmatprep.subr.bf16.mxu0 0
    %2370 = vmatpush1.bf16.msra.mxu0 0
    %2371 = vmatprep.subr.bf16.mxu0 0
    %2372 = vmatpush1.bf16.msra.mxu0 0
    %2373 = vmatprep.subr.bf16.mxu0 0
    %2374 = vmatpush1.bf16.msra.mxu0 0
    %2375 = vmatprep.subr.bf16.mxu0 0
    %2376 = vmatpush1.bf16.msra.mxu0 0
    %2377 = vmatprep.subr.bf16.mxu0 0
    %2378 = vmatpush1.bf16.msra.mxu0 %v1831
    %2379 = vmatprep.subr.bf16.mxu0 0
    %2380 = vmatpush1.bf16.msra.mxu0 %v1830
    %2381 = vmatprep.subr.bf16.mxu0 0
    %2382 = vmatpush2.bf16.msra.mxu0 0
    %2383 = vmatprep.subr.bf16.mxu0 0
    %2384 = vmatpush2.bf16.msra.mxu0 0
    %2385 = vmatprep.subr.bf16.mxu0 0
    %2386 = vmatpush2.bf16.msra.mxu0 0
    %2387 = vmatprep.subr.bf16.mxu0 0
    %2388 = vmatpush2.bf16.msra.mxu0 0
    %2389 = vmatprep.subr.bf16.mxu0 0
    %2390 = vmatpush2.bf16.msra.mxu0 0
    %2391 = vmatprep.subr.bf16.mxu0 0
    %2392 = vmatpush2.bf16.msra.mxu0 0
    %2393 = vmatprep.subr.bf16.mxu0 0
    %2394 = vmatpush2.bf16.msra.mxu0 0
    %2395 = vmatprep.subr.bf16.mxu0 0
    %2396 = vmatpush2.bf16.msra.mxu0 0
    %2397 = vmatprep.mubr.bf16.mxu0 0
    %2398 = vmatmul.mubr.bf16.gmra.mxu0 %v2363
    %v2399 = vpop.f32.mrf.mxu0
    %v2400 = vadd.f32 0.0, %v2399
    %v2401 = vpop.f32.mrf.mxu0
    %v2402 = vpop.f32.mrf.mxu0
    %v2403 = vpop.f32.mrf.mxu0
    %2404 = vdwg.mxu0
    %2406 = vrot.lane.b32.xlu0 %v2400, 64
    %v2407 = vpop.permute.xlu0 %2406
    %v2409 = vadd.f32 %v1814, %v2407
    %v2410 = vmax.f32 %v2409, 0.0
    %v2411 = vpack.c.bf16 %v2410, %v2410
    %2413 = vrot.lane.b32.xlu0 %v2411, 64
    %v2414 = vpop.permute.xlu0 %2413
    %v2416 = vsel %vm198, %v2414, 0
    %2418 = vmatprep.subr.bf16.mxu0 0
    %2419 = vmatpush1.bf16.msra.mxu0 0
    %2420 = vmatprep.subr.bf16.mxu0 0
    %2421 = vmatpush1.bf16.msra.mxu0 0
    %2422 = vmatprep.subr.bf16.mxu0 0
    %2423 = vmatpush1.bf16.msra.mxu0 0
    %2424 = vmatprep.subr.bf16.mxu0 0
    %2425 = vmatpush1.bf16.msra.mxu0 0
    %2426 = vmatprep.subr.bf16.mxu0 0
    %2427 = vmatpush1.bf16.msra.mxu0 0
    %2428 = vmatprep.subr.bf16.mxu0 0
    %2429 = vmatpush1.bf16.msra.mxu0 0
    %2430 = vmatprep.subr.bf16.mxu0 0
    %2431 = vmatpush1.bf16.msra.mxu0 %v1886
    %2432 = vmatprep.subr.bf16.mxu0 0
    %2433 = vmatpush1.bf16.msra.mxu0 %v1885
    %2434 = vmatprep.subr.bf16.mxu0 0
    %2435 = vmatpush2.bf16.msra.mxu0 0
    %2436 = vmatprep.subr.bf16.mxu0 0
    %2437 = vmatpush2.bf16.msra.mxu0 0
    %2438 = vmatprep.subr.bf16.mxu0 0
    %2439 = vmatpush2.bf16.msra.mxu0 0
    %2440 = vmatprep.subr.bf16.mxu0 0
    %2441 = vmatpush2.bf16.msra.mxu0 0
    %2442 = vmatprep.subr.bf16.mxu0 0
    %2443 = vmatpush2.bf16.msra.mxu0 0
    %2444 = vmatprep.subr.bf16.mxu0 0
    %2445 = vmatpush2.bf16.msra.mxu0 0
    %2446 = vmatprep.subr.bf16.mxu0 0
    %2447 = vmatpush2.bf16.msra.mxu0 0
    %2448 = vmatprep.subr.bf16.mxu0 0
    %2449 = vmatpush2.bf16.msra.mxu0 0
    %2450 = vmatprep.mubr.bf16.mxu0 0
    %2451 = vmatmul.mubr.bf16.gmra.mxu0 %v2416
    %v2452 = vpop.f32.mrf.mxu0
    %v2453 = vadd.f32 0.0, %v2452
    %v2454 = vpop.f32.mrf.mxu0
    %v2455 = vpop.f32.mrf.mxu0
    %v2456 = vpop.f32.mrf.mxu0
    %2457 = vdwg.mxu0
    %v2460 = vunpack.c.l.s4 1966171168
    %v2461 = vunpack.c.0.s8 %v2460
    %v2462 = vlaneseq
    %v2463 = vshrl.u32 %v2462, 7
    %v2464 = vsub.s32 %v2461, %v2463
    %v2465 = vrot.slane %v2453, %v2464
    %v2466 = vcombine.high %v2465, %v2465
    %v2468 = vunpack.c.l.s4 1966171168
    %v2469 = vunpack.c.0.s8 %v2468
    %v2470 = vlaneseq
    %v2471 = vshrl.u32 %v2470, 7
    %v2472 = vsub.s32 %v2469, %v2471
    %v2473 = vrot.slane %v2465, %v2472
    %v2475 = vunpack.c.l.s4 1966171168
    %v2476 = vunpack.c.0.s8 %v2475
    %v2477 = vlaneseq
    %v2478 = vshrl.u32 %v2477, 7
    %v2479 = vsub.s32 %v2476, %v2478
    %v2480 = vrot.slane %v2466, %v2479
    %v2481 = vlaneseq
    %v2482 = vshrl.u32 %v2481, 7
    %v2483 = vsub.s32 0, %v2482
    %v2484 = vrot.slane %v2473, %v2483
    %v2485 = vlaneseq
    %v2486 = vshrl.u32 %v2485, 7
    %v2487 = vsub.s32 0, %v2486
    %v2488 = vrot.slane %v2480, %v2487
    %v2491 = vadd.f32 %v1737, %v2484
    %v2492 = vadd.f32 %v1740, %v2488
    %v2493 = vtanh.pop %v2491
    %v2494 = vtanh.pop %v2492
    %v2495 = vmul.f32 %v2493, %v1973
    %v2496 = vmul.f32 %v2494, %v1973
    %v2497 = vsel %vm168, %v2495, 0.0
    %2498 = vadd.xlane.f32.xlu0 %v2497
    %v2499 = vpop.xlane.xlu0 %2498
    %v2500 = vsel %vm168, %v2496, 0.0
    %2501 = vadd.xlane.f32.xlu0 %v2500
    %v2502 = vpop.xlane.xlu0 %2501
    %v2503 = vadd.f32 %v2499, %v1990
    %v2504 = vadd.f32 %v2502, %v1997
    %2507 = vset.pattern.permute.xlu0 0
    %2508 = vperm.xlu0 %2507, %v2503
    %v2509 = vpop.permute.xlu0 %2508
    %2510 = vset.pattern.permute.xlu0 0
    %2511 = vperm.xlu0 %2510, %v2504
    %v2512 = vpop.permute.xlu0 %2511
    %v2513 = vlaneseq
    %v2514 = vshrl.u32 %v2513, 7
    %v2515 = vsub.s32 %v2011, %v2514
    %v2516 = vrot.slane %v2509, %v2515
    %v2517 = vlaneseq
    %v2518 = vshrl.u32 %v2517, 7
    %v2519 = vsub.s32 %v2011, %v2518
    %v2520 = vrot.slane %v2512, %v2519
    %v2521 = vsel %vm277, %v2520, %v2516
    %v2523 = vsel %vm2022, %v2521, -inf
    %2524 = vmax.xlane.f32.xlu0 %v2523
    %v2525 = vpop.xlane.xlu0 %2524
    %v2527 = vlaneseq
    %v2528 = vshrl.u32 %v2527, 7
    %v2529 = vsub.s32 0, %v2528
    %v2530 = vrot.slane %v2525, %v2529
    %v2531 = vlaneseq
    %v2532 = vshrl.u32 %v2531, 7
    %v2533 = vsub.s32 1, %v2532
    %v2534 = vrot.slane %v2525, %v2533
    %v2537 = vsub.f32 %v2503, %v2530
    %v2538 = vsub.f32 %v2504, %v2534
    %v2539 = vmul.f32 %v2537, 1.442695
    %v2540 = vpow.pop %v2539
    %v2541 = vmul.f32 %v2538, 1.442695
    %v2542 = vpow.pop %v2541
    %2545 = vset.pattern.permute.xlu0 0
    %2546 = vperm.xlu0 %2545, %v2540
    %v2547 = vpop.permute.xlu0 %2546
    %2548 = vset.pattern.permute.xlu0 0
    %2549 = vperm.xlu0 %2548, %v2542
    %v2550 = vpop.permute.xlu0 %2549
    %v2551 = vlaneseq
    %v2552 = vshrl.u32 %v2551, 7
    %v2553 = vsub.s32 %v2011, %v2552
    %v2554 = vrot.slane %v2547, %v2553
    %v2555 = vlaneseq
    %v2556 = vshrl.u32 %v2555, 7
    %v2557 = vsub.s32 %v2011, %v2556
    %v2558 = vrot.slane %v2550, %v2557
    %v2559 = vsel %vm277, %v2558, %v2554
    %v2561 = vsel %vm2022, %v2559, 0.0
    %2562 = vadd.xlane.f32.xlu0 %v2561
    %v2563 = vpop.xlane.xlu0 %2562
    %v2564 = vrcp.pop %v2563
    %v2566 = vlaneseq
    %v2567 = vshrl.u32 %v2566, 7
    %v2568 = vsub.s32 0, %v2567
    %v2569 = vrot.slane %v2564, %v2568
    %v2570 = vlaneseq
    %v2571 = vshrl.u32 %v2570, 7
    %v2572 = vsub.s32 1, %v2571
    %v2573 = vrot.slane %v2564, %v2572
    %v2576 = vmul.f32 %v2540, %v2569
    %v2577 = vmul.f32 %v2542, %v2573
    %2579 = vset.pattern.permute.xlu0 0
    %2580 = vperm.xlu0 %2579, %v2576
    %v2581 = vpop.permute.xlu0 %2580
    %2584 = vset.pattern.permute.xlu0 0
    %2585 = vperm.xlu0 %2584, %v2577
    %v2586 = vpop.permute.xlu0 %2585
    %v2588 = vmul.f32 %v2581, %v1623
    %v2589 = vmul.f32 %v2586, %v1624
    %v2590 = vsel %vm198, %v2588, 0.0
    %v2591 = vrot.slane %v2590, 4
    %v2592 = vadd.f32 %v2590, %v2591
    %v2593 = vrot.slane %v2592, 2
    %v2594 = vadd.f32 %v2592, %v2593
    %v2595 = vrot.slane %v2594, 1
    %v2596 = vadd.f32 %v2594, %v2595
    %v2597 = vsel %vm198, %v2589, 0.0
    %v2598 = vrot.slane %v2597, 4
    %v2599 = vadd.f32 %v2597, %v2598
    %v2600 = vrot.slane %v2599, 2
    %v2601 = vadd.f32 %v2599, %v2600
    %v2602 = vrot.slane %v2601, 1
    %v2603 = vadd.f32 %v2601, %v2602
    %v2606 = vsel %vm277, %v2103, %v2096
    %v2610 = vsel %vm277, %v2353, %v2346
    %2611 = vrot.lane.b32.xlu0 %v2610, 32
    %v2612 = vpop.permute.xlu0 %2611
    %v2616 = vsel %vm277, %v2603, %v2596
    %2617 = vrot.lane.b32.xlu0 %v2616, 64
    %v2618 = vpop.permute.xlu0 %2617
    %v2620 = vsel %vm198, %v2606, %v2612
    %v2621 = vsel %vm1654, %v2620, %v2618
    %vm2622 = vcmask 779264
    %2623 = vst.msk [vmem:[%s15] sm:$0x3] %vm2622, %v2621
    %v2624 = vlaneseq
    %v2625 = vshrl.u32 %v2624, 7
    %v2626 = vsub.s32 %v2011, %v2625
    %v2627 = vrot.slane %v2081, %v2626
    %v2628 = vlaneseq
    %v2629 = vshrl.u32 %v2628, 7
    %v2630 = vsub.s32 %v2011, %v2629
    %v2631 = vrot.slane %v2086, %v2630
    %v2632 = vsel %vm277, %v2631, %v2627
    %v2634 = vadd.s32 %v2011, 4294967288
    %v2635 = vlaneseq
    %v2636 = vshrl.u32 %v2635, 7
    %v2637 = vsub.s32 %v2634, %v2636
    %v2638 = vrot.slane %v2331, %v2637
    %v2639 = vlaneseq
    %v2640 = vshrl.u32 %v2639, 7
    %v2641 = vsub.s32 %v2634, %v2640
    %v2642 = vrot.slane %v2336, %v2641
    %v2643 = vsel %vm277, %v2642, %v2638
    %v2645 = vadd.s32 %v2011, 4294967280
    %v2646 = vlaneseq
    %v2647 = vshrl.u32 %v2646, 7
    %v2648 = vsub.s32 %v2645, %v2647
    %v2649 = vrot.slane %v2581, %v2648
    %v2650 = vlaneseq
    %v2651 = vshrl.u32 %v2650, 7
    %v2652 = vsub.s32 %v2645, %v2651
    %v2653 = vrot.slane %v2586, %v2652
    %v2654 = vsel %vm277, %v2653, %v2649
    %vm2656 = vcmask 64512
    %v2657 = vsel %vm2656, %v2632, %v2643
    %v2658 = vsel %vm168, %v2657, %v2654
    %vm2659 = vcmask 189440
    %2660 = vst.msk [vmem:[%s16] sm:$0x3] %vm2659, %v2658
    // Predicated region
    $region78: #{_lambda_.1} parent=1 // pred_check
      _
    $region79: #{_lambda_.1} parent=1 // pred_check_branch
      %2662 = sbr.rel (0) target = $region81
    $region80: #{_lambda_.1} parent=1 // pred_region
      _
    $region81: #{_lambda_.1} parent=1 // pred_fallthru
      _
    // Predicated region
    $region82: #{_lambda_.1} parent=1 // pred_check
      _
    $region83: #{_lambda_.1} parent=1 // pred_check_branch
      %2664 = sbr.rel (0) target = $region85
    $region84: #{_lambda_.1} parent=1 // pred_region
      %s2666 = ssub.s32 32, 32
      %2667 = vsyncadd [#allocation4], %s2666
      %s2669 = sshll.u32 [#allocation13], 4
      %s2670 = int_to_ptr.vmem [resolvable:$true] %s2669
      %2672 = dma.vmem_to_hbm [thread:$0]  %s2670, 32, %s14, [#allocation4]
    $region85: #{_lambda_.1} parent=1 // pred_fallthru
      _
    // Predicated region
    $region86: #{_lambda_.1} parent=1 // pred_check
      _
    $region87: #{_lambda_.1} parent=1 // pred_check_branch
      %2674 = sbr.rel (0) target = $region89
    $region88: #{_lambda_.1} parent=1 // pred_region
      _
    $region89: #{_lambda_.1} parent=1 // pred_fallthru
      _
    // Predicated region
    $region90: #{_lambda_.1} parent=1 // pred_check
      _
    $region91: #{_lambda_.1} parent=1 // pred_check_branch
      %2676 = sbr.rel (0) target = $region93
    $region92: #{_lambda_.1} parent=1 // pred_region
      _
    $region93: #{_lambda_.1} parent=1 // pred_fallthru
      _
    // Predicated region
    $region94: #{_lambda_.1} parent=1 // pred_check
      _
    $region95: #{_lambda_.1} parent=1 // pred_check_branch
      %2678 = sbr.rel (0) target = $region97
    $region96: #{_lambda_.1} parent=1 // pred_region
      _
    $region97: #{_lambda_.1} parent=1 // pred_fallthru
      _
    // Predicated region
    $region98: #{_lambda_.1} parent=1 // pred_check
      _
    $region99: #{_lambda_.1} parent=1 // pred_check_branch
      %2680 = sbr.rel (0) target = $region101
    $region100: #{_lambda_.1} parent=1 // pred_region
      %2681 = dma.done [#allocation4], 32
    $region101: #{_lambda_.1} parent=1 // pred_fallthru
      _
    // Predicated region
    $region102: #{_lambda_.1} parent=1 // pred_check
      _
    $region103: #{_lambda_.1} parent=1 // pred_check_branch
      %2683 = sbr.rel (0) target = $region105
    $region104: #{_lambda_.1} parent=1 // pred_region
      _
    $region105: #{_lambda_.1} parent=1 // pred_fallthru
      _
    // Predicated region
    $region106: #{_lambda_.1} parent=1 // pred_check
      _
    $region107: #{_lambda_.1} parent=1 // pred_check_branch
      %2685 = sbr.rel (0) target = $region109
    $region108: #{_lambda_.1} parent=1 // pred_region
      _
    $region109: #{_lambda_.1} parent=1 // pred_fallthru
      _
    %2686 = vsyncpa [#allocation3], 1
    %2687 = vsyncpa [#allocation6], 1
    %2688 = vsyncpa [#allocation9], 1
    %2689 = vsyncpa [#allocation12], 1
    %2690 = vsyncpa [#allocation4], 1

</llo_original>
